<compile_context>
chip_gen: v6e
topology: v6e:2x2x1
jax: 0.10.0
libtpu: 0.0.40
codegen_flags: <defaults>
</compile_context>

<pallas_src>
import functools
import math

import numpy as np
import jax
import jax.numpy as jnp
from jax.experimental import pallas as pl
from jax.experimental.pallas import tpu as pltpu

LANE = 128
SUBLANE = 8


# --------------------------------------------------------------------------- #
# Host-side helpers (layout-only / constant parameter prep)
# --------------------------------------------------------------------------- #
def window_partition(x, ws):
    B, H, W, C = x.shape
    x = x.reshape(B, H // ws, ws, W // ws, ws, C)
    return x.transpose(0, 1, 3, 2, 4, 5).reshape(-1, ws, ws, C)


def window_reverse(windows, ws, H, W):
    B = windows.shape[0] // ((H // ws) * (W // ws))
    x = windows.reshape(B, H // ws, W // ws, ws, ws, -1)
    return x.transpose(0, 1, 3, 2, 4, 5).reshape(B, H, W, -1)


def _relative_position_index(ws):
    coords = np.stack(np.meshgrid(np.arange(ws), np.arange(ws), indexing="ij"))
    coords = coords.reshape(2, -1).astype(np.int32)                 # (2, N)
    rel = coords[:, :, None] - coords[:, None, :]                   # (2, N, N)
    rel = rel.transpose(1, 2, 0)                                    # (N, N, 2)
    rel[..., 0] += ws - 1
    rel[..., 1] += ws - 1
    rel[..., 0] *= 2 * ws - 1
    return rel.sum(-1).astype(np.int32)                             # (N, N)


def _attention_mask(H, W, ws, shift):
    img = np.zeros((1, H, W, 1), np.float32)
    cnt = 0
    for hs in (slice(0, -ws), slice(-ws, -shift), slice(-shift, None)):
        for wsl in (slice(0, -ws), slice(-ws, -shift), slice(-shift, None)):
            img[:, hs, wsl, :] = cnt
            cnt += 1
    mw = np.asarray(window_partition(img, ws)).reshape(-1, ws * ws)
    am = mw[:, None, :] - mw[:, :, None]                            # (nW, N, N)
    return jnp.asarray(np.where(am != 0, -100.0, 0.0).astype(np.float32))


def _largest_divisor(n, ok):
    for d in range(n, 0, -1):
        if n % d == 0 and ok(d):
            return d
    return 1


def _round_up(x, m):
    return (x + m - 1) // m * m


# --------------------------------------------------------------------------- #
# In-kernel math helpers (VPU / EUP / XLU only)
# --------------------------------------------------------------------------- #
def _recip(x):
    # EUP reciprocal seed + one Newton-Raphson step: keeps the divide off the
    # VALU while staying at ~f32 accuracy (err ~ seed_err**2).
    r = pl.reciprocal(x, approx=True)
    return r * (2.0 - x * r)


def _erf(x):
    # Abramowitz & Stegun 7.1.26 rational approximation, |err| < 1.5e-7.
    a1, a2, a3, a4, a5 = (0.254829592, -0.284496736, 1.421413741,
                          -1.453152027, 1.061405429)
    p = 0.3275911
    ax = jnp.abs(x)
    t = _recip(1.0 + p * ax)
    poly = ((((a5 * t + a4) * t + a3) * t + a2) * t + a1) * t
    y = 1.0 - poly * jnp.exp(-ax * ax)
    return jnp.where(x < 0, -y, y)


def _gelu_exact(x):
    return 0.5 * x * (1.0 + _erf(x * (1.0 / math.sqrt(2.0))))


def _layernorm_rows(x, gamma, beta, c_true, eps):
    # x: (M, Cp) f32 with zero-padded lanes beyond c_true; gamma/beta: (1, Cp)
    # zero-padded.  Statistics are taken over the true channel count only.
    cp = x.shape[-1]
    inv_c = 1.0 / c_true
    mean = jnp.sum(x, axis=-1, keepdims=True) * inv_c
    xc = x - mean
    if cp != c_true:
        lane = jax.lax.broadcasted_iota(jnp.int32, (1, cp), 1)
        xc = jnp.where(lane < c_true, xc, 0.0)     # keep pads out of the variance
    var = jnp.sum(xc * xc, axis=-1, keepdims=True) * inv_c
    return xc * jax.lax.rsqrt(var + eps) * gamma + beta


# --------------------------------------------------------------------------- #
# Kernel 1: norm1 + fused qkv + head-batched window attention + projection
# --------------------------------------------------------------------------- #
def _attn_kernel(x_ref, g1_ref, b1_ref, wqkv_ref, bqkv_ref, wp_ref, bp_ref,
                 bias_ref, *rest, num_heads, c_true, eps, ws, wpb, strip,
                 has_mask):
    if has_mask:
        mask_ref, o_ref = rest
    else:
        mask_ref = None
        (o_ref,) = rest

    cp = x_ref.shape[-1]
    n = ws * ws
    hd = c_true // num_heads
    m = wpb * n

    # ---- window partition (done in VMEM on (ws, Cp) = full-vreg tiles) ------
    if strip:
        xs = x_ref[0]                                        # (ws, wpb*ws, Cp)
        wins = [xs[:, w * ws:(w + 1) * ws, :].reshape(n, cp) for w in range(wpb)]
        x = (jnp.concatenate(wins, axis=0) if wpb > 1 else wins[0])
        x = x.astype(jnp.float32)                            # (m, Cp)
    else:
        x = x_ref[0].reshape(m, cp).astype(jnp.float32)      # pre-partitioned path

    # ---- LayerNorm (norm1), true-C statistics --------------------------------
    xn = _layernorm_rows(x, g1_ref[...], b1_ref[...], c_true, eps)

    # ---- ONE fused q/k/v projection (K = Cp dense, N = 3*Cp; scale folded) ---
    qkv = jnp.dot(xn, wqkv_ref[...],
                  preferred_element_type=jnp.float32) + bqkv_ref[...]

    # ---- head split: (m, 3Cp) -> (num_heads*wpb, N, hd), batch (head, window)
    def split_heads(base):
        blocks = []
        for h in range(num_heads):
            for w in range(wpb):
                blocks.append(qkv[w * n:(w + 1) * n,
                                  base + h * hd: base + (h + 1) * hd])
        return jnp.stack(blocks, axis=0)                     # (nH*wpb, n, hd)

    q = split_heads(0)
    k = split_heads(cp)
    v = split_heads(2 * cp)

    # ---- batched attention scores + one softmax pass --------------------------
    s = jnp.einsum("bnd,bmd->bnm", q, k, preferred_element_type=jnp.float32)
    s = s.reshape(num_heads, wpb, n, n)
    s = s + bias_ref[...][:, None, :, :]
    if has_mask:
        s = s + mask_ref[...][None, :, :, :].astype(jnp.float32)
    s = s - jnp.max(s, axis=-1, keepdims=True)
    p = jnp.exp(s)
    p = p * _recip(jnp.sum(p, axis=-1, keepdims=True))
    p = p.reshape(num_heads * wpb, n, n)

    o = jnp.einsum("bnm,bmd->bnd", p, v, preferred_element_type=jnp.float32)

    # ---- re-concatenate heads, ONE full-K output projection -------------------
    o_heads = []
    for h in range(num_heads):
        rows = [o[h * wpb + w] for w in range(wpb)]
        o_heads.append(jnp.concatenate(rows, axis=0) if wpb > 1 else rows[0])
    o_cat = jnp.concatenate(o_heads, axis=-1) if num_heads > 1 else o_heads[0]

    out = jnp.dot(o_cat, wp_ref[...],
                  preferred_element_type=jnp.float32) + bp_ref[...]   # (m, Cp)

    # ---- window reverse back into the spatial strip ---------------------------
    if strip:
        cols = [out[w * n:(w + 1) * n, :].reshape(ws, ws, cp) for w in range(wpb)]
        o_strip = jnp.concatenate(cols, axis=1) if wpb > 1 else cols[0]
        o_ref[0] = o_strip.astype(o_ref.dtype)
    else:
        o_ref[0] = out.reshape(wpb, n, cp).astype(o_ref.dtype)


# --------------------------------------------------------------------------- #
# Kernel 2: residual + norm2 + MLP (fc1 -> GELU -> fc2) + residual
# --------------------------------------------------------------------------- #
def _mlp_kernel(short_ref, xa_ref, g2_ref, b2_ref, w1_ref, bb1_ref,
                w2_ref, bb2_ref, o_ref, *, c_true, eps):
    x = short_ref[...].astype(jnp.float32) + xa_ref[...].astype(jnp.float32)
    xn = _layernorm_rows(x, g2_ref[...], b2_ref[...], c_true, eps)
    h = jnp.dot(xn, w1_ref[...], preferred_element_type=jnp.float32) + bb1_ref[...]
    h = _gelu_exact(h)
    y = jnp.dot(h, w2_ref[...], preferred_element_type=jnp.float32) + bb2_ref[...]
    o_ref[...] = (x + y).astype(o_ref.dtype)


# --------------------------------------------------------------------------- #
# Wrapper: full SwinTransformerBlock forward
# --------------------------------------------------------------------------- #
def swin_transformer_block(x_nchw, params, *, window_size, shift_size,
                           num_heads, eps=1e-5,
                           windows_per_block=None, token_tile=None):
    B, C, H, W = x_nchw.shape
    assert C % num_heads == 0
    f32 = jnp.float32

    # torch .view(B, H, W, C) on contiguous NCHW reinterprets memory (reshape).
    x = x_nchw.reshape(B, H, W, C)

    ws, ss = window_size, shift_size
    if min(H, W) <= ws:                      # module's constructor adjustment
        ss, ws = 0, min(H, W)
    assert H % ws == 0 and W % ws == 0
    N = ws * ws
    nWr, nWc = H // ws, W // ws
    nW = nWr * nWc
    T = B * H * W
    hd = C // num_heads
    scale = hd ** (-0.5)

    # ---- pad channel / hidden dims to full 128-lane tiles ---------------------
    Cp = _round_up(C, LANE)
    hidden = params["w1"].shape[1]
    Hp = _round_up(hidden, LANE)

    def padw(w, rows, cols):
        w = w.astype(f32)
        return jnp.pad(w, ((0, rows - w.shape[0]), (0, cols - w.shape[1])))

    wqkv = jnp.zeros((Cp, 3 * Cp), f32)
    wqkv = wqkv.at[:C, 0:C].set(params["wq"].astype(f32) * scale)   # scale folded
    wqkv = wqkv.at[:C, Cp:Cp + C].set(params["wk"].astype(f32))
    wqkv = wqkv.at[:C, 2 * Cp:2 * Cp + C].set(params["wv"].astype(f32))
    bqkv = jnp.zeros((1, 3 * Cp), f32)
    bqkv = bqkv.at[:, 0:C].set(params["bq"].astype(f32) * scale)
    bqkv = bqkv.at[:, Cp:Cp + C].set(params["bk"].astype(f32))
    bqkv = bqkv.at[:, 2 * Cp:2 * Cp + C].set(params["bv"].astype(f32))

    wp_p = padw(params["wproj"], C, Cp)      # K stays C (concat heads), N padded
    bp_p = padw(params["bproj"], 1, Cp)
    g1_p = padw(params["gamma1"], 1, Cp)
    b1_p = padw(params["beta1"], 1, Cp)
    g2_p = padw(params["gamma2"], 1, Cp)
    b2_p = padw(params["beta2"], 1, Cp)
    w1_p = padw(params["w1"], Cp, Hp)
    b1m_p = padw(params["b1"], 1, Hp)
    w2_p = padw(params["w2"], Hp, Cp)
    b2m_p = padw(params["b2"], 1, Cp)

    x_pad = x if Cp == C else jnp.pad(x, ((0, 0), (0, 0), (0, 0), (0, Cp - C)))

    # relative-position bias: constant gather from the parameter table.
    rel_idx = _relative_position_index(ws)
    bias = params["rel_bias_table"][rel_idx.reshape(-1)]
    bias = jnp.asarray(bias.reshape(N, N, num_heads).transpose(2, 0, 1), f32)

    has_mask = ss > 0
    mask = _attention_mask(H, W, ws, ss) if has_mask else None

    # cyclic shift (layout only; norm1 commutes with the token permutation).
    shifted = jnp.roll(x_pad, shift=(-ss, -ss), axis=(1, 2)) if ss > 0 else x_pad

    # ---- kernel 1 tiling -------------------------------------------------------
    strip = (ws % SUBLANE == 0)              # fold partition/reverse into BlockSpecs
    n_units = nWc if strip else nW

    def _attn_fits(d):
        m = d * N                            # full in-kernel working set, not just x
        work = 4 * (7 * m * Cp + 3 * m * C + 3 * num_heads * d * N * N)
        return d <= 8 and work <= 4 * 1024 * 1024     # fits v5e 16 MiB default scoped VMEM

    if windows_per_block is None:
        wpb = _largest_divisor(n_units, _attn_fits)
    else:
        wpb = _largest_divisor(n_units, lambda d: d <= windows_per_block)
    if not strip and N % SUBLANE != 0:
        wpb = 1                              # odd window sizes: one window per step
    # v7x megacore: keep >= 2 grid steps so both TensorCores get work.
    other_steps = B * (nWr if strip else 1)
    while wpb > 1 and other_steps * (n_units // wpb) < 2:
        wpb = _largest_divisor(n_units, lambda d: d < wpb)

    kern1 = functools.partial(_attn_kernel, num_heads=num_heads, c_true=C,
                              eps=eps, ws=ws, wpb=wpb, strip=strip,
                              has_mask=has_mask)

    if strip:
        ncb = nWc // wpb
        grid1 = (B, nWr, ncb)
        x_spec = pl.BlockSpec((1, ws, wpb * ws, Cp), lambda b, r, c: (b, r, c, 0))
        o_spec = pl.BlockSpec((1, ws, wpb * ws, Cp), lambda b, r, c: (b, r, c, 0))
        bias_spec = pl.BlockSpec((num_heads, N, N), lambda b, r, c: (0, 0, 0))
        mask_spec = pl.BlockSpec((wpb, N, N), lambda b, r, c: (r * ncb + c, 0, 0))
        const2 = lambda b, r, c: (0, 0)
        attn_in = shifted
        out_shape1 = jax.ShapeDtypeStruct((B, H, W, Cp), x.dtype)
        sem1 = ("parallel", "parallel", "parallel")
    else:
        xw = window_partition(shifted, ws).reshape(B, nW, N, Cp)
        grid1 = (B, nW // wpb)
        x_spec = pl.BlockSpec((1, wpb, N, Cp), lambda b, w: (b, w, 0, 0))
        o_spec = pl.BlockSpec((1, wpb, N, Cp), lambda b, w: (b, w, 0, 0))
        bias_spec = pl.BlockSpec((num_heads, N, N), lambda b, w: (0, 0, 0))
        mask_spec = pl.BlockSpec((wpb, N, N), lambda b, w: (w, 0, 0))
        const2 = lambda b, w: (0, 0)
        attn_in = xw
        out_shape1 = jax.ShapeDtypeStruct((B, nW, N, Cp), x.dtype)
        sem1 = ("parallel", "parallel")

    in_specs1 = [x_spec,
                 pl.BlockSpec((1, Cp), const2), pl.BlockSpec((1, Cp), const2),
                 pl.BlockSpec((Cp, 3 * Cp), const2), pl.BlockSpec((1, 3 * Cp), const2),
                 pl.BlockSpec((C, Cp), const2), pl.BlockSpec((1, Cp), const2),
                 bias_spec]
    args1 = [attn_in, g1_p, b1_p, wqkv, bqkv, wp_p, bp_p, bias]
    if has_mask:
        in_specs1.append(mask_spec)
        args1.append(mask)

    attn_out = pl.pallas_call(
        kern1,
        out_shape=out_shape1,
        grid=grid1,
        in_specs=in_specs1,
        out_specs=o_spec,
        compiler_params=pltpu.CompilerParams(dimension_semantics=sem1),
    )(*args1)

    if strip:
        shifted_attn = attn_out                                  # already (B,H,W,Cp)
    else:
        shifted_attn = window_reverse(attn_out.reshape(B * nW, ws, ws, Cp), ws, H, W)
    attn_spatial = (jnp.roll(shifted_attn, shift=(ss, ss), axis=(1, 2))
                    if ss > 0 else shifted_attn)

    short_tok = x_pad.reshape(T, Cp)
    attn_tok = attn_spatial.reshape(T, Cp)

    # ---- kernel 2 tiling -------------------------------------------------------
    def _mlp_fits(d):
        return d <= 4096 and 4 * d * (4 * Cp + 2 * Hp) <= 6 * 1024 * 1024

    if token_tile is None:
        tt = _largest_divisor(T, lambda d: d % SUBLANE == 0 and _mlp_fits(d))
    else:
        tt = _largest_divisor(T, lambda d: d <= token_tile and d % SUBLANE == 0)
    if tt % SUBLANE != 0 and tt != T:
        tt = T                               # degenerate sizes: one full block

    constm = lambda i: (0, 0)
    out_tok = pl.pallas_call(
        functools.partial(_mlp_kernel, c_true=C, eps=eps),
        out_shape=jax.ShapeDtypeStruct((T, Cp), x.dtype),
        grid=(T // tt,),
        in_specs=[
            pl.BlockSpec((tt, Cp), lambda i: (i, 0)),            # shortcut tokens
            pl.BlockSpec((tt, Cp), lambda i: (i, 0)),            # attention-path tokens
            pl.BlockSpec((1, Cp), constm), pl.BlockSpec((1, Cp), constm),       # norm2
            pl.BlockSpec((Cp, Hp), constm), pl.BlockSpec((1, Hp), constm),      # fc1
            pl.BlockSpec((Hp, Cp), constm), pl.BlockSpec((1, Cp), constm),      # fc2
        ],
        out_specs=pl.BlockSpec((tt, Cp), lambda i: (i, 0)),
        compiler_params=pltpu.CompilerParams(dimension_semantics=("parallel",)),
    )(short_tok, attn_tok, g2_p, b2_p, w1_p, b1m_p, w2_p, b2m_p)

    out = out_tok[:, :C].reshape(B, H, W, C)
    return out.reshape(B, C, H, W)           # torch .view back to the NCHW buffer


# --------------------------------------------------------------------------- #
# Pure-JAX reference (mirrors the PyTorch module line by line)
# --------------------------------------------------------------------------- #
def _layernorm_ref(x, g, b, eps=1e-5):
    mean = x.mean(-1, keepdims=True)
    var = ((x - mean) ** 2).mean(-1, keepdims=True)
    return (x - mean) / jnp.sqrt(var + eps) * g + b


def swin_block_reference(x_nchw, params, *, window_size, shift_size, num_heads,
                         eps=1e-5):
    B, C, H, W = x_nchw.shape
    x = x_nchw.reshape(B, H, W, C)
    shortcut = x
    ws, ss = window_size, shift_size
    if min(H, W) <= ws:
        ss, ws = 0, min(H, W)
    N = ws * ws
    nW = (H // ws) * (W // ws)
    hd = C // num_heads
    scale = hd ** (-0.5)

    x = _layernorm_ref(x.reshape(B * H * W, C), params["gamma1"],
                       params["beta1"], eps).reshape(B, H, W, C)
    shifted = jnp.roll(x, (-ss, -ss), axis=(1, 2)) if ss > 0 else x
    xw = window_partition(shifted, ws).reshape(-1, N, C)
    B_ = xw.shape[0]

    q = (xw @ params["wq"] + params["bq"]).reshape(B_, N, num_heads, hd).transpose(0, 2, 1, 3)
    k = (xw @ params["wk"] + params["bk"]).reshape(B_, N, num_heads, hd).transpose(0, 2, 1, 3)
    v = (xw @ params["wv"] + params["bv"]).reshape(B_, N, num_heads, hd).transpose(0, 2, 1, 3)
    attn = (q * scale) @ jnp.swapaxes(k, -2, -1)                    # (B_, nH, N, N)

    rel_idx = _relative_position_index(ws)
    bias = params["rel_bias_table"][rel_idx.reshape(-1)]
    bias = bias.reshape(N, N, num_heads).transpose(2, 0, 1)
    attn = attn + bias[None]
    if ss > 0:
        mask = _attention_mask(H, W, ws, ss)
        attn = attn.reshape(B_ // nW, nW, num_heads, N, N) + mask[None, :, None]
        attn = attn.reshape(B_, num_heads, N, N)
    attn = jax.nn.softmax(attn, axis=-1)

    xo = (attn @ v).transpose(0, 2, 1, 3).reshape(B_, N, C)
    xo = xo @ params["wproj"] + params["bproj"]
    shifted = window_reverse(xo.reshape(-1, ws, ws, C), ws, H, W)
    xr = jnp.roll(shifted, (ss, ss), axis=(1, 2)) if ss > 0 else shifted

    x1 = (shortcut + xr).reshape(B * H * W, C)
    h = _layernorm_ref(x1, params["gamma2"], params["beta2"], eps) @ params["w1"] + params["b1"]
    h = jax.nn.gelu(h, approximate=False)                            # exact erf GELU
    y = h @ params["w2"] + params["b2"]
    out = (x1 + y).reshape(B, H, W, C)
    return out.reshape(B, C, H, W)


# --------------------------------------------------------------------------- #
if __name__ == "__main__":
    key = jax.random.PRNGKey(0)
    ks = jax.random.split(key, 20)

    B, dim, H, W = 2, 32, 16, 16
    num_heads, window_size, shift_size = 4, 8, 4
    mlp_hidden = int(dim * 4.0)

    def rnd(k, shape, s=0.05):
        return jax.random.normal(k, shape, dtype=jnp.float32) * s

    params = dict(
        gamma1=1.0 + 0.1 * jax.random.normal(ks[0], (1, dim), dtype=jnp.float32),
        beta1=0.1 * jax.random.normal(ks[1], (1, dim), dtype=jnp.float32),
        wq=rnd(ks[2], (dim, dim)), bq=rnd(ks[3], (1, dim)),
        wk=rnd(ks[4], (dim, dim)), bk=rnd(ks[5], (1, dim)),
        wv=rnd(ks[6], (dim, dim)), bv=rnd(ks[7], (1, dim)),
        wproj=rnd(ks[8], (dim, dim)), bproj=rnd(ks[9], (1, dim)),
        rel_bias_table=0.02 * jax.random.normal(
            ks[10], ((2 * window_size - 1) ** 2, num_heads), dtype=jnp.float32),
        gamma2=1.0 + 0.1 * jax.random.normal(ks[11], (1, dim), dtype=jnp.float32),
        beta2=0.1 * jax.random.normal(ks[12], (1, dim), dtype=jnp.float32),
        w1=rnd(ks[13], (dim, mlp_hidden), 0.1), b1=rnd(ks[14], (1, mlp_hidden)),
        w2=rnd(ks[15], (mlp_hidden, dim), 0.1), b2=rnd(ks[16], (1, dim)),
    )
    x = jax.random.normal(ks[17], (B, dim, H, W), dtype=jnp.float32)

    # ---- shifted-window config (mask path); small tiles to exercise the grids
    out = jax.block_until_ready(
        swin_transformer_block(x, params, window_size=window_size,
                               shift_size=shift_size, num_heads=num_heads,
                               windows_per_block=1, token_tile=128))
    with jax.default_matmul_precision("highest"):
        ref = swin_block_reference(x, params, window_size=window_size,
                                   shift_size=shift_size, num_heads=num_heads)
    assert out.shape == (B, dim, H, W), out.shape
    err = float(jnp.max(jnp.abs(out - ref)))
    # headroom for the erf polynomial / EUP-reciprocal path / MXU accumulation order
    assert err < 5e-4, f"shifted-window mismatch: {err}"

    # ---- non-shifted config (no mask input), auto tiling
    out2 = jax.block_until_ready(
        swin_transformer_block(x, params, window_size=window_size,
                               shift_size=0, num_heads=num_heads))
    with jax.default_matmul_precision("highest"):
        ref2 = swin_block_reference(x, params, window_size=window_size,
                                    shift_size=0, num_heads=num_heads)
    err2 = float(jnp.max(jnp.abs(out2 - ref2)))
    assert err2 < 5e-4, f"non-shifted mismatch: {err2}"

    print("KERNEL_OK")
</pallas_src>

<mosaic_0001>
module attributes {stable_mosaic.version = 11 : i64} {
  func.func @_attn_kernel(%arg0: i32, %arg1: i32, %arg2: i32, %arg3: memref<1x8x8x128xf32, #tpu.memory_space<vmem>>, %arg4: memref<1x128xf32, #tpu.memory_space<vmem>>, %arg5: memref<1x128xf32, #tpu.memory_space<vmem>>, %arg6: memref<128x384xf32, #tpu.memory_space<vmem>>, %arg7: memref<1x384xf32, #tpu.memory_space<vmem>>, %arg8: memref<32x128xf32, #tpu.memory_space<vmem>>, %arg9: memref<1x128xf32, #tpu.memory_space<vmem>>, %arg10: memref<4x64x64xf32, #tpu.memory_space<vmem>>, %arg11: memref<1x64x64xf32, #tpu.memory_space<vmem>>, %arg12: memref<1x8x8x128xf32, #tpu.memory_space<vmem>>) attributes {dimension_semantics = [#tpu.dimension_semantics<parallel>, #tpu.dimension_semantics<parallel>, #tpu.dimension_semantics<parallel>], iteration_bounds = array<i64: 2, 2, 2>, scalar_prefetch = 0 : i64, scratch_operands = 0 : i64, tpu.core_type = #tpu.core_type<tc>, window_params = [{transform_indices = @transform_0, window_bounds = array<i64: 1, 8, 8, 128>}, {pipeline_mode = #tpu.pipeline_mode<synchronous>, transform_indices = @transform_1, window_bounds = array<i64: 1, 128>}, {pipeline_mode = #tpu.pipeline_mode<synchronous>, transform_indices = @transform_2, window_bounds = array<i64: 1, 128>}, {pipeline_mode = #tpu.pipeline_mode<synchronous>, transform_indices = @transform_3, window_bounds = array<i64: 128, 384>}, {pipeline_mode = #tpu.pipeline_mode<synchronous>, transform_indices = @transform_4, window_bounds = array<i64: 1, 384>}, {pipeline_mode = #tpu.pipeline_mode<synchronous>, transform_indices = @transform_5, window_bounds = array<i64: 32, 128>}, {pipeline_mode = #tpu.pipeline_mode<synchronous>, transform_indices = @transform_6, window_bounds = array<i64: 1, 128>}, {pipeline_mode = #tpu.pipeline_mode<synchronous>, transform_indices = @transform_7, window_bounds = array<i64: 4, 64, 64>}, {transform_indices = @transform_8, window_bounds = array<i64: 1, 64, 64>}, {transform_indices = @transform_9, window_bounds = array<i64: 1, 8, 8, 128>}]} {
    %c0 = arith.constant 0 : index
    %c0_0 = arith.constant 0 : index
    %c0_1 = arith.constant 0 : index
    %c0_2 = arith.constant 0 : index
    %0 = vector.load %arg3[%c0, %c0_0, %c0_1, %c0_2] : memref<1x8x8x128xf32, #tpu.memory_space<vmem>>, vector<1x8x8x128xf32>
    %1 = vector.shape_cast %0 : vector<1x8x8x128xf32> to vector<8x8x128xf32>
    %2 = vector.shape_cast %1 : vector<8x8x128xf32> to vector<64x128xf32>
    %c0_3 = arith.constant 0 : index
    %c0_4 = arith.constant 0 : index
    %3 = vector.load %arg4[%c0_3, %c0_4] : memref<1x128xf32, #tpu.memory_space<vmem>>, vector<1x128xf32>
    %c0_5 = arith.constant 0 : index
    %c0_6 = arith.constant 0 : index
    %4 = vector.load %arg5[%c0_5, %c0_6] : memref<1x128xf32, #tpu.memory_space<vmem>>, vector<1x128xf32>
    %cst = arith.constant dense<0.000000e+00> : vector<64xf32>
    %5 = vector.multi_reduction <add>, %2, %cst [1] : vector<64x128xf32> to vector<64xf32>
    %6 = vector.shape_cast %5 : vector<64xf32> to vector<64x1xf32>
    %cst_7 = arith.constant 3.125000e-02 : f32
    %7 = vector.broadcast %cst_7 : f32 to vector<64x1xf32>
    %8 = arith.mulf %6, %7 : vector<64x1xf32>
    %9 = vector.broadcast %8 : vector<64x1xf32> to vector<64x128xf32>
    %10 = arith.subf %2, %9 : vector<64x128xf32>
    %11 = tpu.iota {dimensions = array<i32: 1>} : vector<1x128xi32>
    %c32_i32 = arith.constant 32 : i32
    %12 = vector.broadcast %c32_i32 : i32 to vector<1x128xi32>
    %13 = arith.cmpi slt, %11, %12 : vector<1x128xi32>
    %cst_8 = arith.constant 0.000000e+00 : f32
    %14 = vector.shape_cast %13 : vector<1x128xi1> to vector<1x128xi1>
    %15 = vector.broadcast %14 : vector<1x128xi1> to vector<64x128xi1>
    %16 = vector.broadcast %cst_8 : f32 to vector<64x128xf32>
    %17 = arith.select %15, %10, %16 : vector<64x128xi1>, vector<64x128xf32>
    %18 = arith.mulf %17, %17 : vector<64x128xf32>
    %cst_9 = arith.constant dense<0.000000e+00> : vector<64xf32>
    %19 = vector.multi_reduction <add>, %18, %cst_9 [1] : vector<64x128xf32> to vector<64xf32>
    %20 = vector.shape_cast %19 : vector<64xf32> to vector<64x1xf32>
    %cst_10 = arith.constant 3.125000e-02 : f32
    %21 = vector.broadcast %cst_10 : f32 to vector<64x1xf32>
    %22 = arith.mulf %20, %21 : vector<64x1xf32>
    %cst_11 = arith.constant 9.99999974E-6 : f32
    %23 = vector.broadcast %cst_11 : f32 to vector<64x1xf32>
    %24 = arith.addf %22, %23 : vector<64x1xf32>
    %25 = math.rsqrt %24 : vector<64x1xf32>
    %26 = vector.broadcast %25 : vector<64x1xf32> to vector<64x128xf32>
    %27 = arith.mulf %17, %26 : vector<64x128xf32>
    %28 = vector.broadcast %3 : vector<1x128xf32> to vector<64x128xf32>
    %29 = arith.mulf %27, %28 : vector<64x128xf32>
    %30 = vector.broadcast %4 : vector<1x128xf32> to vector<64x128xf32>
    %31 = arith.addf %29, %30 : vector<64x128xf32>
    %c0_12 = arith.constant 0 : index
    %c0_13 = arith.constant 0 : index
    %32 = vector.load %arg6[%c0_12, %c0_13] : memref<128x384xf32, #tpu.memory_space<vmem>>, vector<128x384xf32>
    %cst_14 = arith.constant dense<0.000000e+00> : vector<64x384xf32>
    %33 = tpu.matmul %31, %32, %cst_14 {dimension_numbers = #tpu.dot_dimension_numbers<[1], [0], [0], [1], [0, 0, 1, 1], [], []>} : vector<64x128xf32>, vector<128x384xf32>, vector<64x384xf32> -> vector<64x384xf32>
    %c0_15 = arith.constant 0 : index
    %c0_16 = arith.constant 0 : index
    %34 = vector.load %arg7[%c0_15, %c0_16] : memref<1x384xf32, #tpu.memory_space<vmem>>, vector<1x384xf32>
    %35 = vector.broadcast %34 : vector<1x384xf32> to vector<64x384xf32>
    %36 = arith.addf %33, %35 : vector<64x384xf32>
    %37 = vector.extract_strided_slice %36 {offsets = [0, 0], sizes = [64, 8], strides = [1, 1]} : vector<64x384xf32> to vector<64x8xf32>
    %38 = vector.extract_strided_slice %36 {offsets = [0, 8], sizes = [64, 8], strides = [1, 1]} : vector<64x384xf32> to vector<64x8xf32>
    %39 = vector.extract_strided_slice %36 {offsets = [0, 16], sizes = [64, 8], strides = [1, 1]} : vector<64x384xf32> to vector<64x8xf32>
    %40 = vector.extract_strided_slice %36 {offsets = [0, 24], sizes = [64, 8], strides = [1, 1]} : vector<64x384xf32> to vector<64x8xf32>
    %41 = vector.shape_cast %37 : vector<64x8xf32> to vector<1x64x8xf32>
    %42 = vector.shape_cast %38 : vector<64x8xf32> to vector<1x64x8xf32>
    %43 = vector.shape_cast %39 : vector<64x8xf32> to vector<1x64x8xf32>
    %44 = vector.shape_cast %40 : vector<64x8xf32> to vector<1x64x8xf32>
    %45 = tpu.concatenate %41, %42, %43, %44 in 0 : vector<1x64x8xf32>, vector<1x64x8xf32>, vector<1x64x8xf32>, vector<1x64x8xf32> -> vector<4x64x8xf32>
    %46 = vector.extract_strided_slice %36 {offsets = [0, 128], sizes = [64, 8], strides = [1, 1]} : vector<64x384xf32> to vector<64x8xf32>
    %47 = vector.extract_strided_slice %36 {offsets = [0, 136], sizes = [64, 8], strides = [1, 1]} : vector<64x384xf32> to vector<64x8xf32>
    %48 = vector.extract_strided_slice %36 {offsets = [0, 144], sizes = [64, 8], strides = [1, 1]} : vector<64x384xf32> to vector<64x8xf32>
    %49 = vector.extract_strided_slice %36 {offsets = [0, 152], sizes = [64, 8], strides = [1, 1]} : vector<64x384xf32> to vector<64x8xf32>
    %50 = vector.shape_cast %46 : vector<64x8xf32> to vector<1x64x8xf32>
    %51 = vector.shape_cast %47 : vector<64x8xf32> to vector<1x64x8xf32>
    %52 = vector.shape_cast %48 : vector<64x8xf32> to vector<1x64x8xf32>
    %53 = vector.shape_cast %49 : vector<64x8xf32> to vector<1x64x8xf32>
    %54 = tpu.concatenate %50, %51, %52, %53 in 0 : vector<1x64x8xf32>, vector<1x64x8xf32>, vector<1x64x8xf32>, vector<1x64x8xf32> -> vector<4x64x8xf32>
    %55 = vector.extract_strided_slice %36 {offsets = [0, 256], sizes = [64, 8], strides = [1, 1]} : vector<64x384xf32> to vector<64x8xf32>
    %56 = vector.extract_strided_slice %36 {offsets = [0, 264], sizes = [64, 8], strides = [1, 1]} : vector<64x384xf32> to vector<64x8xf32>
    %57 = vector.extract_strided_slice %36 {offsets = [0, 272], sizes = [64, 8], strides = [1, 1]} : vector<64x384xf32> to vector<64x8xf32>
    %58 = vector.extract_strided_slice %36 {offsets = [0, 280], sizes = [64, 8], strides = [1, 1]} : vector<64x384xf32> to vector<64x8xf32>
    %59 = vector.shape_cast %55 : vector<64x8xf32> to vector<1x64x8xf32>
    %60 = vector.shape_cast %56 : vector<64x8xf32> to vector<1x64x8xf32>
    %61 = vector.shape_cast %57 : vector<64x8xf32> to vector<1x64x8xf32>
    %62 = vector.shape_cast %58 : vector<64x8xf32> to vector<1x64x8xf32>
    %63 = tpu.concatenate %59, %60, %61, %62 in 0 : vector<1x64x8xf32>, vector<1x64x8xf32>, vector<1x64x8xf32>, vector<1x64x8xf32> -> vector<4x64x8xf32>
    "tpu.trace_start"() <{level = 10 : i32, message = "bnd,bmd->bnm"}> : () -> ()
    %cst_17 = arith.constant dense<0.000000e+00> : vector<4x64x64xf32>
    %64 = tpu.matmul %45, %54, %cst_17 {dimension_numbers = #tpu.dot_dimension_numbers<[2], [2], [1], [1], [0, 0, 0, 1, 1, 1], [0], [0]>} : vector<4x64x8xf32>, vector<4x64x8xf32>, vector<4x64x64xf32> -> vector<4x64x64xf32>
    "tpu.trace_stop"() : () -> ()
    %65 = vector.shape_cast %64 : vector<4x64x64xf32> to vector<4x1x64x64xf32>
    %c0_18 = arith.constant 0 : index
    %c0_19 = arith.constant 0 : index
    %c0_20 = arith.constant 0 : index
    %66 = vector.load %arg10[%c0_18, %c0_19, %c0_20] : memref<4x64x64xf32, #tpu.memory_space<vmem>>, vector<4x64x64xf32>
    %67 = vector.shape_cast %66 : vector<4x64x64xf32> to vector<4x1x64x64xf32>
    %68 = arith.addf %65, %67 : vector<4x1x64x64xf32>
    %c0_21 = arith.constant 0 : index
    %c0_22 = arith.constant 0 : index
    %c0_23 = arith.constant 0 : index
    %69 = vector.load %arg11[%c0_21, %c0_22, %c0_23] : memref<1x64x64xf32, #tpu.memory_space<vmem>>, vector<1x64x64xf32>
    %70 = vector.shape_cast %69 : vector<1x64x64xf32> to vector<1x1x64x64xf32>
    %71 = vector.broadcast %70 : vector<1x1x64x64xf32> to vector<4x1x64x64xf32>
    %72 = arith.addf %68, %71 : vector<4x1x64x64xf32>
    %cst_24 = arith.constant dense<0xFF800000> : vector<4x1x64xf32>
    %73 = vector.multi_reduction <maximumf>, %72, %cst_24 [3] : vector<4x1x64x64xf32> to vector<4x1x64xf32>
    %74 = vector.shape_cast %73 : vector<4x1x64xf32> to vector<4x1x64x1xf32>
    %75 = vector.broadcast %74 : vector<4x1x64x1xf32> to vector<4x1x64x64xf32>
    %76 = arith.subf %72, %75 : vector<4x1x64x64xf32>
    %77 = math.exp %76 : vector<4x1x64x64xf32>
    %cst_25 = arith.constant dense<0.000000e+00> : vector<4x1x64xf32>
    %78 = vector.multi_reduction <add>, %77, %cst_25 [3] : vector<4x1x64x64xf32> to vector<4x1x64xf32>
    %79 = vector.shape_cast %78 : vector<4x1x64xf32> to vector<4x1x64x1xf32>
    %80 = tpu.reciprocal %79 {approx = true} : vector<4x1x64x1xf32> -> vector<4x1x64x1xf32>
    %81 = arith.mulf %79, %80 : vector<4x1x64x1xf32>
    %cst_26 = arith.constant 2.000000e+00 : f32
    %82 = vector.broadcast %cst_26 : f32 to vector<4x1x64x1xf32>
    %83 = arith.subf %82, %81 : vector<4x1x64x1xf32>
    %84 = arith.mulf %80, %83 : vector<4x1x64x1xf32>
    %85 = vector.broadcast %84 : vector<4x1x64x1xf32> to vector<4x1x64x64xf32>
    %86 = arith.mulf %77, %85 : vector<4x1x64x64xf32>
    %87 = vector.shape_cast %86 : vector<4x1x64x64xf32> to vector<4x64x64xf32>
    "tpu.trace_start"() <{level = 10 : i32, message = "bnm,bmd->bnd"}> : () -> ()
    %cst_27 = arith.constant dense<0.000000e+00> : vector<4x64x8xf32>
    %88 = tpu.matmul %87, %63, %cst_27 {dimension_numbers = #tpu.dot_dimension_numbers<[2], [1], [1], [2], [0, 0, 0, 1, 1, 2], [0], [0]>} : vector<4x64x64xf32>, vector<4x64x8xf32>, vector<4x64x8xf32> -> vector<4x64x8xf32>
    "tpu.trace_stop"() : () -> ()
    %89 = vector.extract_strided_slice %88 {offsets = [0, 0, 0], sizes = [1, 64, 8], strides = [1, 1, 1]} : vector<4x64x8xf32> to vector<1x64x8xf32>
    %90 = vector.shape_cast %89 : vector<1x64x8xf32> to vector<64x8xf32>
    %91 = vector.extract_strided_slice %88 {offsets = [1, 0, 0], sizes = [1, 64, 8], strides = [1, 1, 1]} : vector<4x64x8xf32> to vector<1x64x8xf32>
    %92 = vector.shape_cast %91 : vector<1x64x8xf32> to vector<64x8xf32>
    %93 = vector.extract_strided_slice %88 {offsets = [2, 0, 0], sizes = [1, 64, 8], strides = [1, 1, 1]} : vector<4x64x8xf32> to vector<1x64x8xf32>
    %94 = vector.shape_cast %93 : vector<1x64x8xf32> to vector<64x8xf32>
    %95 = vector.extract_strided_slice %88 {offsets = [3, 0, 0], sizes = [1, 64, 8], strides = [1, 1, 1]} : vector<4x64x8xf32> to vector<1x64x8xf32>
    %96 = vector.shape_cast %95 : vector<1x64x8xf32> to vector<64x8xf32>
    %97 = tpu.concatenate %90, %92, %94, %96 in 1 : vector<64x8xf32>, vector<64x8xf32>, vector<64x8xf32>, vector<64x8xf32> -> vector<64x32xf32>
    %c0_28 = arith.constant 0 : index
    %c0_29 = arith.constant 0 : index
    %98 = vector.load %arg8[%c0_28, %c0_29] : memref<32x128xf32, #tpu.memory_space<vmem>>, vector<32x128xf32>
    %cst_30 = arith.constant dense<0.000000e+00> : vector<64x128xf32>
    %99 = tpu.matmul %97, %98, %cst_30 {dimension_numbers = #tpu.dot_dimension_numbers<[1], [0], [0], [1], [0, 0, 1, 1], [], []>} : vector<64x32xf32>, vector<32x128xf32>, vector<64x128xf32> -> vector<64x128xf32>
    %c0_31 = arith.constant 0 : index
    %c0_32 = arith.constant 0 : index
    %100 = vector.load %arg9[%c0_31, %c0_32] : memref<1x128xf32, #tpu.memory_space<vmem>>, vector<1x128xf32>
    %101 = vector.broadcast %100 : vector<1x128xf32> to vector<64x128xf32>
    %102 = arith.addf %99, %101 : vector<64x128xf32>
    %103 = vector.shape_cast %102 : vector<64x128xf32> to vector<8x8x128xf32>
    %c0_33 = arith.constant 0 : index
    %c0_34 = arith.constant 0 : index
    %c0_35 = arith.constant 0 : index
    %c0_36 = arith.constant 0 : index
    %104 = vector.load %arg12[%c0_33, %c0_34, %c0_35, %c0_36] : memref<1x8x8x128xf32, #tpu.memory_space<vmem>>, vector<1x8x8x128xf32>
    %105 = vector.shape_cast %104 : vector<1x8x8x128xf32> to vector<8x8x128xf32>
    %106 = vector.shape_cast %103 : vector<8x8x128xf32> to vector<1x8x8x128xf32>
    tpu.vector_store %arg12[%c0_33, %c0_34, %c0_35, %c0_36], %106 {strides = array<i32>} : memref<1x8x8x128xf32, #tpu.memory_space<vmem>>, vector<1x8x8x128xf32>,
    return
  }
  func.func @transform_0(%arg0: i32, %arg1: i32, %arg2: i32) -> (i32, i32, i32, i32) {
    %c0_i32 = arith.constant 0 : i32
    %c0_i32_0 = arith.constant 0 : i32
    return %arg0, %arg1, %arg2, %c0_i32 : i32, i32, i32, i32
  }
  func.func @transform_1(%arg0: i32, %arg1: i32, %arg2: i32) -> (i32, i32) {
    %c0_i32 = arith.constant 0 : i32
    %c0_i32_0 = arith.constant 0 : i32
    %c0_i32_1 = arith.constant 0 : i32
    return %c0_i32, %c0_i32_0 : i32, i32
  }
  func.func @transform_2(%arg0: i32, %arg1: i32, %arg2: i32) -> (i32, i32) {
    %c0_i32 = arith.constant 0 : i32
    %c0_i32_0 = arith.constant 0 : i32
    %c0_i32_1 = arith.constant 0 : i32
    return %c0_i32, %c0_i32_0 : i32, i32
  }
  func.func @transform_3(%arg0: i32, %arg1: i32, %arg2: i32) -> (i32, i32) {
    %c0_i32 = arith.constant 0 : i32
    %c0_i32_0 = arith.constant 0 : i32
    %c0_i32_1 = arith.constant 0 : i32
    return %c0_i32, %c0_i32_0 : i32, i32
  }
  func.func @transform_4(%arg0: i32, %arg1: i32, %arg2: i32) -> (i32, i32) {
    %c0_i32 = arith.constant 0 : i32
    %c0_i32_0 = arith.constant 0 : i32
    %c0_i32_1 = arith.constant 0 : i32
    return %c0_i32, %c0_i32_0 : i32, i32
  }
  func.func @transform_5(%arg0: i32, %arg1: i32, %arg2: i32) -> (i32, i32) {
    %c0_i32 = arith.constant 0 : i32
    %c0_i32_0 = arith.constant 0 : i32
    %c0_i32_1 = arith.constant 0 : i32
    return %c0_i32, %c0_i32_0 : i32, i32
  }
  func.func @transform_6(%arg0: i32, %arg1: i32, %arg2: i32) -> (i32, i32) {
    %c0_i32 = arith.constant 0 : i32
    %c0_i32_0 = arith.constant 0 : i32
    %c0_i32_1 = arith.constant 0 : i32
    return %c0_i32, %c0_i32_0 : i32, i32
  }
  func.func @transform_7(%arg0: i32, %arg1: i32, %arg2: i32) -> (i32, i32, i32) {
    %c0_i32 = arith.constant 0 : i32
    %c0_i32_0 = arith.constant 0 : i32
    %c0_i32_1 = arith.constant 0 : i32
    %c0_i32_2 = arith.constant 0 : i32
    return %c0_i32, %c0_i32_0, %c0_i32_1 : i32, i32, i32
  }
  func.func @transform_8(%arg0: i32, %arg1: i32, %arg2: i32) -> (i32, i32, i32) {
    %c2_i32 = arith.constant 2 : i32
    %0 = arith.muli %arg1, %c2_i32 : i32
    %1 = arith.addi %0, %arg2 : i32
    %c0_i32 = arith.constant 0 : i32
    %c0_i32_0 = arith.constant 0 : i32
    %c0_i32_1 = arith.constant 0 : i32
    return %1, %c0_i32, %c0_i32_0 : i32, i32, i32
  }
  func.func @transform_9(%arg0: i32, %arg1: i32, %arg2: i32) -> (i32, i32, i32, i32) {
    %c0_i32 = arith.constant 0 : i32
    %c0_i32_0 = arith.constant 0 : i32
    return %arg0, %arg1, %arg2, %c0_i32 : i32, i32, i32, i32
  }
}

</mosaic_0001>

<llo_original>
// kernel: tpu_custom_call.1
$region0: #{tpu_custom_call.1}
  #allocation0 [shape = 'u32[]', space=smem, size = 0x4, offset = 0x4, fixed_abs, tag = 'smem constant byte address 0x4 - core index']
  #allocation1 [shape = 'u32[144,128]{1,0:T(1,128)}', space=vmem, size = 0x12000, scoped, tag = 'internal scratch']
  %s0 = inlined_call_operand.hbm [shape: f32[2,16,16,128], index: 0, kind: input, shape index: {}]
  %s1 = inlined_call_operand.vmem [shape: f32[1,128], index: 1, kind: input, shape index: {}]
  %s2 = inlined_call_operand.vmem [shape: f32[1,128], index: 2, kind: input, shape index: {}]
  %s3 = inlined_call_operand.hbm [shape: f32[128,384], index: 3, kind: input, shape index: {}]
  %s4 = inlined_call_operand.vmem [shape: f32[1,384], index: 4, kind: input, shape index: {}]
  %s5 = inlined_call_operand.hbm [shape: f32[32,128], index: 5, kind: input, shape index: {}]
  %s6 = inlined_call_operand.vmem [shape: f32[1,128], index: 6, kind: input, shape index: {}]
  %s7 = inlined_call_operand.hbm [shape: f32[4,64,64], index: 7, kind: input, shape index: {}]
  %s8 = inlined_call_operand.hbm [shape: f32[4,64,64], index: 8, kind: input, shape index: {}]
  %s9 = inlined_call_operand.hbm [shape: f32[2,16,16,128], index: 9, kind: output, shape index: {}]
  %s10 = sld [smem:[#allocation0]]
  $region89: #{tpu_custom_call.1} parent=0
    _
  %s12 = ssub.s32 1, %s10
  %s13 = scalar_select 0, %s12, %s10
  $region1: #{tpu_custom_call.1} parent=0
    #allocation2 [shape = 'u8[65536]{0}', space=vmem, size = 0x10000, scoped, tag = 'input window, operand 0']
    #allocation3 [shape = 's32[2]{0}', space=sflag, size = 0x8, scoped, tag = 'scoped memory for tpu_custom_call.1']
    #allocation4 [shape = 's32[2]{0}', space=sflag, size = 0x8, scoped, tag = 'scoped memory for tpu_custom_call.1']
    #allocation5 [shape = 'u8[196608]{0}', space=vmem, size = 0x30000, scoped, tag = 'input window, operand 3, single buffered']
    #allocation6 [shape = 's32[1]{0}', space=sflag, size = 0x4, scoped, tag = 'scoped memory for tpu_custom_call.1']
    #allocation7 [shape = 'u8[16384]{0}', space=vmem, size = 0x4000, scoped, tag = 'input window, operand 5, single buffered']
    #allocation8 [shape = 'u8[131072]{0}', space=vmem, size = 0x20000, scoped, tag = 'input window, operand 7, single buffered']
    #allocation9 [shape = 's32[1]{0}', space=sflag, size = 0x4, scoped, tag = 'scoped memory for tpu_custom_call.1']
    #allocation10 [shape = 'u8[65536]{0}', space=vmem, size = 0x10000, scoped, tag = 'input window, operand 8']
    #allocation11 [shape = 'u8[65536]{0}', space=vmem, size = 0x10000, scoped, tag = 'output window, operand 0']
    %14 = vsyncpa [#allocation3], 0
    %s15 = scalar_lea.sflag [#allocation3], 1
    %16 = vsyncpa %s15, 0
    %17 = vsyncpa [#allocation6], 0
    %18 = vsyncpa [#allocation9], 0
    %19 = vsyncpa [#allocation4], 0
    %s20 = scalar_lea.sflag [#allocation4], 1
    %21 = vsyncpa %s20, 0
    loop: start=0, step=1, limit=10
    $region2: #{tpu_custom_call.1} parent=1 // loop_pre_header
      _
    $region3: #{tpu_custom_call.1} parent=1 // loop_header
      %s23 = sphi 0, %s27
      %p24 = scmp.ge.s32.totalorder %s23, 10
      %s30 = sphi 0, %s49
      %s31 = sphi 0, %s45
      %s32 = sphi 0, %s41
      %s33 = sphi 0, %s30
      %s34 = sphi 0, %s31
      %s35 = sphi 0, %s32
      %s36 = sphi 0, %s33
      %s37 = sphi 0, %s34
      %s38 = sphi 0, %s35
      %s56 = sphi 0, %s58
      %s59 = sphi 0, %s56
      %s60 = sphi 0, %s59
      %s76 = sphi 0, %s60
      %s80 = sphi 0, %s80
      %s82 = sphi 0, %s80
      %s83 = sphi 0, %s82
      %s97 = sphi 0, %s83
      %s101 = sphi 0, %s101
      %s103 = sphi 0, %s101
      %s104 = sphi 0, %s103
      %s118 = sphi 0, %s104
      %s122 = sphi 0, %s122
      %s124 = sphi 0, %s122
      %s125 = sphi 0, %s124
      %s139 = sphi 0, %s125
      %s143 = sphi 0, %s143
      %s145 = sphi 0, %s143
      %s146 = sphi 0, %s145
      %s160 = sphi 0, %s146
      %s164 = sphi 0, %s164
      %s166 = sphi 0, %s164
      %s167 = sphi 0, %s166
      %s181 = sphi 0, %s167
      %s185 = sphi 0, %s185
      %s187 = sphi 0, %s185
      %s188 = sphi 0, %s187
      %s202 = sphi 0, %s188
      %s206 = sphi 0, %s206
      %s208 = sphi 0, %s206
      %s209 = sphi 0, %s208
      %s223 = sphi 0, %s209
      %s233 = sphi 0, %s235
      %s236 = sphi 0, %s233
      %s237 = sphi 0, %s236
      %s253 = sphi 0, %s237
      %s263 = sphi 0, %s265
      %s266 = sphi 0, %s263
      %s267 = sphi 0, %s266
      %s283 = sphi 0, %s267
    $region4: #{tpu_custom_call.1} parent=1 // loop_header_branch
      %26 = sbr.rel (%p24) target = $region8
    $region5: #{tpu_custom_call.1} parent=1 // loop_body
      %s28 = ssub.s32 %s23, 1
      %s29 = ssub.s32 %s23, 2
      %s39 = sadd.s32 1, %s32
      %p40 = scmp.ge.s32.totalorder %s39, 2
      %s41 = scalar_select %p40, 0, %s39
      %s42 = sadd.s32 1, %s31
      %s43 = scalar_select %p40, %s42, %s31
      %p44 = scmp.ge.s32.totalorder %s43, 2
      %s45 = scalar_select %p44, 0, %s43
      %s46 = sadd.s32 1, %s30
      %s47 = scalar_select %p44, %s46, %s30
      %p48 = scmp.ge.s32.totalorder %s47, 2
      %s49 = scalar_select %p48, 0, %s47
      %s50 = ssub.s32 %s30, %s49
      %s51 = ssub.s32 %s31, %s45
      %s52 = sor.u32 %s50, %s51
      %s53 = ssub.s32 %s32, %s41
      %s54 = sor.u32 %s52, %s53
      %p55 = scmp.eq.s32.totalorder %s54, 0
      %s57 = sadd.s32 %s56, 1
      %s58 = scalar_select %p55, %s56, %s57
      %p61 = pneg %p55
      %p62 = scmp.eq.s32.totalorder %s23, 7
      %p63 = por %p61, %p62
      %p64 = scmp.ne.s32.totalorder %s56, %s59
      %p65 = scmp.eq.s32.totalorder %s23, 0
      %p66 = por %p64, %p65
      %p67 = scmp.ne.s32.totalorder %s56, %s59
      %p68 = scmp.eq.s32.totalorder %s28, 7
      %p69 = por %p67, %p68
      %p70 = scmp.ne.s32.totalorder %s59, %s60
      %p71 = scmp.eq.s32.totalorder %s28, 0
      %p72 = por %p70, %p71
      %p73 = scmp.ne.s32.totalorder %s59, %s60
      %p74 = scmp.eq.s32.totalorder %s29, 7
      %p75 = por %p73, %p74
      %p77 = scmp.ne.s32.totalorder %s60, %s76
      %p78 = scmp.eq.s32.totalorder %s29, 0
      %p79 = por %p77, %p78
      %s81 = sadd.s32 %s80, 1
      %p84 = scmp.eq.s32.totalorder %s23, 7
      %p85 = scmp.ne.s32.totalorder %s80, %s82
      %p86 = scmp.eq.s32.totalorder %s23, 0
      %p87 = por %p85, %p86
      %p88 = scmp.ne.s32.totalorder %s80, %s82
      %p89 = scmp.eq.s32.totalorder %s28, 7
      %p90 = por %p88, %p89
      %p91 = scmp.ne.s32.totalorder %s82, %s83
      %p92 = scmp.eq.s32.totalorder %s28, 0
      %p93 = por %p91, %p92
      %p94 = scmp.ne.s32.totalorder %s82, %s83
      %p95 = scmp.eq.s32.totalorder %s29, 7
      %p96 = por %p94, %p95
      %p98 = scmp.ne.s32.totalorder %s83, %s97
      %p99 = scmp.eq.s32.totalorder %s29, 0
      %p100 = por %p98, %p99
      %s102 = sadd.s32 %s101, 1
      %p105 = scmp.eq.s32.totalorder %s23, 7
      %p106 = scmp.ne.s32.totalorder %s101, %s103
      %p107 = scmp.eq.s32.totalorder %s23, 0
      %p108 = por %p106, %p107
      %p109 = scmp.ne.s32.totalorder %s101, %s103
      %p110 = scmp.eq.s32.totalorder %s28, 7
      %p111 = por %p109, %p110
      %p112 = scmp.ne.s32.totalorder %s103, %s104
      %p113 = scmp.eq.s32.totalorder %s28, 0
      %p114 = por %p112, %p113
      %p115 = scmp.ne.s32.totalorder %s103, %s104
      %p116 = scmp.eq.s32.totalorder %s29, 7
      %p117 = por %p115, %p116
      %p119 = scmp.ne.s32.totalorder %s104, %s118
      %p120 = scmp.eq.s32.totalorder %s29, 0
      %p121 = por %p119, %p120
      %s123 = sadd.s32 %s122, 1
      %p126 = scmp.eq.s32.totalorder %s23, 7
      %p127 = scmp.ne.s32.totalorder %s122, %s124
      %p128 = scmp.eq.s32.totalorder %s23, 0
      %p129 = por %p127, %p128
      %p130 = scmp.ne.s32.totalorder %s122, %s124
      %p131 = scmp.eq.s32.totalorder %s28, 7
      %p132 = por %p130, %p131
      %p133 = scmp.ne.s32.totalorder %s124, %s125
      %p134 = scmp.eq.s32.totalorder %s28, 0
      %p135 = por %p133, %p134
      %p136 = scmp.ne.s32.totalorder %s124, %s125
      %p137 = scmp.eq.s32.totalorder %s29, 7
      %p138 = por %p136, %p137
      %p140 = scmp.ne.s32.totalorder %s125, %s139
      %p141 = scmp.eq.s32.totalorder %s29, 0
      %p142 = por %p140, %p141
      %s144 = sadd.s32 %s143, 1
      %p147 = scmp.eq.s32.totalorder %s23, 7
      %p148 = scmp.ne.s32.totalorder %s143, %s145
      %p149 = scmp.eq.s32.totalorder %s23, 0
      %p150 = por %p148, %p149
      %p151 = scmp.ne.s32.totalorder %s143, %s145
      %p152 = scmp.eq.s32.totalorder %s28, 7
      %p153 = por %p151, %p152
      %p154 = scmp.ne.s32.totalorder %s145, %s146
      %p155 = scmp.eq.s32.totalorder %s28, 0
      %p156 = por %p154, %p155
      %p157 = scmp.ne.s32.totalorder %s145, %s146
      %p158 = scmp.eq.s32.totalorder %s29, 7
      %p159 = por %p157, %p158
      %p161 = scmp.ne.s32.totalorder %s146, %s160
      %p162 = scmp.eq.s32.totalorder %s29, 0
      %p163 = por %p161, %p162
      %s165 = sadd.s32 %s164, 1
      %p168 = scmp.eq.s32.totalorder %s23, 7
      %p169 = scmp.ne.s32.totalorder %s164, %s166
      %p170 = scmp.eq.s32.totalorder %s23, 0
      %p171 = por %p169, %p170
      %p172 = scmp.ne.s32.totalorder %s164, %s166
      %p173 = scmp.eq.s32.totalorder %s28, 7
      %p174 = por %p172, %p173
      %p175 = scmp.ne.s32.totalorder %s166, %s167
      %p176 = scmp.eq.s32.totalorder %s28, 0
      %p177 = por %p175, %p176
      %p178 = scmp.ne.s32.totalorder %s166, %s167
      %p179 = scmp.eq.s32.totalorder %s29, 7
      %p180 = por %p178, %p179
      %p182 = scmp.ne.s32.totalorder %s167, %s181
      %p183 = scmp.eq.s32.totalorder %s29, 0
      %p184 = por %p182, %p183
      %s186 = sadd.s32 %s185, 1
      %p189 = scmp.eq.s32.totalorder %s23, 7
      %p190 = scmp.ne.s32.totalorder %s185, %s187
      %p191 = scmp.eq.s32.totalorder %s23, 0
      %p192 = por %p190, %p191
      %p193 = scmp.ne.s32.totalorder %s185, %s187
      %p194 = scmp.eq.s32.totalorder %s28, 7
      %p195 = por %p193, %p194
      %p196 = scmp.ne.s32.totalorder %s187, %s188
      %p197 = scmp.eq.s32.totalorder %s28, 0
      %p198 = por %p196, %p197
      %p199 = scmp.ne.s32.totalorder %s187, %s188
      %p200 = scmp.eq.s32.totalorder %s29, 7
      %p201 = por %p199, %p200
      %p203 = scmp.ne.s32.totalorder %s188, %s202
      %p204 = scmp.eq.s32.totalorder %s29, 0
      %p205 = por %p203, %p204
      %s207 = sadd.s32 %s206, 1
      %p210 = scmp.eq.s32.totalorder %s23, 7
      %p211 = scmp.ne.s32.totalorder %s206, %s208
      %p212 = scmp.eq.s32.totalorder %s23, 0
      %p213 = por %p211, %p212
      %p214 = scmp.ne.s32.totalorder %s206, %s208
      %p215 = scmp.eq.s32.totalorder %s28, 7
      %p216 = por %p214, %p215
      %p217 = scmp.ne.s32.totalorder %s208, %s209
      %p218 = scmp.eq.s32.totalorder %s28, 0
      %p219 = por %p217, %p218
      %p220 = scmp.ne.s32.totalorder %s208, %s209
      %p221 = scmp.eq.s32.totalorder %s29, 7
      %p222 = por %p220, %p221
      %p224 = scmp.ne.s32.totalorder %s209, %s223
      %p225 = scmp.eq.s32.totalorder %s29, 0
      %p226 = por %p224, %p225
      %s227 = smul.u32 %s31, 2
      %s228 = sadd.s32 %s227, %s32
      %s229 = smul.u32 %s45, 2
      %s230 = sadd.s32 %s229, %s41
      %s231 = ssub.s32 %s228, %s230
      %p232 = scmp.eq.s32.totalorder %s231, 0
      %s234 = sadd.s32 %s233, 1
      %s235 = scalar_select %p232, %s233, %s234
      %p238 = pneg %p232
      %p239 = scmp.eq.s32.totalorder %s23, 7
      %p240 = por %p238, %p239
      %p241 = scmp.ne.s32.totalorder %s233, %s236
      %p242 = scmp.eq.s32.totalorder %s23, 0
      %p243 = por %p241, %p242
      %p244 = scmp.ne.s32.totalorder %s233, %s236
      %p245 = scmp.eq.s32.totalorder %s28, 7
      %p246 = por %p244, %p245
      %p247 = scmp.ne.s32.totalorder %s236, %s237
      %p248 = scmp.eq.s32.totalorder %s28, 0
      %p249 = por %p247, %p248
      %p250 = scmp.ne.s32.totalorder %s236, %s237
      %p251 = scmp.eq.s32.totalorder %s29, 7
      %p252 = por %p250, %p251
      %p254 = scmp.ne.s32.totalorder %s237, %s253
      %p255 = scmp.eq.s32.totalorder %s29, 0
      %p256 = por %p254, %p255
      %s257 = ssub.s32 %s30, %s49
      %s258 = ssub.s32 %s31, %s45
      %s259 = sor.u32 %s257, %s258
      %s260 = ssub.s32 %s32, %s41
      %s261 = sor.u32 %s259, %s260
      %p262 = scmp.eq.s32.totalorder %s261, 0
      %s264 = sadd.s32 %s263, 1
      %s265 = scalar_select %p262, %s263, %s264
      %p268 = pneg %p262
      %p269 = scmp.eq.s32.totalorder %s23, 7
      %p270 = por %p268, %p269
      %p271 = scmp.ne.s32.totalorder %s263, %s266
      %p272 = scmp.eq.s32.totalorder %s23, 0
      %p273 = por %p271, %p272
      %p274 = scmp.ne.s32.totalorder %s263, %s266
      %p275 = scmp.eq.s32.totalorder %s28, 7
      %p276 = por %p274, %p275
      %p277 = scmp.ne.s32.totalorder %s266, %s267
      %p278 = scmp.eq.s32.totalorder %s28, 0
      %p279 = por %p277, %p278
      %p280 = scmp.ne.s32.totalorder %s266, %s267
      %p281 = scmp.eq.s32.totalorder %s29, 7
      %p282 = por %p280, %p281
      %p284 = scmp.ne.s32.totalorder %s267, %s283
      %p285 = scmp.eq.s32.totalorder %s29, 0
      %p286 = por %p284, %p285
      %p287 = scmp.le.s32.totalorder 1, %s23
      %p288 = scmp.lt.s32.totalorder %s23, 9
      %p289 = pnand %p287, %p288
      %p290 = pneg %p289
      // Predicated region
      $region9: #{tpu_custom_call.1} parent=5 // pred_check
        _
      $region10: #{tpu_custom_call.1} parent=5 // pred_check_branch
        %292 = sbr.rel (%p289) target = $region12
      $region11: #{tpu_custom_call.1} parent=5 // pred_region
        %s293 = ssub.s32 %s23, 1
        // Predicated region
        $region13: #{tpu_custom_call.1} parent=11 // pred_check
          %p294 = pneg %p93
        $region14: #{tpu_custom_call.1} parent=11 // pred_check_branch
          %296 = sbr.rel (%p294) target = $region16
        $region15: #{tpu_custom_call.1} parent=11 // pred_region
          _
        $region16: #{tpu_custom_call.1} parent=11 // pred_fallthru
          _
        // Predicated region
        $region17: #{tpu_custom_call.1} parent=11 // pred_check
          %p297 = pneg %p114
        $region18: #{tpu_custom_call.1} parent=11 // pred_check_branch
          %299 = sbr.rel (%p297) target = $region20
        $region19: #{tpu_custom_call.1} parent=11 // pred_region
          _
        $region20: #{tpu_custom_call.1} parent=11 // pred_fallthru
          _
        // Predicated region
        $region21: #{tpu_custom_call.1} parent=11 // pred_check
          %p300 = pneg %p135
        $region22: #{tpu_custom_call.1} parent=11 // pred_check_branch
          %302 = sbr.rel (%p300) target = $region24
        $region23: #{tpu_custom_call.1} parent=11 // pred_region
          %s304 = ssub.s32 6144, 6144
          %305 = vsyncadd [#allocation6], %s304
          %s306 = sshll.u32 [#allocation5], 4
          %s307 = int_to_ptr.vmem [resolvable:$true] %s306
          %312 = dma.hbm_to_vmem [thread:$0]  %s3, 6144, %s307, [#allocation6], 384, 384, 24
        $region24: #{tpu_custom_call.1} parent=11 // pred_fallthru
          _
        // Predicated region
        $region25: #{tpu_custom_call.1} parent=11 // pred_check
          %p313 = pneg %p156
        $region26: #{tpu_custom_call.1} parent=11 // pred_check_branch
          %315 = sbr.rel (%p313) target = $region28
        $region27: #{tpu_custom_call.1} parent=11 // pred_region
          _
        $region28: #{tpu_custom_call.1} parent=11 // pred_fallthru
          _
        // Predicated region
        $region29: #{tpu_custom_call.1} parent=11 // pred_check
          %p316 = pneg %p177
        $region30: #{tpu_custom_call.1} parent=11 // pred_check_branch
          %318 = sbr.rel (%p316) target = $region32
        $region31: #{tpu_custom_call.1} parent=11 // pred_region
          %s320 = ssub.s32 512, 512
          %321 = vsyncadd [#allocation6], %s320
          %s322 = sshll.u32 [#allocation7], 4
          %s323 = int_to_ptr.vmem [resolvable:$true] %s322
          %328 = dma.hbm_to_vmem [thread:$0]  %s5, 512, %s323, [#allocation6], 128, 128, 8
        $region32: #{tpu_custom_call.1} parent=11 // pred_fallthru
          _
        // Predicated region
        $region33: #{tpu_custom_call.1} parent=11 // pred_check
          %p329 = pneg %p198
        $region34: #{tpu_custom_call.1} parent=11 // pred_check_branch
          %331 = sbr.rel (%p329) target = $region36
        $region35: #{tpu_custom_call.1} parent=11 // pred_region
          _
        $region36: #{tpu_custom_call.1} parent=11 // pred_fallthru
          _
        // Predicated region
        $region37: #{tpu_custom_call.1} parent=11 // pred_check
          %p332 = pneg %p219
        $region38: #{tpu_custom_call.1} parent=11 // pred_check_branch
          %334 = sbr.rel (%p332) target = $region40
        $region39: #{tpu_custom_call.1} parent=11 // pred_region
          %s336 = ssub.s32 4096, 4096
          %337 = vsyncadd [#allocation9], %s336
          %s338 = sshll.u32 [#allocation8], 4
          %s339 = int_to_ptr.vmem [resolvable:$true] %s338
          %344 = dma.hbm_to_vmem [thread:$0]  %s7, 4096, %s339, [#allocation9], 128, 128, 8
        $region40: #{tpu_custom_call.1} parent=11 // pred_fallthru
          _
      $region12: #{tpu_custom_call.1} parent=5 // pred_fallthru
        _
      %p345 = scmp.lt.s32.totalorder %s23, 8
      // Predicated region
      $region41: #{tpu_custom_call.1} parent=5 // pred_check
        %p346 = pneg %p345
      $region42: #{tpu_custom_call.1} parent=5 // pred_check_branch
        %348 = sbr.rel (%p346) target = $region44
      $region43: #{tpu_custom_call.1} parent=5 // pred_region
        // Predicated region
        $region45: #{tpu_custom_call.1} parent=43 // pred_check
          %p349 = pneg %p66
        $region46: #{tpu_custom_call.1} parent=43 // pred_check_branch
          %351 = sbr.rel (%p349) target = $region48
        $region47: #{tpu_custom_call.1} parent=43 // pred_region
          %s352 = sand.u32 %s23, 1
          %s353 = scalar_lea.sflag [#allocation3], %s352
          %s354 = sand.u32 %s56, 1
          %s355 = smul.addr %s354, 64
          %s356 = scalar_lea.vmem [#allocation2], %s355
          %s357 = smul.u32 8, %s31
          %s359 = ssub.s32 1024, 1024
          %360 = vsyncadd %s353, %s359
          %s361 = smul.addr %s357, 2
          %s362 = sadd.s32 %s32, %s361
          %s363 = smul.addr %s30, 32
          %s364 = sadd.s32 %s362, %s363
          %s365 = smul.addr %s364, 128
          %s366 = scalar_lea.hbm %s0, %s365
          %s367 = sshll.u32 %s356, 4
          %s368 = int_to_ptr.vmem [resolvable:$true] %s367
          %373 = dma.hbm_to_vmem [thread:$0]  %s366, 1024, %s368, %s353, 256, 128, 8
        $region48: #{tpu_custom_call.1} parent=43 // pred_fallthru
          _
        // Predicated region
        $region49: #{tpu_custom_call.1} parent=43 // pred_check
          %p374 = pneg %p243
        $region50: #{tpu_custom_call.1} parent=43 // pred_check_branch
          %376 = sbr.rel (%p374) target = $region52
        $region51: #{tpu_custom_call.1} parent=43 // pred_region
          %s377 = sand.u32 %s23, 1
          %s378 = scalar_lea.sflag [#allocation3], %s377
          %s379 = sand.u32 %s233, 1
          %s380 = smul.addr %s379, 64
          %s381 = scalar_lea.vmem [#allocation10], %s380
          %s382 = smul.u32 %s31, 2
          %s383 = sadd.s32 %s382, %s32
          %s385 = ssub.s32 1024, 1024
          %386 = vsyncadd %s378, %s385
          %s387 = smul.addr %s383, 8
          %s388 = smul.addr %s387, 128
          %s389 = scalar_lea.hbm %s8, %s388
          %s390 = sshll.u32 %s381, 4
          %s391 = int_to_ptr.vmem [resolvable:$true] %s390
          %396 = dma.hbm_to_vmem [thread:$0]  %s389, 1024, %s391, %s378, 128, 128, 8
        $region52: #{tpu_custom_call.1} parent=43 // pred_fallthru
          _
      $region44: #{tpu_custom_call.1} parent=5 // pred_fallthru
        _
      %p397 = scmp.le.s32.totalorder 1, %s23
      %p398 = scmp.lt.s32.totalorder %s23, 9
      %p399 = pnand %p397, %p398
      %p400 = pneg %p399
      // Predicated region
      $region53: #{tpu_custom_call.1} parent=5 // pred_check
        _
      $region54: #{tpu_custom_call.1} parent=5 // pred_check_branch
        %402 = sbr.rel (%p399) target = $region56
      $region55: #{tpu_custom_call.1} parent=5 // pred_region
        %s403 = ssub.s32 %s23, 1
        %s404 = sand.u32 %s28, 1
        %s405 = scalar_lea.sflag [#allocation3], %s404
        %s406 = sand.u32 %s59, 1
        %s407 = smul.addr %s406, 64
        %s408 = scalar_lea.vmem [#allocation2], %s407
        // Predicated region
        $region57: #{tpu_custom_call.1} parent=55 // pred_check
          %p409 = pneg %p72
        $region58: #{tpu_custom_call.1} parent=55 // pred_check_branch
          %411 = sbr.rel (%p409) target = $region60
        $region59: #{tpu_custom_call.1} parent=55 // pred_region
          %412 = dma.done %s405, 1024
        $region60: #{tpu_custom_call.1} parent=55 // pred_fallthru
          _
        // Predicated region
        $region61: #{tpu_custom_call.1} parent=55 // pred_check
          %p413 = pneg %p135
        $region62: #{tpu_custom_call.1} parent=55 // pred_check_branch
          %415 = sbr.rel (%p413) target = $region64
        $region63: #{tpu_custom_call.1} parent=55 // pred_region
          %416 = dma.done [#allocation6], 6144
        $region64: #{tpu_custom_call.1} parent=55 // pred_fallthru
          _
        // Predicated region
        $region65: #{tpu_custom_call.1} parent=55 // pred_check
          %p417 = pneg %p177
        $region66: #{tpu_custom_call.1} parent=55 // pred_check_branch
          %419 = sbr.rel (%p417) target = $region68
        $region67: #{tpu_custom_call.1} parent=55 // pred_region
          %420 = dma.done [#allocation6], 512
        $region68: #{tpu_custom_call.1} parent=55 // pred_fallthru
          _
        // Predicated region
        $region69: #{tpu_custom_call.1} parent=55 // pred_check
          %p421 = pneg %p219
        $region70: #{tpu_custom_call.1} parent=55 // pred_check_branch
          %423 = sbr.rel (%p421) target = $region72
        $region71: #{tpu_custom_call.1} parent=55 // pred_region
          %424 = dma.done [#allocation9], 4096
        $region72: #{tpu_custom_call.1} parent=55 // pred_fallthru
          _
        %s425 = sand.u32 %s28, 1
        %s426 = scalar_lea.sflag [#allocation3], %s425
        %s427 = sand.u32 %s236, 1
        %s428 = smul.addr %s427, 64
        %s429 = scalar_lea.vmem [#allocation10], %s428
        // Predicated region
        $region73: #{tpu_custom_call.1} parent=55 // pred_check
          %p430 = pneg %p249
        $region74: #{tpu_custom_call.1} parent=55 // pred_check_branch
          %432 = sbr.rel (%p430) target = $region76
        $region75: #{tpu_custom_call.1} parent=55 // pred_region
          %433 = dma.done %s426, 1024
        $region76: #{tpu_custom_call.1} parent=55 // pred_fallthru
          _
        %s434 = sand.u32 %s28, 1
        %s435 = scalar_lea.sflag [#allocation3], %s434
        %s436 = sand.u32 %s59, 1
        %s437 = smul.addr %s436, 64
        %s438 = scalar_lea.vmem [#allocation2], %s437
        %p439 = pneg %p72
        %p440 = pneg %p69
        %p441 = pneg %p93
        %p442 = pneg %p90
        %p443 = pneg %p114
        %p444 = pneg %p111
        %p445 = pneg %p135
        %p446 = pneg %p132
        %p447 = pneg %p156
        %p448 = pneg %p153
        %p449 = pneg %p177
        %p450 = pneg %p174
        %p451 = pneg %p198
        %p452 = pneg %p195
        %p453 = pneg %p219
        %p454 = pneg %p216
        %s455 = sand.u32 %s28, 1
        %s456 = scalar_lea.sflag [#allocation3], %s455
        %s457 = sand.u32 %s236, 1
        %s458 = smul.addr %s457, 64
        %s459 = scalar_lea.vmem [#allocation10], %s458
        %p460 = pneg %p249
        %p461 = pneg %p246
        %p462 = pneg %p279
        %p463 = pneg %p276
        %s464 = sand.u32 %s266, 1
        %s465 = scalar_lea.sflag [#allocation4], %s464
        %s466 = sand.u32 %s266, 1
        %s467 = smul.addr %s466, 64
        %s468 = scalar_lea.vmem [#allocation11], %s467
        %s469 = smul.u32 8, %s34
        %s470 = smul.u32 %s34, 2
        %s471 = sadd.s32 %s470, %s35
        %s472 = smul.u32 8, %s34
        %v473 = vld [vmem:[%s408] sm:$0xff]
        %v474 = vld [vmem:[%s408 + $0x8] sm:$0xff]
        %v475 = vld [vmem:[%s408 + $0x10] sm:$0xff]
        %v476 = vld [vmem:[%s408 + $0x18] sm:$0xff]
        %v477 = vld [vmem:[%s408 + $0x20] sm:$0xff]
        %v478 = vld [vmem:[%s408 + $0x28] sm:$0xff]
        %v479 = vld [vmem:[%s408 + $0x30] sm:$0xff]
        %v480 = vld [vmem:[%s408 + $0x38] sm:$0xff]
        %v481 = vld [vmem:[%s1] sm:$0x1]
        %v482 = vld [vmem:[%s2] sm:$0x1]
        %483 = vadd.xlane.f32.xlu0 %v473
        %v484 = vpop.xlane.xlu0 %483
        %485 = vadd.xlane.f32.xlu0 %v474
        %v486 = vpop.xlane.xlu0 %485
        %487 = vadd.xlane.f32.xlu0 %v475
        %v488 = vpop.xlane.xlu0 %487
        %489 = vadd.xlane.f32.xlu0 %v476
        %v490 = vpop.xlane.xlu0 %489
        %491 = vadd.xlane.f32.xlu0 %v477
        %v492 = vpop.xlane.xlu0 %491
        %493 = vadd.xlane.f32.xlu0 %v478
        %v494 = vpop.xlane.xlu0 %493
        %495 = vadd.xlane.f32.xlu0 %v479
        %v496 = vpop.xlane.xlu0 %495
        %497 = vadd.xlane.f32.xlu0 %v480
        %v498 = vpop.xlane.xlu0 %497
        %v499 = vmul.f32 %v484, 0.03125
        %v500 = vmul.f32 %v486, 0.03125
        %v501 = vmul.f32 %v488, 0.03125
        %v502 = vmul.f32 %v490, 0.03125
        %v503 = vmul.f32 %v492, 0.03125
        %v504 = vmul.f32 %v494, 0.03125
        %v505 = vmul.f32 %v496, 0.03125
        %v506 = vmul.f32 %v498, 0.03125
        %v507 = vsub.f32 %v473, %v499
        %v508 = vsub.f32 %v474, %v500
        %v509 = vsub.f32 %v475, %v501
        %v510 = vsub.f32 %v476, %v502
        %v511 = vsub.f32 %v477, %v503
        %v512 = vsub.f32 %v478, %v504
        %v513 = vsub.f32 %v479, %v505
        %v514 = vsub.f32 %v480, %v506
        %v515 = vlaneseq
        %v516 = vand.u32 %v515, 127
        %vm517 = vcmp.lt.s32.totalorder %v516, 32
        %v518 = vsel %vm517, 1, 0
        %vm519 = vcmp.eq.s32.totalorder %v518, 1
        %v520 = vsel %vm519, %v507, 0.0
        %v521 = vsel %vm519, %v508, 0.0
        %v522 = vsel %vm519, %v509, 0.0
        %v523 = vsel %vm519, %v510, 0.0
        %v524 = vsel %vm519, %v511, 0.0
        %v525 = vsel %vm519, %v512, 0.0
        %v526 = vsel %vm519, %v513, 0.0
        %v527 = vsel %vm519, %v514, 0.0
        %v528 = vmul.f32 %v520, %v520
        %v529 = vmul.f32 %v521, %v521
        %v530 = vmul.f32 %v522, %v522
        %v531 = vmul.f32 %v523, %v523
        %v532 = vmul.f32 %v524, %v524
        %v533 = vmul.f32 %v525, %v525
        %v534 = vmul.f32 %v526, %v526
        %v535 = vmul.f32 %v527, %v527
        %536 = vadd.xlane.f32.xlu0 %v528
        %v537 = vpop.xlane.xlu0 %536
        %538 = vadd.xlane.f32.xlu0 %v529
        %v539 = vpop.xlane.xlu0 %538
        %540 = vadd.xlane.f32.xlu0 %v530
        %v541 = vpop.xlane.xlu0 %540
        %542 = vadd.xlane.f32.xlu0 %v531
        %v543 = vpop.xlane.xlu0 %542
        %544 = vadd.xlane.f32.xlu0 %v532
        %v545 = vpop.xlane.xlu0 %544
        %546 = vadd.xlane.f32.xlu0 %v533
        %v547 = vpop.xlane.xlu0 %546
        %548 = vadd.xlane.f32.xlu0 %v534
        %v549 = vpop.xlane.xlu0 %548
        %550 = vadd.xlane.f32.xlu0 %v535
        %v551 = vpop.xlane.xlu0 %550
        %v552 = vmul.f32 %v537, 0.03125
        %v553 = vmul.f32 %v539, 0.03125
        %v554 = vmul.f32 %v541, 0.03125
        %v555 = vmul.f32 %v543, 0.03125
        %v556 = vmul.f32 %v545, 0.03125
        %v557 = vmul.f32 %v547, 0.03125
        %v558 = vmul.f32 %v549, 0.03125
        %v559 = vmul.f32 %v551, 0.03125
        %v560 = vadd.f32 %v552, 1e-05
        %v561 = vadd.f32 %v553, 1e-05
        %v562 = vadd.f32 %v554, 1e-05
        %v563 = vadd.f32 %v555, 1e-05
        %v564 = vadd.f32 %v556, 1e-05
        %v565 = vadd.f32 %v557, 1e-05
        %v566 = vadd.f32 %v558, 1e-05
        %v567 = vadd.f32 %v559, 1e-05
        %v568 = vrsqrt.pop %v560
        %v569 = vrsqrt.pop %v561
        %v570 = vrsqrt.pop %v562
        %v571 = vrsqrt.pop %v563
        %v572 = vrsqrt.pop %v564
        %v573 = vrsqrt.pop %v565
        %v574 = vrsqrt.pop %v566
        %v575 = vrsqrt.pop %v567
        %v576 = vmul.f32 %v520, %v568
        %v577 = vmul.f32 %v521, %v569
        %v578 = vmul.f32 %v522, %v570
        %v579 = vmul.f32 %v523, %v571
        %v580 = vmul.f32 %v524, %v572
        %v581 = vmul.f32 %v525, %v573
        %v582 = vmul.f32 %v526, %v574
        %v583 = vmul.f32 %v527, %v575
        %v585 = vlaneseq
        %v586 = vshrl.u32 %v585, 7
        %v587 = vsub.s32 0, %v586
        %v588 = vrot.slane %v481, %v587
        %v590 = vmul.f32 %v576, %v588
        %v591 = vmul.f32 %v577, %v588
        %v592 = vmul.f32 %v578, %v588
        %v593 = vmul.f32 %v579, %v588
        %v594 = vmul.f32 %v580, %v588
        %v595 = vmul.f32 %v581, %v588
        %v596 = vmul.f32 %v582, %v588
        %v597 = vmul.f32 %v583, %v588
        %v599 = vlaneseq
        %v600 = vshrl.u32 %v599, 7
        %v601 = vsub.s32 0, %v600
        %v602 = vrot.slane %v482, %v601
        %v604 = vadd.f32 %v590, %v602
        %v605 = vadd.f32 %v591, %v602
        %v606 = vadd.f32 %v592, %v602
        %v607 = vadd.f32 %v593, %v602
        %v608 = vadd.f32 %v594, %v602
        %v609 = vadd.f32 %v595, %v602
        %v610 = vadd.f32 %v596, %v602
        %v611 = vadd.f32 %v597, %v602
        %v612 = vld [vmem:[#allocation5] sm:$0xff]
        %v613 = vld [vmem:[#allocation5 + $0x8] sm:$0xff]
        %v614 = vld [vmem:[#allocation5 + $0x10] sm:$0xff]
        %v615 = vld [vmem:[#allocation5 + $0x18] sm:$0xff]
        %v616 = vld [vmem:[#allocation5 + $0x20] sm:$0xff]
        %v617 = vld [vmem:[#allocation5 + $0x28] sm:$0xff]
        %v618 = vld [vmem:[#allocation5 + $0x30] sm:$0xff]
        %v619 = vld [vmem:[#allocation5 + $0x38] sm:$0xff]
        %v620 = vld [vmem:[#allocation5 + $0x40] sm:$0xff]
        %v621 = vld [vmem:[#allocation5 + $0x48] sm:$0xff]
        %v622 = vld [vmem:[#allocation5 + $0x50] sm:$0xff]
        %v623 = vld [vmem:[#allocation5 + $0x58] sm:$0xff]
        %v624 = vld [vmem:[#allocation5 + $0x60] sm:$0xff]
        %v625 = vld [vmem:[#allocation5 + $0x68] sm:$0xff]
        %v626 = vld [vmem:[#allocation5 + $0x70] sm:$0xff]
        %v627 = vld [vmem:[#allocation5 + $0x78] sm:$0xff]
        %v628 = vld [vmem:[#allocation5 + $0x80] sm:$0xff]
        %v629 = vld [vmem:[#allocation5 + $0x88] sm:$0xff]
        %v630 = vld [vmem:[#allocation5 + $0x90] sm:$0xff]
        %v631 = vld [vmem:[#allocation5 + $0x98] sm:$0xff]
        %v632 = vld [vmem:[#allocation5 + $0xa0] sm:$0xff]
        %v633 = vld [vmem:[#allocation5 + $0xa8] sm:$0xff]
        %v634 = vld [vmem:[#allocation5 + $0xb0] sm:$0xff]
        %v635 = vld [vmem:[#allocation5 + $0xb8] sm:$0xff]
        %v636 = vld [vmem:[#allocation5 + $0xc0] sm:$0xff]
        %v637 = vld [vmem:[#allocation5 + $0xc8] sm:$0xff]
        %v638 = vld [vmem:[#allocation5 + $0xd0] sm:$0xff]
        %v639 = vld [vmem:[#allocation5 + $0xd8] sm:$0xff]
        %v640 = vld [vmem:[#allocation5 + $0xe0] sm:$0xff]
        %v641 = vld [vmem:[#allocation5 + $0xe8] sm:$0xff]
        %v642 = vld [vmem:[#allocation5 + $0xf0] sm:$0xff]
        %v643 = vld [vmem:[#allocation5 + $0xf8] sm:$0xff]
        %v644 = vld [vmem:[#allocation5 + $0x100] sm:$0xff]
        %v645 = vld [vmem:[#allocation5 + $0x108] sm:$0xff]
        %v646 = vld [vmem:[#allocation5 + $0x110] sm:$0xff]
        %v647 = vld [vmem:[#allocation5 + $0x118] sm:$0xff]
        %v648 = vld [vmem:[#allocation5 + $0x120] sm:$0xff]
        %v649 = vld [vmem:[#allocation5 + $0x128] sm:$0xff]
        %v650 = vld [vmem:[#allocation5 + $0x130] sm:$0xff]
        %v651 = vld [vmem:[#allocation5 + $0x138] sm:$0xff]
        %v652 = vld [vmem:[#allocation5 + $0x140] sm:$0xff]
        %v653 = vld [vmem:[#allocation5 + $0x148] sm:$0xff]
        %v654 = vld [vmem:[#allocation5 + $0x150] sm:$0xff]
        %v655 = vld [vmem:[#allocation5 + $0x158] sm:$0xff]
        %v656 = vld [vmem:[#allocation5 + $0x160] sm:$0xff]
        %v657 = vld [vmem:[#allocation5 + $0x168] sm:$0xff]
        %v658 = vld [vmem:[#allocation5 + $0x170] sm:$0xff]
        %v659 = vld [vmem:[#allocation5 + $0x178] sm:$0xff]
        %v660 = vld [vmem:[%s4] sm:$0x7]
        %v662 = vlaneseq
        %v663 = vshrl.u32 %v662, 7
        %v664 = vsub.s32 0, %v663
        %v665 = vrot.slane %v660, %v664
        %v666 = vlaneseq
        %v667 = vshrl.u32 %v666, 7
        %v668 = vsub.s32 1, %v667
        %v669 = vrot.slane %v660, %v668
        %v670 = vlaneseq
        %v671 = vshrl.u32 %v670, 7
        %v672 = vsub.s32 2, %v671
        %v673 = vrot.slane %v660, %v672
        %677 = vmatprep.subr.mxu0 %v658
        %678 = vmatpush1.msra.mxu0 %v657
        %679 = vmatprep.subr.mxu0 %v655
        %680 = vmatpush1.msra.mxu0 %v654
        %681 = vmatprep.subr.mxu0 %v652
        %682 = vmatpush1.msra.mxu0 %v651
        %683 = vmatprep.subr.mxu0 %v649
        %684 = vmatpush1.msra.mxu0 %v648
        %685 = vmatprep.subr.mxu0 %v646
        %686 = vmatpush1.msra.mxu0 %v645
        %687 = vmatprep.subr.mxu0 %v643
        %688 = vmatpush1.msra.mxu0 %v642
        %689 = vmatprep.subr.mxu0 %v640
        %690 = vmatpush1.msra.mxu0 %v639
        %691 = vmatprep.subr.mxu0 %v637
        %692 = vmatpush1.msra.mxu0 %v636
        %693 = vmatprep.subr.mxu0 %v634
        %694 = vmatpush1.msra.mxu0 %v633
        %695 = vmatprep.subr.mxu0 %v631
        %696 = vmatpush1.msra.mxu0 %v630
        %697 = vmatprep.subr.mxu0 %v628
        %698 = vmatpush1.msra.mxu0 %v627
        %699 = vmatprep.subr.mxu0 %v625
        %700 = vmatpush1.msra.mxu0 %v624
        %701 = vmatprep.subr.mxu0 %v622
        %702 = vmatpush1.msra.mxu0 %v621
        %703 = vmatprep.subr.mxu0 %v619
        %704 = vmatpush1.msra.mxu0 %v618
        %705 = vmatprep.subr.mxu0 %v616
        %706 = vmatpush1.msra.mxu0 %v615
        %707 = vmatprep.subr.mxu0 %v613
        %708 = vmatpush1.msra.mxu0 %v612
        %709 = vmatprep.subr.mxu0 0.0
        %710 = vmatpush2.msra.mxu0 0.0
        %711 = vmatprep.subr.mxu0 0.0
        %712 = vmatpush2.msra.mxu0 0.0
        %713 = vmatprep.subr.mxu0 0.0
        %714 = vmatpush2.msra.mxu0 0.0
        %715 = vmatprep.subr.mxu0 0.0
        %716 = vmatpush2.msra.mxu0 0.0
        %717 = vmatprep.subr.mxu0 0.0
        %718 = vmatpush2.msra.mxu0 0.0
        %719 = vmatprep.subr.mxu0 0.0
        %720 = vmatpush2.msra.mxu0 0.0
        %721 = vmatprep.subr.mxu0 0.0
        %722 = vmatpush2.msra.mxu0 0.0
        %723 = vmatprep.subr.mxu0 0.0
        %724 = vmatpush2.msra.mxu0 0.0
        %725 = vmatprep.subr.mxu0 0.0
        %726 = vmatpush2.msra.mxu0 0.0
        %727 = vmatprep.subr.mxu0 0.0
        %728 = vmatpush2.msra.mxu0 0.0
        %729 = vmatprep.subr.mxu0 0.0
        %730 = vmatpush2.msra.mxu0 0.0
        %731 = vmatprep.subr.mxu0 0.0
        %732 = vmatpush2.msra.mxu0 0.0
        %733 = vmatprep.subr.mxu0 0.0
        %734 = vmatpush2.msra.mxu0 0.0
        %735 = vmatprep.subr.mxu0 0.0
        %736 = vmatpush2.msra.mxu0 0.0
        %737 = vmatprep.subr.mxu0 0.0
        %738 = vmatpush2.msra.mxu0 0.0
        %739 = vmatprep.subr.mxu0 0.0
        %740 = vmatpush2.msra.mxu0 0.0
        %741 = vmatprep.mubr.f32.mxu0 0.0
        %742 = vmatmul.mubr.f32.gmra.mxu0 %v604
        %v743 = vpop.f32.mrf.mxu0
        %v744 = vadd.f32 %v665, %v743
        %v745 = vpop.f32.mrf.mxu0
        %v746 = vadd.f32 %v669, %v745
        %747 = vmatprep.mubr.f32.mxu0 0.0
        %748 = vmatmul.mubr.f32.gmra.mxu0 %v605
        %v749 = vpop.f32.mrf.mxu0
        %v750 = vadd.f32 %v665, %v749
        %v751 = vpop.f32.mrf.mxu0
        %v752 = vadd.f32 %v669, %v751
        %753 = vmatprep.mubr.f32.mxu0 0.0
        %754 = vmatmul.mubr.f32.gmra.mxu0 %v606
        %v755 = vpop.f32.mrf.mxu0
        %v756 = vadd.f32 %v665, %v755
        %v757 = vpop.f32.mrf.mxu0
        %v758 = vadd.f32 %v669, %v757
        %759 = vmatprep.mubr.f32.mxu0 0.0
        %760 = vmatmul.mubr.f32.gmra.mxu0 %v607
        %v761 = vpop.f32.mrf.mxu0
        %v762 = vadd.f32 %v665, %v761
        %v763 = vpop.f32.mrf.mxu0
        %v764 = vadd.f32 %v669, %v763
        %765 = vmatprep.mubr.f32.mxu0 0.0
        %766 = vmatmul.mubr.f32.gmra.mxu0 %v608
        %v767 = vpop.f32.mrf.mxu0
        %v768 = vadd.f32 %v665, %v767
        %v769 = vpop.f32.mrf.mxu0
        %v770 = vadd.f32 %v669, %v769
        %771 = vmatprep.mubr.f32.mxu0 0.0
        %772 = vmatmul.mubr.f32.gmra.mxu0 %v609
        %v773 = vpop.f32.mrf.mxu0
        %v774 = vadd.f32 %v665, %v773
        %v775 = vpop.f32.mrf.mxu0
        %v776 = vadd.f32 %v669, %v775
        %777 = vmatprep.mubr.f32.mxu0 0.0
        %778 = vmatmul.mubr.f32.gmra.mxu0 %v610
        %v779 = vpop.f32.mrf.mxu0
        %v780 = vadd.f32 %v665, %v779
        %v781 = vpop.f32.mrf.mxu0
        %v782 = vadd.f32 %v669, %v781
        %783 = vmatprep.mubr.f32.mxu0 0.0
        %784 = vmatmul.mubr.f32.gmra.mxu0 %v611
        %v785 = vpop.f32.mrf.mxu0
        %v786 = vadd.f32 %v665, %v785
        %v787 = vpop.f32.mrf.mxu0
        %v788 = vadd.f32 %v669, %v787
        %789 = vdwg.mxu0
        %790 = vmatprep.subr.mxu0 0.0
        %791 = vmatpush1.msra.mxu0 %v659
        %792 = vmatprep.subr.mxu0 0.0
        %793 = vmatpush1.msra.mxu0 %v656
        %794 = vmatprep.subr.mxu0 0.0
        %795 = vmatpush1.msra.mxu0 %v653
        %796 = vmatprep.subr.mxu0 0.0
        %797 = vmatpush1.msra.mxu0 %v650
        %798 = vmatprep.subr.mxu0 0.0
        %799 = vmatpush1.msra.mxu0 %v647
        %800 = vmatprep.subr.mxu0 0.0
        %801 = vmatpush1.msra.mxu0 %v644
        %802 = vmatprep.subr.mxu0 0.0
        %803 = vmatpush1.msra.mxu0 %v641
        %804 = vmatprep.subr.mxu0 0.0
        %805 = vmatpush1.msra.mxu0 %v638
        %806 = vmatprep.subr.mxu0 0.0
        %807 = vmatpush1.msra.mxu0 %v635
        %808 = vmatprep.subr.mxu0 0.0
        %809 = vmatpush1.msra.mxu0 %v632
        %810 = vmatprep.subr.mxu0 0.0
        %811 = vmatpush1.msra.mxu0 %v629
        %812 = vmatprep.subr.mxu0 0.0
        %813 = vmatpush1.msra.mxu0 %v626
        %814 = vmatprep.subr.mxu0 0.0
        %815 = vmatpush1.msra.mxu0 %v623
        %816 = vmatprep.subr.mxu0 0.0
        %817 = vmatpush1.msra.mxu0 %v620
        %818 = vmatprep.subr.mxu0 0.0
        %819 = vmatpush1.msra.mxu0 %v617
        %820 = vmatprep.subr.mxu0 0.0
        %821 = vmatpush1.msra.mxu0 %v614
        %822 = vmatprep.subr.mxu0 0.0
        %823 = vmatpush2.msra.mxu0 0.0
        %824 = vmatprep.subr.mxu0 0.0
        %825 = vmatpush2.msra.mxu0 0.0
        %826 = vmatprep.subr.mxu0 0.0
        %827 = vmatpush2.msra.mxu0 0.0
        %828 = vmatprep.subr.mxu0 0.0
        %829 = vmatpush2.msra.mxu0 0.0
        %830 = vmatprep.subr.mxu0 0.0
        %831 = vmatpush2.msra.mxu0 0.0
        %832 = vmatprep.subr.mxu0 0.0
        %833 = vmatpush2.msra.mxu0 0.0
        %834 = vmatprep.subr.mxu0 0.0
        %835 = vmatpush2.msra.mxu0 0.0
        %836 = vmatprep.subr.mxu0 0.0
        %837 = vmatpush2.msra.mxu0 0.0
        %838 = vmatprep.subr.mxu0 0.0
        %839 = vmatpush2.msra.mxu0 0.0
        %840 = vmatprep.subr.mxu0 0.0
        %841 = vmatpush2.msra.mxu0 0.0
        %842 = vmatprep.subr.mxu0 0.0
        %843 = vmatpush2.msra.mxu0 0.0
        %844 = vmatprep.subr.mxu0 0.0
        %845 = vmatpush2.msra.mxu0 0.0
        %846 = vmatprep.subr.mxu0 0.0
        %847 = vmatpush2.msra.mxu0 0.0
        %848 = vmatprep.subr.mxu0 0.0
        %849 = vmatpush2.msra.mxu0 0.0
        %850 = vmatprep.subr.mxu0 0.0
        %851 = vmatpush2.msra.mxu0 0.0
        %852 = vmatprep.subr.mxu0 0.0
        %853 = vmatpush2.msra.mxu0 0.0
        %854 = vmatprep.mubr.f32.mxu0 0.0
        %855 = vmatmul.mubr.f32.gmra.mxu0 %v604
        %v856 = vpop.f32.mrf.mxu0
        %v857 = vadd.f32 %v673, %v856
        %v858 = vpop.f32.mrf.mxu0
        %859 = vmatprep.mubr.f32.mxu0 0.0
        %860 = vmatmul.mubr.f32.gmra.mxu0 %v605
        %v861 = vpop.f32.mrf.mxu0
        %v862 = vadd.f32 %v673, %v861
        %v863 = vpop.f32.mrf.mxu0
        %864 = vmatprep.mubr.f32.mxu0 0.0
        %865 = vmatmul.mubr.f32.gmra.mxu0 %v606
        %v866 = vpop.f32.mrf.mxu0
        %v867 = vadd.f32 %v673, %v866
        %v868 = vpop.f32.mrf.mxu0
        %869 = vmatprep.mubr.f32.mxu0 0.0
        %870 = vmatmul.mubr.f32.gmra.mxu0 %v607
        %v871 = vpop.f32.mrf.mxu0
        %v872 = vadd.f32 %v673, %v871
        %v873 = vpop.f32.mrf.mxu0
        %874 = vmatprep.mubr.f32.mxu0 0.0
        %875 = vmatmul.mubr.f32.gmra.mxu0 %v608
        %v876 = vpop.f32.mrf.mxu0
        %v877 = vadd.f32 %v673, %v876
        %v878 = vpop.f32.mrf.mxu0
        %879 = vmatprep.mubr.f32.mxu0 0.0
        %880 = vmatmul.mubr.f32.gmra.mxu0 %v609
        %v881 = vpop.f32.mrf.mxu0
        %v882 = vadd.f32 %v673, %v881
        %v883 = vpop.f32.mrf.mxu0
        %884 = vmatprep.mubr.f32.mxu0 0.0
        %885 = vmatmul.mubr.f32.gmra.mxu0 %v610
        %v886 = vpop.f32.mrf.mxu0
        %v887 = vadd.f32 %v673, %v886
        %v888 = vpop.f32.mrf.mxu0
        %889 = vmatprep.mubr.f32.mxu0 0.0
        %890 = vmatmul.mubr.f32.gmra.mxu0 %v611
        %v891 = vpop.f32.mrf.mxu0
        %v892 = vadd.f32 %v673, %v891
        %v893 = vpop.f32.mrf.mxu0
        %894 = vdwg.mxu0
        %903 = vrot.lane.b32.xlu0 %v744, 120
        %v904 = vpop.permute.xlu0 %903
        %905 = vrot.lane.b32.xlu0 %v750, 120
        %v906 = vpop.permute.xlu0 %905
        %907 = vrot.lane.b32.xlu0 %v756, 120
        %v908 = vpop.permute.xlu0 %907
        %909 = vrot.lane.b32.xlu0 %v762, 120
        %v910 = vpop.permute.xlu0 %909
        %911 = vrot.lane.b32.xlu0 %v768, 120
        %v912 = vpop.permute.xlu0 %911
        %913 = vrot.lane.b32.xlu0 %v774, 120
        %v914 = vpop.permute.xlu0 %913
        %915 = vrot.lane.b32.xlu0 %v780, 120
        %v916 = vpop.permute.xlu0 %915
        %917 = vrot.lane.b32.xlu0 %v786, 120
        %v918 = vpop.permute.xlu0 %917
        %919 = vrot.lane.b32.xlu0 %v744, 112
        %v920 = vpop.permute.xlu0 %919
        %921 = vrot.lane.b32.xlu0 %v750, 112
        %v922 = vpop.permute.xlu0 %921
        %923 = vrot.lane.b32.xlu0 %v756, 112
        %v924 = vpop.permute.xlu0 %923
        %925 = vrot.lane.b32.xlu0 %v762, 112
        %v926 = vpop.permute.xlu0 %925
        %927 = vrot.lane.b32.xlu0 %v768, 112
        %v928 = vpop.permute.xlu0 %927
        %929 = vrot.lane.b32.xlu0 %v774, 112
        %v930 = vpop.permute.xlu0 %929
        %931 = vrot.lane.b32.xlu0 %v780, 112
        %v932 = vpop.permute.xlu0 %931
        %933 = vrot.lane.b32.xlu0 %v786, 112
        %v934 = vpop.permute.xlu0 %933
        %935 = vrot.lane.b32.xlu0 %v744, 104
        %v936 = vpop.permute.xlu0 %935
        %937 = vrot.lane.b32.xlu0 %v750, 104
        %v938 = vpop.permute.xlu0 %937
        %939 = vrot.lane.b32.xlu0 %v756, 104
        %v940 = vpop.permute.xlu0 %939
        %941 = vrot.lane.b32.xlu0 %v762, 104
        %v942 = vpop.permute.xlu0 %941
        %943 = vrot.lane.b32.xlu0 %v768, 104
        %v944 = vpop.permute.xlu0 %943
        %945 = vrot.lane.b32.xlu0 %v774, 104
        %v946 = vpop.permute.xlu0 %945
        %947 = vrot.lane.b32.xlu0 %v780, 104
        %v948 = vpop.permute.xlu0 %947
        %949 = vrot.lane.b32.xlu0 %v786, 104
        %v950 = vpop.permute.xlu0 %949
        %959 = vrot.lane.b32.xlu0 %v746, 120
        %v960 = vpop.permute.xlu0 %959
        %961 = vrot.lane.b32.xlu0 %v752, 120
        %v962 = vpop.permute.xlu0 %961
        %963 = vrot.lane.b32.xlu0 %v758, 120
        %v964 = vpop.permute.xlu0 %963
        %965 = vrot.lane.b32.xlu0 %v764, 120
        %v966 = vpop.permute.xlu0 %965
        %967 = vrot.lane.b32.xlu0 %v770, 120
        %v968 = vpop.permute.xlu0 %967
        %969 = vrot.lane.b32.xlu0 %v776, 120
        %v970 = vpop.permute.xlu0 %969
        %971 = vrot.lane.b32.xlu0 %v782, 120
        %v972 = vpop.permute.xlu0 %971
        %973 = vrot.lane.b32.xlu0 %v788, 120
        %v974 = vpop.permute.xlu0 %973
        %975 = vrot.lane.b32.xlu0 %v746, 112
        %v976 = vpop.permute.xlu0 %975
        %977 = vrot.lane.b32.xlu0 %v752, 112
        %v978 = vpop.permute.xlu0 %977
        %979 = vrot.lane.b32.xlu0 %v758, 112
        %v980 = vpop.permute.xlu0 %979
        %981 = vrot.lane.b32.xlu0 %v764, 112
        %v982 = vpop.permute.xlu0 %981
        %983 = vrot.lane.b32.xlu0 %v770, 112
        %v984 = vpop.permute.xlu0 %983
        %985 = vrot.lane.b32.xlu0 %v776, 112
        %v986 = vpop.permute.xlu0 %985
        %987 = vrot.lane.b32.xlu0 %v782, 112
        %v988 = vpop.permute.xlu0 %987
        %989 = vrot.lane.b32.xlu0 %v788, 112
        %v990 = vpop.permute.xlu0 %989
        %991 = vrot.lane.b32.xlu0 %v746, 104
        %v992 = vpop.permute.xlu0 %991
        %993 = vrot.lane.b32.xlu0 %v752, 104
        %v994 = vpop.permute.xlu0 %993
        %995 = vrot.lane.b32.xlu0 %v758, 104
        %v996 = vpop.permute.xlu0 %995
        %997 = vrot.lane.b32.xlu0 %v764, 104
        %v998 = vpop.permute.xlu0 %997
        %999 = vrot.lane.b32.xlu0 %v770, 104
        %v1000 = vpop.permute.xlu0 %999
        %1001 = vrot.lane.b32.xlu0 %v776, 104
        %v1002 = vpop.permute.xlu0 %1001
        %1003 = vrot.lane.b32.xlu0 %v782, 104
        %v1004 = vpop.permute.xlu0 %1003
        %1005 = vrot.lane.b32.xlu0 %v788, 104
        %v1006 = vpop.permute.xlu0 %1005
        %1015 = vrot.lane.b32.xlu0 %v857, 120
        %v1016 = vpop.permute.xlu0 %1015
        %1017 = vrot.lane.b32.xlu0 %v862, 120
        %v1018 = vpop.permute.xlu0 %1017
        %1019 = vrot.lane.b32.xlu0 %v867, 120
        %v1020 = vpop.permute.xlu0 %1019
        %1021 = vrot.lane.b32.xlu0 %v872, 120
        %v1022 = vpop.permute.xlu0 %1021
        %1023 = vrot.lane.b32.xlu0 %v877, 120
        %v1024 = vpop.permute.xlu0 %1023
        %1025 = vrot.lane.b32.xlu0 %v882, 120
        %v1026 = vpop.permute.xlu0 %1025
        %1027 = vrot.lane.b32.xlu0 %v887, 120
        %v1028 = vpop.permute.xlu0 %1027
        %1029 = vrot.lane.b32.xlu0 %v892, 120
        %v1030 = vpop.permute.xlu0 %1029
        %1039 = vrot.lane.b32.xlu0 %v857, 112
        %v1040 = vpop.permute.xlu0 %1039
        %1041 = vrot.lane.b32.xlu0 %v862, 112
        %v1042 = vpop.permute.xlu0 %1041
        %1043 = vrot.lane.b32.xlu0 %v867, 112
        %v1044 = vpop.permute.xlu0 %1043
        %1045 = vrot.lane.b32.xlu0 %v872, 112
        %v1046 = vpop.permute.xlu0 %1045
        %1047 = vrot.lane.b32.xlu0 %v877, 112
        %v1048 = vpop.permute.xlu0 %1047
        %1049 = vrot.lane.b32.xlu0 %v882, 112
        %v1050 = vpop.permute.xlu0 %1049
        %1051 = vrot.lane.b32.xlu0 %v887, 112
        %v1052 = vpop.permute.xlu0 %1051
        %1053 = vrot.lane.b32.xlu0 %v892, 112
        %v1054 = vpop.permute.xlu0 %1053
        %1063 = vrot.lane.b32.xlu0 %v857, 104
        %v1064 = vpop.permute.xlu0 %1063
        %1065 = vrot.lane.b32.xlu0 %v862, 104
        %v1066 = vpop.permute.xlu0 %1065
        %1067 = vrot.lane.b32.xlu0 %v867, 104
        %v1068 = vpop.permute.xlu0 %1067
        %1069 = vrot.lane.b32.xlu0 %v872, 104
        %v1070 = vpop.permute.xlu0 %1069
        %1071 = vrot.lane.b32.xlu0 %v877, 104
        %v1072 = vpop.permute.xlu0 %1071
        %1073 = vrot.lane.b32.xlu0 %v882, 104
        %v1074 = vpop.permute.xlu0 %1073
        %1075 = vrot.lane.b32.xlu0 %v887, 104
        %v1076 = vpop.permute.xlu0 %1075
        %1077 = vrot.lane.b32.xlu0 %v892, 104
        %v1078 = vpop.permute.xlu0 %1077
        %vm1087 = vcmask 64512
        %v1088 = vsel %vm1087, %v744, 0
        %v1090 = vsel %vm1087, %v750, 0
        %v1092 = vsel %vm1087, %v756, 0
        %v1094 = vsel %vm1087, %v762, 0
        %v1096 = vsel %vm1087, %v768, 0
        %v1098 = vsel %vm1087, %v774, 0
        %v1100 = vsel %vm1087, %v780, 0
        %v1102 = vsel %vm1087, %v786, 0
        %v1104 = vsel %vm1087, %v746, 0
        %v1106 = vsel %vm1087, %v752, 0
        %v1108 = vsel %vm1087, %v758, 0
        %v1110 = vsel %vm1087, %v764, 0
        %v1112 = vsel %vm1087, %v770, 0
        %v1114 = vsel %vm1087, %v776, 0
        %v1116 = vsel %vm1087, %v782, 0
        %v1118 = vsel %vm1087, %v788, 0
        %1120 = vmatprep.subr.mxu0 0.0
        %1121 = vmatpush1.xpose.msra.mxu0 0.0
        %1122 = vmatprep.subr.mxu0 0.0
        %1123 = vmatpush1.xpose.msra.mxu0 0.0
        %1124 = vmatprep.subr.mxu0 0.0
        %1125 = vmatpush1.xpose.msra.mxu0 0.0
        %1126 = vmatprep.subr.mxu0 0.0
        %1127 = vmatpush1.xpose.msra.mxu0 0.0
        %1128 = vmatprep.subr.mxu0 0.0
        %1129 = vmatpush1.xpose.msra.mxu0 0.0
        %1130 = vmatprep.subr.mxu0 0.0
        %1131 = vmatpush1.xpose.msra.mxu0 0.0
        %1132 = vmatprep.subr.mxu0 0.0
        %1133 = vmatpush1.xpose.msra.mxu0 0.0
        %1134 = vmatprep.subr.mxu0 0.0
        %1135 = vmatpush1.xpose.msra.mxu0 0.0
        %1136 = vmatprep.subr.mxu0 0.0
        %1137 = vmatpush1.xpose.msra.mxu0 %v1118
        %1138 = vmatprep.subr.mxu0 0.0
        %1139 = vmatpush1.xpose.msra.mxu0 %v1116
        %1140 = vmatprep.subr.mxu0 0.0
        %1141 = vmatpush1.xpose.msra.mxu0 %v1114
        %1142 = vmatprep.subr.mxu0 0.0
        %1143 = vmatpush1.xpose.msra.mxu0 %v1112
        %1144 = vmatprep.subr.mxu0 0.0
        %1145 = vmatpush1.xpose.msra.mxu0 %v1110
        %1146 = vmatprep.subr.mxu0 0.0
        %1147 = vmatpush1.xpose.msra.mxu0 %v1108
        %1148 = vmatprep.subr.mxu0 0.0
        %1149 = vmatpush1.xpose.msra.mxu0 %v1106
        %1150 = vmatprep.subr.mxu0 0.0
        %1151 = vmatpush1.xpose.msra.mxu0 %v1104
        %1152 = vmatprep.subr.mxu0 0.0
        %1153 = vmatpush2.xpose.msra.mxu0 0.0
        %1154 = vmatprep.subr.mxu0 0.0
        %1155 = vmatpush2.xpose.msra.mxu0 0.0
        %1156 = vmatprep.subr.mxu0 0.0
        %1157 = vmatpush2.xpose.msra.mxu0 0.0
        %1158 = vmatprep.subr.mxu0 0.0
        %1159 = vmatpush2.xpose.msra.mxu0 0.0
        %1160 = vmatprep.subr.mxu0 0.0
        %1161 = vmatpush2.xpose.msra.mxu0 0.0
        %1162 = vmatprep.subr.mxu0 0.0
        %1163 = vmatpush2.xpose.msra.mxu0 0.0
        %1164 = vmatprep.subr.mxu0 0.0
        %1165 = vmatpush2.xpose.msra.mxu0 0.0
        %1166 = vmatprep.subr.mxu0 0.0
        %1167 = vmatpush2.xpose.msra.mxu0 0.0
        %1168 = vmatprep.subr.mxu0 0.0
        %1169 = vmatpush2.xpose.msra.mxu0 0.0
        %1170 = vmatprep.subr.mxu0 0.0
        %1171 = vmatpush2.xpose.msra.mxu0 0.0
        %1172 = vmatprep.subr.mxu0 0.0
        %1173 = vmatpush2.xpose.msra.mxu0 0.0
        %1174 = vmatprep.subr.mxu0 0.0
        %1175 = vmatpush2.xpose.msra.mxu0 0.0
        %1176 = vmatprep.subr.mxu0 0.0
        %1177 = vmatpush2.xpose.msra.mxu0 0.0
        %1178 = vmatprep.subr.mxu0 0.0
        %1179 = vmatpush2.xpose.msra.mxu0 0.0
        %1180 = vmatprep.subr.mxu0 0.0
        %1181 = vmatpush2.xpose.msra.mxu0 0.0
        %1182 = vmatprep.subr.mxu0 0.0
        %1183 = vmatpush2.xpose.msra.mxu0 0.0
        %1184 = vmatprep.mubr.f32.mxu0 0.0
        %1185 = vmatmul.mubr.f32.gmra.mxu0 %v1088
        %v1186 = vpop.f32.mrf.mxu0
        %v1187 = vadd.f32 0.0, %v1186
        %v1188 = vpop.f32.mrf.mxu0
        %1189 = vmatprep.mubr.f32.mxu0 0.0
        %1190 = vmatmul.mubr.f32.gmra.mxu0 %v1090
        %v1191 = vpop.f32.mrf.mxu0
        %v1192 = vadd.f32 0.0, %v1191
        %v1193 = vpop.f32.mrf.mxu0
        %1194 = vmatprep.mubr.f32.mxu0 0.0
        %1195 = vmatmul.mubr.f32.gmra.mxu0 %v1092
        %v1196 = vpop.f32.mrf.mxu0
        %v1197 = vadd.f32 0.0, %v1196
        %v1198 = vpop.f32.mrf.mxu0
        %1199 = vmatprep.mubr.f32.mxu0 0.0
        %1200 = vmatmul.mubr.f32.gmra.mxu0 %v1094
        %v1201 = vpop.f32.mrf.mxu0
        %v1202 = vadd.f32 0.0, %v1201
        %v1203 = vpop.f32.mrf.mxu0
        %1204 = vmatprep.mubr.f32.mxu0 0.0
        %1205 = vmatmul.mubr.f32.gmra.mxu0 %v1096
        %v1206 = vpop.f32.mrf.mxu0
        %v1207 = vadd.f32 0.0, %v1206
        %v1208 = vpop.f32.mrf.mxu0
        %1209 = vmatprep.mubr.f32.mxu0 0.0
        %1210 = vmatmul.mubr.f32.gmra.mxu0 %v1098
        %v1211 = vpop.f32.mrf.mxu0
        %v1212 = vadd.f32 0.0, %v1211
        %v1213 = vpop.f32.mrf.mxu0
        %1214 = vmatprep.mubr.f32.mxu0 0.0
        %1215 = vmatmul.mubr.f32.gmra.mxu0 %v1100
        %v1216 = vpop.f32.mrf.mxu0
        %v1217 = vadd.f32 0.0, %v1216
        %v1218 = vpop.f32.mrf.mxu0
        %1219 = vmatprep.mubr.f32.mxu0 0.0
        %1220 = vmatmul.mubr.f32.gmra.mxu0 %v1102
        %v1221 = vpop.f32.mrf.mxu0
        %v1222 = vadd.f32 0.0, %v1221
        %v1223 = vpop.f32.mrf.mxu0
        %1224 = vdwg.mxu0
        %v1225 = vsel %vm1087, %v904, 0
        %v1227 = vsel %vm1087, %v906, 0
        %v1229 = vsel %vm1087, %v908, 0
        %v1231 = vsel %vm1087, %v910, 0
        %v1233 = vsel %vm1087, %v912, 0
        %v1235 = vsel %vm1087, %v914, 0
        %v1237 = vsel %vm1087, %v916, 0
        %v1239 = vsel %vm1087, %v918, 0
        %v1241 = vsel %vm1087, %v960, 0
        %v1243 = vsel %vm1087, %v962, 0
        %v1245 = vsel %vm1087, %v964, 0
        %v1247 = vsel %vm1087, %v966, 0
        %v1249 = vsel %vm1087, %v968, 0
        %v1251 = vsel %vm1087, %v970, 0
        %v1253 = vsel %vm1087, %v972, 0
        %v1255 = vsel %vm1087, %v974, 0
        %1257 = vmatprep.subr.mxu0 0.0
        %1258 = vmatpush1.xpose.msra.mxu0 0.0
        %1259 = vmatprep.subr.mxu0 0.0
        %1260 = vmatpush1.xpose.msra.mxu0 0.0
        %1261 = vmatprep.subr.mxu0 0.0
        %1262 = vmatpush1.xpose.msra.mxu0 0.0
        %1263 = vmatprep.subr.mxu0 0.0
        %1264 = vmatpush1.xpose.msra.mxu0 0.0
        %1265 = vmatprep.subr.mxu0 0.0
        %1266 = vmatpush1.xpose.msra.mxu0 0.0
        %1267 = vmatprep.subr.mxu0 0.0
        %1268 = vmatpush1.xpose.msra.mxu0 0.0
        %1269 = vmatprep.subr.mxu0 0.0
        %1270 = vmatpush1.xpose.msra.mxu0 0.0
        %1271 = vmatprep.subr.mxu0 0.0
        %1272 = vmatpush1.xpose.msra.mxu0 0.0
        %1273 = vmatprep.subr.mxu0 0.0
        %1274 = vmatpush1.xpose.msra.mxu0 %v1255
        %1275 = vmatprep.subr.mxu0 0.0
        %1276 = vmatpush1.xpose.msra.mxu0 %v1253
        %1277 = vmatprep.subr.mxu0 0.0
        %1278 = vmatpush1.xpose.msra.mxu0 %v1251
        %1279 = vmatprep.subr.mxu0 0.0
        %1280 = vmatpush1.xpose.msra.mxu0 %v1249
        %1281 = vmatprep.subr.mxu0 0.0
        %1282 = vmatpush1.xpose.msra.mxu0 %v1247
        %1283 = vmatprep.subr.mxu0 0.0
        %1284 = vmatpush1.xpose.msra.mxu0 %v1245
        %1285 = vmatprep.subr.mxu0 0.0
        %1286 = vmatpush1.xpose.msra.mxu0 %v1243
        %1287 = vmatprep.subr.mxu0 0.0
        %1288 = vmatpush1.xpose.msra.mxu0 %v1241
        %1289 = vmatprep.subr.mxu0 0.0
        %1290 = vmatpush2.xpose.msra.mxu0 0.0
        %1291 = vmatprep.subr.mxu0 0.0
        %1292 = vmatpush2.xpose.msra.mxu0 0.0
        %1293 = vmatprep.subr.mxu0 0.0
        %1294 = vmatpush2.xpose.msra.mxu0 0.0
        %1295 = vmatprep.subr.mxu0 0.0
        %1296 = vmatpush2.xpose.msra.mxu0 0.0
        %1297 = vmatprep.subr.mxu0 0.0
        %1298 = vmatpush2.xpose.msra.mxu0 0.0
        %1299 = vmatprep.subr.mxu0 0.0
        %1300 = vmatpush2.xpose.msra.mxu0 0.0
        %1301 = vmatprep.subr.mxu0 0.0
        %1302 = vmatpush2.xpose.msra.mxu0 0.0
        %1303 = vmatprep.subr.mxu0 0.0
        %1304 = vmatpush2.xpose.msra.mxu0 0.0
        %1305 = vmatprep.subr.mxu0 0.0
        %1306 = vmatpush2.xpose.msra.mxu0 0.0
        %1307 = vmatprep.subr.mxu0 0.0
        %1308 = vmatpush2.xpose.msra.mxu0 0.0
        %1309 = vmatprep.subr.mxu0 0.0
        %1310 = vmatpush2.xpose.msra.mxu0 0.0
        %1311 = vmatprep.subr.mxu0 0.0
        %1312 = vmatpush2.xpose.msra.mxu0 0.0
        %1313 = vmatprep.subr.mxu0 0.0
        %1314 = vmatpush2.xpose.msra.mxu0 0.0
        %1315 = vmatprep.subr.mxu0 0.0
        %1316 = vmatpush2.xpose.msra.mxu0 0.0
        %1317 = vmatprep.subr.mxu0 0.0
        %1318 = vmatpush2.xpose.msra.mxu0 0.0
        %1319 = vmatprep.subr.mxu0 0.0
        %1320 = vmatpush2.xpose.msra.mxu0 0.0
        %1321 = vmatprep.mubr.f32.mxu0 0.0
        %1322 = vmatmul.mubr.f32.gmra.mxu0 %v1225
        %v1323 = vpop.f32.mrf.mxu0
        %v1324 = vadd.f32 0.0, %v1323
        %v1325 = vpop.f32.mrf.mxu0
        %1326 = vmatprep.mubr.f32.mxu0 0.0
        %1327 = vmatmul.mubr.f32.gmra.mxu0 %v1227
        %v1328 = vpop.f32.mrf.mxu0
        %v1329 = vadd.f32 0.0, %v1328
        %v1330 = vpop.f32.mrf.mxu0
        %1331 = vmatprep.mubr.f32.mxu0 0.0
        %1332 = vmatmul.mubr.f32.gmra.mxu0 %v1229
        %v1333 = vpop.f32.mrf.mxu0
        %v1334 = vadd.f32 0.0, %v1333
        %v1335 = vpop.f32.mrf.mxu0
        %1336 = vmatprep.mubr.f32.mxu0 0.0
        %1337 = vmatmul.mubr.f32.gmra.mxu0 %v1231
        %v1338 = vpop.f32.mrf.mxu0
        %v1339 = vadd.f32 0.0, %v1338
        %v1340 = vpop.f32.mrf.mxu0
        %1341 = vmatprep.mubr.f32.mxu0 0.0
        %1342 = vmatmul.mubr.f32.gmra.mxu0 %v1233
        %v1343 = vpop.f32.mrf.mxu0
        %v1344 = vadd.f32 0.0, %v1343
        %v1345 = vpop.f32.mrf.mxu0
        %1346 = vmatprep.mubr.f32.mxu0 0.0
        %1347 = vmatmul.mubr.f32.gmra.mxu0 %v1235
        %v1348 = vpop.f32.mrf.mxu0
        %v1349 = vadd.f32 0.0, %v1348
        %v1350 = vpop.f32.mrf.mxu0
        %1351 = vmatprep.mubr.f32.mxu0 0.0
        %1352 = vmatmul.mubr.f32.gmra.mxu0 %v1237
        %v1353 = vpop.f32.mrf.mxu0
        %v1354 = vadd.f32 0.0, %v1353
        %v1355 = vpop.f32.mrf.mxu0
        %1356 = vmatprep.mubr.f32.mxu0 0.0
        %1357 = vmatmul.mubr.f32.gmra.mxu0 %v1239
        %v1358 = vpop.f32.mrf.mxu0
        %v1359 = vadd.f32 0.0, %v1358
        %v1360 = vpop.f32.mrf.mxu0
        %1361 = vdwg.mxu0
        %v1362 = vsel %vm1087, %v920, 0
        %v1364 = vsel %vm1087, %v922, 0
        %v1366 = vsel %vm1087, %v924, 0
        %v1368 = vsel %vm1087, %v926, 0
        %v1370 = vsel %vm1087, %v928, 0
        %v1372 = vsel %vm1087, %v930, 0
        %v1374 = vsel %vm1087, %v932, 0
        %v1376 = vsel %vm1087, %v934, 0
        %v1378 = vsel %vm1087, %v976, 0
        %v1380 = vsel %vm1087, %v978, 0
        %v1382 = vsel %vm1087, %v980, 0
        %v1384 = vsel %vm1087, %v982, 0
        %v1386 = vsel %vm1087, %v984, 0
        %v1388 = vsel %vm1087, %v986, 0
        %v1390 = vsel %vm1087, %v988, 0
        %v1392 = vsel %vm1087, %v990, 0
        %1394 = vmatprep.subr.mxu0 0.0
        %1395 = vmatpush1.xpose.msra.mxu0 0.0
        %1396 = vmatprep.subr.mxu0 0.0
        %1397 = vmatpush1.xpose.msra.mxu0 0.0
        %1398 = vmatprep.subr.mxu0 0.0
        %1399 = vmatpush1.xpose.msra.mxu0 0.0
        %1400 = vmatprep.subr.mxu0 0.0
        %1401 = vmatpush1.xpose.msra.mxu0 0.0
        %1402 = vmatprep.subr.mxu0 0.0
        %1403 = vmatpush1.xpose.msra.mxu0 0.0
        %1404 = vmatprep.subr.mxu0 0.0
        %1405 = vmatpush1.xpose.msra.mxu0 0.0
        %1406 = vmatprep.subr.mxu0 0.0
        %1407 = vmatpush1.xpose.msra.mxu0 0.0
        %1408 = vmatprep.subr.mxu0 0.0
        %1409 = vmatpush1.xpose.msra.mxu0 0.0
        %1410 = vmatprep.subr.mxu0 0.0
        %1411 = vmatpush1.xpose.msra.mxu0 %v1392
        %1412 = vmatprep.subr.mxu0 0.0
        %1413 = vmatpush1.xpose.msra.mxu0 %v1390
        %1414 = vmatprep.subr.mxu0 0.0
        %1415 = vmatpush1.xpose.msra.mxu0 %v1388
        %1416 = vmatprep.subr.mxu0 0.0
        %1417 = vmatpush1.xpose.msra.mxu0 %v1386
        %1418 = vmatprep.subr.mxu0 0.0
        %1419 = vmatpush1.xpose.msra.mxu0 %v1384
        %1420 = vmatprep.subr.mxu0 0.0
        %1421 = vmatpush1.xpose.msra.mxu0 %v1382
        %1422 = vmatprep.subr.mxu0 0.0
        %1423 = vmatpush1.xpose.msra.mxu0 %v1380
        %1424 = vmatprep.subr.mxu0 0.0
        %1425 = vmatpush1.xpose.msra.mxu0 %v1378
        %1426 = vmatprep.subr.mxu0 0.0
        %1427 = vmatpush2.xpose.msra.mxu0 0.0
        %1428 = vmatprep.subr.mxu0 0.0
        %1429 = vmatpush2.xpose.msra.mxu0 0.0
        %1430 = vmatprep.subr.mxu0 0.0
        %1431 = vmatpush2.xpose.msra.mxu0 0.0
        %1432 = vmatprep.subr.mxu0 0.0
        %1433 = vmatpush2.xpose.msra.mxu0 0.0
        %1434 = vmatprep.subr.mxu0 0.0
        %1435 = vmatpush2.xpose.msra.mxu0 0.0
        %1436 = vmatprep.subr.mxu0 0.0
        %1437 = vmatpush2.xpose.msra.mxu0 0.0
        %1438 = vmatprep.subr.mxu0 0.0
        %1439 = vmatpush2.xpose.msra.mxu0 0.0
        %1440 = vmatprep.subr.mxu0 0.0
        %1441 = vmatpush2.xpose.msra.mxu0 0.0
        %1442 = vmatprep.subr.mxu0 0.0
        %1443 = vmatpush2.xpose.msra.mxu0 0.0
        %1444 = vmatprep.subr.mxu0 0.0
        %1445 = vmatpush2.xpose.msra.mxu0 0.0
        %1446 = vmatprep.subr.mxu0 0.0
        %1447 = vmatpush2.xpose.msra.mxu0 0.0
        %1448 = vmatprep.subr.mxu0 0.0
        %1449 = vmatpush2.xpose.msra.mxu0 0.0
        %1450 = vmatprep.subr.mxu0 0.0
        %1451 = vmatpush2.xpose.msra.mxu0 0.0
        %1452 = vmatprep.subr.mxu0 0.0
        %1453 = vmatpush2.xpose.msra.mxu0 0.0
        %1454 = vmatprep.subr.mxu0 0.0
        %1455 = vmatpush2.xpose.msra.mxu0 0.0
        %1456 = vmatprep.subr.mxu0 0.0
        %1457 = vmatpush2.xpose.msra.mxu0 0.0
        %1458 = vmatprep.mubr.f32.mxu0 0.0
        %1459 = vmatmul.mubr.f32.gmra.mxu0 %v1362
        %v1460 = vpop.f32.mrf.mxu0
        %v1461 = vadd.f32 0.0, %v1460
        %v1462 = vpop.f32.mrf.mxu0
        %1463 = vmatprep.mubr.f32.mxu0 0.0
        %1464 = vmatmul.mubr.f32.gmra.mxu0 %v1364
        %v1465 = vpop.f32.mrf.mxu0
        %v1466 = vadd.f32 0.0, %v1465
        %v1467 = vpop.f32.mrf.mxu0
        %1468 = vmatprep.mubr.f32.mxu0 0.0
        %1469 = vmatmul.mubr.f32.gmra.mxu0 %v1366
        %v1470 = vpop.f32.mrf.mxu0
        %v1471 = vadd.f32 0.0, %v1470
        %v1472 = vpop.f32.mrf.mxu0
        %1473 = vmatprep.mubr.f32.mxu0 0.0
        %1474 = vmatmul.mubr.f32.gmra.mxu0 %v1368
        %v1475 = vpop.f32.mrf.mxu0
        %v1476 = vadd.f32 0.0, %v1475
        %v1477 = vpop.f32.mrf.mxu0
        %1478 = vmatprep.mubr.f32.mxu0 0.0
        %1479 = vmatmul.mubr.f32.gmra.mxu0 %v1370
        %v1480 = vpop.f32.mrf.mxu0
        %v1481 = vadd.f32 0.0, %v1480
        %v1482 = vpop.f32.mrf.mxu0
        %1483 = vmatprep.mubr.f32.mxu0 0.0
        %1484 = vmatmul.mubr.f32.gmra.mxu0 %v1372
        %v1485 = vpop.f32.mrf.mxu0
        %v1486 = vadd.f32 0.0, %v1485
        %v1487 = vpop.f32.mrf.mxu0
        %1488 = vmatprep.mubr.f32.mxu0 0.0
        %1489 = vmatmul.mubr.f32.gmra.mxu0 %v1374
        %v1490 = vpop.f32.mrf.mxu0
        %v1491 = vadd.f32 0.0, %v1490
        %v1492 = vpop.f32.mrf.mxu0
        %1493 = vmatprep.mubr.f32.mxu0 0.0
        %1494 = vmatmul.mubr.f32.gmra.mxu0 %v1376
        %v1495 = vpop.f32.mrf.mxu0
        %v1496 = vadd.f32 0.0, %v1495
        %v1497 = vpop.f32.mrf.mxu0
        %1498 = vdwg.mxu0
        %v1499 = vsel %vm1087, %v936, 0
        %v1501 = vsel %vm1087, %v938, 0
        %v1503 = vsel %vm1087, %v940, 0
        %v1505 = vsel %vm1087, %v942, 0
        %v1507 = vsel %vm1087, %v944, 0
        %v1509 = vsel %vm1087, %v946, 0
        %v1511 = vsel %vm1087, %v948, 0
        %v1513 = vsel %vm1087, %v950, 0
        %v1515 = vsel %vm1087, %v992, 0
        %v1517 = vsel %vm1087, %v994, 0
        %v1519 = vsel %vm1087, %v996, 0
        %v1521 = vsel %vm1087, %v998, 0
        %v1523 = vsel %vm1087, %v1000, 0
        %v1525 = vsel %vm1087, %v1002, 0
        %v1527 = vsel %vm1087, %v1004, 0
        %v1529 = vsel %vm1087, %v1006, 0
        %1531 = vmatprep.subr.mxu0 0.0
        %1532 = vmatpush1.xpose.msra.mxu0 0.0
        %1533 = vmatprep.subr.mxu0 0.0
        %1534 = vmatpush1.xpose.msra.mxu0 0.0
        %1535 = vmatprep.subr.mxu0 0.0
        %1536 = vmatpush1.xpose.msra.mxu0 0.0
        %1537 = vmatprep.subr.mxu0 0.0
        %1538 = vmatpush1.xpose.msra.mxu0 0.0
        %1539 = vmatprep.subr.mxu0 0.0
        %1540 = vmatpush1.xpose.msra.mxu0 0.0
        %1541 = vmatprep.subr.mxu0 0.0
        %1542 = vmatpush1.xpose.msra.mxu0 0.0
        %1543 = vmatprep.subr.mxu0 0.0
        %1544 = vmatpush1.xpose.msra.mxu0 0.0
        %1545 = vmatprep.subr.mxu0 0.0
        %1546 = vmatpush1.xpose.msra.mxu0 0.0
        %1547 = vmatprep.subr.mxu0 0.0
        %1548 = vmatpush1.xpose.msra.mxu0 %v1529
        %1549 = vmatprep.subr.mxu0 0.0
        %1550 = vmatpush1.xpose.msra.mxu0 %v1527
        %1551 = vmatprep.subr.mxu0 0.0
        %1552 = vmatpush1.xpose.msra.mxu0 %v1525
        %1553 = vmatprep.subr.mxu0 0.0
        %1554 = vmatpush1.xpose.msra.mxu0 %v1523
        %1555 = vmatprep.subr.mxu0 0.0
        %1556 = vmatpush1.xpose.msra.mxu0 %v1521
        %1557 = vmatprep.subr.mxu0 0.0
        %1558 = vmatpush1.xpose.msra.mxu0 %v1519
        %1559 = vmatprep.subr.mxu0 0.0
        %1560 = vmatpush1.xpose.msra.mxu0 %v1517
        %1561 = vmatprep.subr.mxu0 0.0
        %1562 = vmatpush1.xpose.msra.mxu0 %v1515
        %1563 = vmatprep.subr.mxu0 0.0
        %1564 = vmatpush2.xpose.msra.mxu0 0.0
        %1565 = vmatprep.subr.mxu0 0.0
        %1566 = vmatpush2.xpose.msra.mxu0 0.0
        %1567 = vmatprep.subr.mxu0 0.0
        %1568 = vmatpush2.xpose.msra.mxu0 0.0
        %1569 = vmatprep.subr.mxu0 0.0
        %1570 = vmatpush2.xpose.msra.mxu0 0.0
        %1571 = vmatprep.subr.mxu0 0.0
        %1572 = vmatpush2.xpose.msra.mxu0 0.0
        %1573 = vmatprep.subr.mxu0 0.0
        %1574 = vmatpush2.xpose.msra.mxu0 0.0
        %1575 = vmatprep.subr.mxu0 0.0
        %1576 = vmatpush2.xpose.msra.mxu0 0.0
        %1577 = vmatprep.subr.mxu0 0.0
        %1578 = vmatpush2.xpose.msra.mxu0 0.0
        %1579 = vmatprep.subr.mxu0 0.0
        %1580 = vmatpush2.xpose.msra.mxu0 0.0
        %1581 = vmatprep.subr.mxu0 0.0
        %1582 = vmatpush2.xpose.msra.mxu0 0.0
        %1583 = vmatprep.subr.mxu0 0.0
        %1584 = vmatpush2.xpose.msra.mxu0 0.0
        %1585 = vmatprep.subr.mxu0 0.0
        %1586 = vmatpush2.xpose.msra.mxu0 0.0
        %1587 = vmatprep.subr.mxu0 0.0
        %1588 = vmatpush2.xpose.msra.mxu0 0.0
        %1589 = vmatprep.subr.mxu0 0.0
        %1590 = vmatpush2.xpose.msra.mxu0 0.0
        %1591 = vmatprep.subr.mxu0 0.0
        %1592 = vmatpush2.xpose.msra.mxu0 0.0
        %1593 = vmatprep.subr.mxu0 0.0
        %1594 = vmatpush2.xpose.msra.mxu0 0.0
        %1595 = vmatprep.mubr.f32.mxu0 0.0
        %1596 = vmatmul.mubr.f32.gmra.mxu0 %v1499
        %v1597 = vpop.f32.mrf.mxu0
        %v1598 = vadd.f32 0.0, %v1597
        %v1599 = vpop.f32.mrf.mxu0
        %1600 = vmatprep.mubr.f32.mxu0 0.0
        %1601 = vmatmul.mubr.f32.gmra.mxu0 %v1501
        %v1602 = vpop.f32.mrf.mxu0
        %v1603 = vadd.f32 0.0, %v1602
        %v1604 = vpop.f32.mrf.mxu0
        %1605 = vmatprep.mubr.f32.mxu0 0.0
        %1606 = vmatmul.mubr.f32.gmra.mxu0 %v1503
        %v1607 = vpop.f32.mrf.mxu0
        %v1608 = vadd.f32 0.0, %v1607
        %v1609 = vpop.f32.mrf.mxu0
        %1610 = vmatprep.mubr.f32.mxu0 0.0
        %1611 = vmatmul.mubr.f32.gmra.mxu0 %v1505
        %v1612 = vpop.f32.mrf.mxu0
        %v1613 = vadd.f32 0.0, %v1612
        %v1614 = vpop.f32.mrf.mxu0
        %1615 = vmatprep.mubr.f32.mxu0 0.0
        %1616 = vmatmul.mubr.f32.gmra.mxu0 %v1507
        %v1617 = vpop.f32.mrf.mxu0
        %v1618 = vadd.f32 0.0, %v1617
        %v1619 = vpop.f32.mrf.mxu0
        %1620 = vmatprep.mubr.f32.mxu0 0.0
        %1621 = vmatmul.mubr.f32.gmra.mxu0 %v1509
        %v1622 = vpop.f32.mrf.mxu0
        %v1623 = vadd.f32 0.0, %v1622
        %v1624 = vpop.f32.mrf.mxu0
        %1625 = vmatprep.mubr.f32.mxu0 0.0
        %1626 = vmatmul.mubr.f32.gmra.mxu0 %v1511
        %v1627 = vpop.f32.mrf.mxu0
        %v1628 = vadd.f32 0.0, %v1627
        %v1629 = vpop.f32.mrf.mxu0
        %1630 = vmatprep.mubr.f32.mxu0 0.0
        %1631 = vmatmul.mubr.f32.gmra.mxu0 %v1513
        %v1632 = vpop.f32.mrf.mxu0
        %v1633 = vadd.f32 0.0, %v1632
        %v1634 = vpop.f32.mrf.mxu0
        %1635 = vdwg.mxu0
        %v1636 = vld [vmem:[#allocation8] sm:$0xff]
        %v1637 = vld [vmem:[#allocation8 + $0x8] sm:$0xff]
        %v1638 = vld [vmem:[#allocation8 + $0x10] sm:$0xff]
        %v1639 = vld [vmem:[#allocation8 + $0x18] sm:$0xff]
        %v1640 = vld [vmem:[#allocation8 + $0x20] sm:$0xff]
        %v1641 = vld [vmem:[#allocation8 + $0x28] sm:$0xff]
        %v1642 = vld [vmem:[#allocation8 + $0x30] sm:$0xff]
        %v1643 = vld [vmem:[#allocation8 + $0x38] sm:$0xff]
        %v1644 = vld [vmem:[#allocation8 + $0x40] sm:$0xff]
        %v1645 = vld [vmem:[#allocation8 + $0x48] sm:$0xff]
        %v1646 = vld [vmem:[#allocation8 + $0x50] sm:$0xff]
        %v1647 = vld [vmem:[#allocation8 + $0x58] sm:$0xff]
        %v1648 = vld [vmem:[#allocation8 + $0x60] sm:$0xff]
        %v1649 = vld [vmem:[#allocation8 + $0x68] sm:$0xff]
        %v1650 = vld [vmem:[#allocation8 + $0x70] sm:$0xff]
        %v1651 = vld [vmem:[#allocation8 + $0x78] sm:$0xff]
        %v1652 = vld [vmem:[#allocation8 + $0x80] sm:$0xff]
        %v1653 = vld [vmem:[#allocation8 + $0x88] sm:$0xff]
        %v1654 = vld [vmem:[#allocation8 + $0x90] sm:$0xff]
        %v1655 = vld [vmem:[#allocation8 + $0x98] sm:$0xff]
        %v1656 = vld [vmem:[#allocation8 + $0xa0] sm:$0xff]
        %v1657 = vld [vmem:[#allocation8 + $0xa8] sm:$0xff]
        %v1658 = vld [vmem:[#allocation8 + $0xb0] sm:$0xff]
        %v1659 = vld [vmem:[#allocation8 + $0xb8] sm:$0xff]
        %v1660 = vld [vmem:[#allocation8 + $0xc0] sm:$0xff]
        %v1661 = vld [vmem:[#allocation8 + $0xc8] sm:$0xff]
        %v1662 = vld [vmem:[#allocation8 + $0xd0] sm:$0xff]
        %v1663 = vld [vmem:[#allocation8 + $0xd8] sm:$0xff]
        %v1664 = vld [vmem:[#allocation8 + $0xe0] sm:$0xff]
        %v1665 = vld [vmem:[#allocation8 + $0xe8] sm:$0xff]
        %v1666 = vld [vmem:[#allocation8 + $0xf0] sm:$0xff]
        %v1667 = vld [vmem:[#allocation8 + $0xf8] sm:$0xff]
        %v1668 = vadd.f32 %v1187, %v1636
        %v1669 = vadd.f32 %v1192, %v1637
        %v1670 = vadd.f32 %v1197, %v1638
        %v1671 = vadd.f32 %v1202, %v1639
        %v1672 = vadd.f32 %v1207, %v1640
        %v1673 = vadd.f32 %v1212, %v1641
        %v1674 = vadd.f32 %v1217, %v1642
        %v1675 = vadd.f32 %v1222, %v1643
        %v1676 = vadd.f32 %v1324, %v1644
        %v1677 = vadd.f32 %v1329, %v1645
        %v1678 = vadd.f32 %v1334, %v1646
        %v1679 = vadd.f32 %v1339, %v1647
        %v1680 = vadd.f32 %v1344, %v1648
        %v1681 = vadd.f32 %v1349, %v1649
        %v1682 = vadd.f32 %v1354, %v1650
        %v1683 = vadd.f32 %v1359, %v1651
        %v1684 = vadd.f32 %v1461, %v1652
        %v1685 = vadd.f32 %v1466, %v1653
        %v1686 = vadd.f32 %v1471, %v1654
        %v1687 = vadd.f32 %v1476, %v1655
        %v1688 = vadd.f32 %v1481, %v1656
        %v1689 = vadd.f32 %v1486, %v1657
        %v1690 = vadd.f32 %v1491, %v1658
        %v1691 = vadd.f32 %v1496, %v1659
        %v1692 = vadd.f32 %v1598, %v1660
        %v1693 = vadd.f32 %v1603, %v1661
        %v1694 = vadd.f32 %v1608, %v1662
        %v1695 = vadd.f32 %v1613, %v1663
        %v1696 = vadd.f32 %v1618, %v1664
        %v1697 = vadd.f32 %v1623, %v1665
        %v1698 = vadd.f32 %v1628, %v1666
        %v1699 = vadd.f32 %v1633, %v1667
        %v1700 = vld [vmem:[%s429] sm:$0xff]
        %v1701 = vld [vmem:[%s429 + $0x8] sm:$0xff]
        %v1702 = vld [vmem:[%s429 + $0x10] sm:$0xff]
        %v1703 = vld [vmem:[%s429 + $0x18] sm:$0xff]
        %v1704 = vld [vmem:[%s429 + $0x20] sm:$0xff]
        %v1705 = vld [vmem:[%s429 + $0x28] sm:$0xff]
        %v1706 = vld [vmem:[%s429 + $0x30] sm:$0xff]
        %v1707 = vld [vmem:[%s429 + $0x38] sm:$0xff]
        %v1708 = vadd.f32 %v1668, %v1700
        %v1709 = vadd.f32 %v1669, %v1701
        %v1710 = vadd.f32 %v1670, %v1702
        %v1711 = vadd.f32 %v1671, %v1703
        %v1712 = vadd.f32 %v1672, %v1704
        %v1713 = vadd.f32 %v1673, %v1705
        %v1714 = vadd.f32 %v1674, %v1706
        %v1715 = vadd.f32 %v1675, %v1707
        %v1716 = vadd.f32 %v1676, %v1700
        %v1717 = vadd.f32 %v1677, %v1701
        %v1718 = vadd.f32 %v1678, %v1702
        %v1719 = vadd.f32 %v1679, %v1703
        %v1720 = vadd.f32 %v1680, %v1704
        %v1721 = vadd.f32 %v1681, %v1705
        %v1722 = vadd.f32 %v1682, %v1706
        %v1723 = vadd.f32 %v1683, %v1707
        %v1724 = vadd.f32 %v1684, %v1700
        %v1725 = vadd.f32 %v1685, %v1701
        %v1726 = vadd.f32 %v1686, %v1702
        %v1727 = vadd.f32 %v1687, %v1703
        %v1728 = vadd.f32 %v1688, %v1704
        %v1729 = vadd.f32 %v1689, %v1705
        %v1730 = vadd.f32 %v1690, %v1706
        %v1731 = vadd.f32 %v1691, %v1707
        %v1732 = vadd.f32 %v1692, %v1700
        %v1733 = vadd.f32 %v1693, %v1701
        %v1734 = vadd.f32 %v1694, %v1702
        %v1735 = vadd.f32 %v1695, %v1703
        %v1736 = vadd.f32 %v1696, %v1704
        %v1737 = vadd.f32 %v1697, %v1705
        %v1738 = vadd.f32 %v1698, %v1706
        %v1739 = vadd.f32 %v1699, %v1707
        %vm1740 = vcmask 523264
        %v1741 = vsel %vm1740, %v1708, -inf
        %1742 = vmax.xlane.f32.xlu0 %v1741
        %v1743 = vpop.xlane.xlu0 %1742
        %v1744 = vsel %vm1740, %v1709, -inf
        %1745 = vmax.xlane.f32.xlu0 %v1744
        %v1746 = vpop.xlane.xlu0 %1745
        %v1747 = vsel %vm1740, %v1710, -inf
        %1748 = vmax.xlane.f32.xlu0 %v1747
        %v1749 = vpop.xlane.xlu0 %1748
        %v1750 = vsel %vm1740, %v1711, -inf
        %1751 = vmax.xlane.f32.xlu0 %v1750
        %v1752 = vpop.xlane.xlu0 %1751
        %v1753 = vsel %vm1740, %v1712, -inf
        %1754 = vmax.xlane.f32.xlu0 %v1753
        %v1755 = vpop.xlane.xlu0 %1754
        %v1756 = vsel %vm1740, %v1713, -inf
        %1757 = vmax.xlane.f32.xlu0 %v1756
        %v1758 = vpop.xlane.xlu0 %1757
        %v1759 = vsel %vm1740, %v1714, -inf
        %1760 = vmax.xlane.f32.xlu0 %v1759
        %v1761 = vpop.xlane.xlu0 %1760
        %v1762 = vsel %vm1740, %v1715, -inf
        %1763 = vmax.xlane.f32.xlu0 %v1762
        %v1764 = vpop.xlane.xlu0 %1763
        %v1765 = vsel %vm1740, %v1716, -inf
        %1766 = vmax.xlane.f32.xlu0 %v1765
        %v1767 = vpop.xlane.xlu0 %1766
        %v1768 = vsel %vm1740, %v1717, -inf
        %1769 = vmax.xlane.f32.xlu0 %v1768
        %v1770 = vpop.xlane.xlu0 %1769
        %v1771 = vsel %vm1740, %v1718, -inf
        %1772 = vmax.xlane.f32.xlu0 %v1771
        %v1773 = vpop.xlane.xlu0 %1772
        %v1774 = vsel %vm1740, %v1719, -inf
        %1775 = vmax.xlane.f32.xlu0 %v1774
        %v1776 = vpop.xlane.xlu0 %1775
        %v1777 = vsel %vm1740, %v1720, -inf
        %1778 = vmax.xlane.f32.xlu0 %v1777
        %v1779 = vpop.xlane.xlu0 %1778
        %v1780 = vsel %vm1740, %v1721, -inf
        %1781 = vmax.xlane.f32.xlu0 %v1780
        %v1782 = vpop.xlane.xlu0 %1781
        %v1783 = vsel %vm1740, %v1722, -inf
        %1784 = vmax.xlane.f32.xlu0 %v1783
        %v1785 = vpop.xlane.xlu0 %1784
        %v1786 = vsel %vm1740, %v1723, -inf
        %1787 = vmax.xlane.f32.xlu0 %v1786
        %v1788 = vpop.xlane.xlu0 %1787
        %v1789 = vsel %vm1740, %v1724, -inf
        %1790 = vmax.xlane.f32.xlu0 %v1789
        %v1791 = vpop.xlane.xlu0 %1790
        %v1792 = vsel %vm1740, %v1725, -inf
        %1793 = vmax.xlane.f32.xlu0 %v1792
        %v1794 = vpop.xlane.xlu0 %1793
        %v1795 = vsel %vm1740, %v1726, -inf
        %1796 = vmax.xlane.f32.xlu0 %v1795
        %v1797 = vpop.xlane.xlu0 %1796
        %v1798 = vsel %vm1740, %v1727, -inf
        %1799 = vmax.xlane.f32.xlu0 %v1798
        %v1800 = vpop.xlane.xlu0 %1799
        %v1801 = vsel %vm1740, %v1728, -inf
        %1802 = vmax.xlane.f32.xlu0 %v1801
        %v1803 = vpop.xlane.xlu0 %1802
        %v1804 = vsel %vm1740, %v1729, -inf
        %1805 = vmax.xlane.f32.xlu0 %v1804
        %v1806 = vpop.xlane.xlu0 %1805
        %v1807 = vsel %vm1740, %v1730, -inf
        %1808 = vmax.xlane.f32.xlu0 %v1807
        %v1809 = vpop.xlane.xlu0 %1808
        %v1810 = vsel %vm1740, %v1731, -inf
        %1811 = vmax.xlane.f32.xlu0 %v1810
        %v1812 = vpop.xlane.xlu0 %1811
        %v1813 = vsel %vm1740, %v1732, -inf
        %1814 = vmax.xlane.f32.xlu0 %v1813
        %v1815 = vpop.xlane.xlu0 %1814
        %v1816 = vsel %vm1740, %v1733, -inf
        %1817 = vmax.xlane.f32.xlu0 %v1816
        %v1818 = vpop.xlane.xlu0 %1817
        %v1819 = vsel %vm1740, %v1734, -inf
        %1820 = vmax.xlane.f32.xlu0 %v1819
        %v1821 = vpop.xlane.xlu0 %1820
        %v1822 = vsel %vm1740, %v1735, -inf
        %1823 = vmax.xlane.f32.xlu0 %v1822
        %v1824 = vpop.xlane.xlu0 %1823
        %v1825 = vsel %vm1740, %v1736, -inf
        %1826 = vmax.xlane.f32.xlu0 %v1825
        %v1827 = vpop.xlane.xlu0 %1826
        %v1828 = vsel %vm1740, %v1737, -inf
        %1829 = vmax.xlane.f32.xlu0 %v1828
        %v1830 = vpop.xlane.xlu0 %1829
        %v1831 = vsel %vm1740, %v1738, -inf
        %1832 = vmax.xlane.f32.xlu0 %v1831
        %v1833 = vpop.xlane.xlu0 %1832
        %v1834 = vsel %vm1740, %v1739, -inf
        %1835 = vmax.xlane.f32.xlu0 %v1834
        %v1836 = vpop.xlane.xlu0 %1835
        %v1837 = vsub.f32 %v1708, %v1743
        %v1838 = vsub.f32 %v1709, %v1746
        %v1839 = vsub.f32 %v1710, %v1749
        %v1840 = vsub.f32 %v1711, %v1752
        %v1841 = vsub.f32 %v1712, %v1755
        %v1842 = vsub.f32 %v1713, %v1758
        %v1843 = vsub.f32 %v1714, %v1761
        %v1844 = vsub.f32 %v1715, %v1764
        %v1845 = vsub.f32 %v1716, %v1767
        %v1846 = vsub.f32 %v1717, %v1770
        %v1847 = vsub.f32 %v1718, %v1773
        %v1848 = vsub.f32 %v1719, %v1776
        %v1849 = vsub.f32 %v1720, %v1779
        %v1850 = vsub.f32 %v1721, %v1782
        %v1851 = vsub.f32 %v1722, %v1785
        %v1852 = vsub.f32 %v1723, %v1788
        %v1853 = vsub.f32 %v1724, %v1791
        %v1854 = vsub.f32 %v1725, %v1794
        %v1855 = vsub.f32 %v1726, %v1797
        %v1856 = vsub.f32 %v1727, %v1800
        %v1857 = vsub.f32 %v1728, %v1803
        %v1858 = vsub.f32 %v1729, %v1806
        %v1859 = vsub.f32 %v1730, %v1809
        %v1860 = vsub.f32 %v1731, %v1812
        %v1861 = vsub.f32 %v1732, %v1815
        %v1862 = vsub.f32 %v1733, %v1818
        %v1863 = vsub.f32 %v1734, %v1821
        %v1864 = vsub.f32 %v1735, %v1824
        %v1865 = vsub.f32 %v1736, %v1827
        %v1866 = vsub.f32 %v1737, %v1830
        %v1867 = vsub.f32 %v1738, %v1833
        %v1868 = vsub.f32 %v1739, %v1836
        %v1869 = vmul.f32 %v1837, 1.442695
        %v1870 = vpow.pop %v1869
        %v1871 = vmul.f32 %v1838, 1.442695
        %v1872 = vpow.pop %v1871
        %v1873 = vmul.f32 %v1839, 1.442695
        %v1874 = vpow.pop %v1873
        %v1875 = vmul.f32 %v1840, 1.442695
        %v1876 = vpow.pop %v1875
        %v1877 = vmul.f32 %v1841, 1.442695
        %v1878 = vpow.pop %v1877
        %v1879 = vmul.f32 %v1842, 1.442695
        %v1880 = vpow.pop %v1879
        %v1881 = vmul.f32 %v1843, 1.442695
        %v1882 = vpow.pop %v1881
        %v1883 = vmul.f32 %v1844, 1.442695
        %v1884 = vpow.pop %v1883
        %v1885 = vmul.f32 %v1845, 1.442695
        %v1886 = vpow.pop %v1885
        %v1887 = vmul.f32 %v1846, 1.442695
        %v1888 = vpow.pop %v1887
        %v1889 = vmul.f32 %v1847, 1.442695
        %v1890 = vpow.pop %v1889
        %v1891 = vmul.f32 %v1848, 1.442695
        %v1892 = vpow.pop %v1891
        %v1893 = vmul.f32 %v1849, 1.442695
        %v1894 = vpow.pop %v1893
        %v1895 = vmul.f32 %v1850, 1.442695
        %v1896 = vpow.pop %v1895
        %v1897 = vmul.f32 %v1851, 1.442695
        %v1898 = vpow.pop %v1897
        %v1899 = vmul.f32 %v1852, 1.442695
        %v1900 = vpow.pop %v1899
        %v1901 = vmul.f32 %v1853, 1.442695
        %v1902 = vpow.pop %v1901
        %v1903 = vmul.f32 %v1854, 1.442695
        %v1904 = vpow.pop %v1903
        %v1905 = vmul.f32 %v1855, 1.442695
        %v1906 = vpow.pop %v1905
        %v1907 = vmul.f32 %v1856, 1.442695
        %v1908 = vpow.pop %v1907
        %v1909 = vmul.f32 %v1857, 1.442695
        %v1910 = vpow.pop %v1909
        %v1911 = vmul.f32 %v1858, 1.442695
        %v1912 = vpow.pop %v1911
        %v1913 = vmul.f32 %v1859, 1.442695
        %v1914 = vpow.pop %v1913
        %v1915 = vmul.f32 %v1860, 1.442695
        %v1916 = vpow.pop %v1915
        %v1917 = vmul.f32 %v1861, 1.442695
        %v1918 = vpow.pop %v1917
        %v1919 = vmul.f32 %v1862, 1.442695
        %v1920 = vpow.pop %v1919
        %v1921 = vmul.f32 %v1863, 1.442695
        %v1922 = vpow.pop %v1921
        %v1923 = vmul.f32 %v1864, 1.442695
        %v1924 = vpow.pop %v1923
        %v1925 = vmul.f32 %v1865, 1.442695
        %v1926 = vpow.pop %v1925
        %v1927 = vmul.f32 %v1866, 1.442695
        %v1928 = vpow.pop %v1927
        %v1929 = vmul.f32 %v1867, 1.442695
        %v1930 = vpow.pop %v1929
        %v1931 = vmul.f32 %v1868, 1.442695
        %v1932 = vpow.pop %v1931
        %v1933 = vsel %vm1740, %v1870, 0.0
        %1934 = vadd.xlane.f32.xlu0 %v1933
        %v1935 = vpop.xlane.xlu0 %1934
        %v1936 = vsel %vm1740, %v1872, 0.0
        %1937 = vadd.xlane.f32.xlu0 %v1936
        %v1938 = vpop.xlane.xlu0 %1937
        %v1939 = vsel %vm1740, %v1874, 0.0
        %1940 = vadd.xlane.f32.xlu0 %v1939
        %v1941 = vpop.xlane.xlu0 %1940
        %v1942 = vsel %vm1740, %v1876, 0.0
        %1943 = vadd.xlane.f32.xlu0 %v1942
        %v1944 = vpop.xlane.xlu0 %1943
        %v1945 = vsel %vm1740, %v1878, 0.0
        %1946 = vadd.xlane.f32.xlu0 %v1945
        %v1947 = vpop.xlane.xlu0 %1946
        %v1948 = vsel %vm1740, %v1880, 0.0
        %1949 = vadd.xlane.f32.xlu0 %v1948
        %v1950 = vpop.xlane.xlu0 %1949
        %v1951 = vsel %vm1740, %v1882, 0.0
        %1952 = vadd.xlane.f32.xlu0 %v1951
        %v1953 = vpop.xlane.xlu0 %1952
        %v1954 = vsel %vm1740, %v1884, 0.0
        %1955 = vadd.xlane.f32.xlu0 %v1954
        %v1956 = vpop.xlane.xlu0 %1955
        %v1957 = vsel %vm1740, %v1886, 0.0
        %1958 = vadd.xlane.f32.xlu0 %v1957
        %v1959 = vpop.xlane.xlu0 %1958
        %v1960 = vsel %vm1740, %v1888, 0.0
        %1961 = vadd.xlane.f32.xlu0 %v1960
        %v1962 = vpop.xlane.xlu0 %1961
        %v1963 = vsel %vm1740, %v1890, 0.0
        %1964 = vadd.xlane.f32.xlu0 %v1963
        %v1965 = vpop.xlane.xlu0 %1964
        %v1966 = vsel %vm1740, %v1892, 0.0
        %1967 = vadd.xlane.f32.xlu0 %v1966
        %v1968 = vpop.xlane.xlu0 %1967
        %v1969 = vsel %vm1740, %v1894, 0.0
        %1970 = vadd.xlane.f32.xlu0 %v1969
        %v1971 = vpop.xlane.xlu0 %1970
        %v1972 = vsel %vm1740, %v1896, 0.0
        %1973 = vadd.xlane.f32.xlu0 %v1972
        %v1974 = vpop.xlane.xlu0 %1973
        %v1975 = vsel %vm1740, %v1898, 0.0
        %1976 = vadd.xlane.f32.xlu0 %v1975
        %v1977 = vpop.xlane.xlu0 %1976
        %v1978 = vsel %vm1740, %v1900, 0.0
        %1979 = vadd.xlane.f32.xlu0 %v1978
        %v1980 = vpop.xlane.xlu0 %1979
        %v1981 = vsel %vm1740, %v1902, 0.0
        %1982 = vadd.xlane.f32.xlu0 %v1981
        %v1983 = vpop.xlane.xlu0 %1982
        %v1984 = vsel %vm1740, %v1904, 0.0
        %1985 = vadd.xlane.f32.xlu0 %v1984
        %v1986 = vpop.xlane.xlu0 %1985
        %v1987 = vsel %vm1740, %v1906, 0.0
        %1988 = vadd.xlane.f32.xlu0 %v1987
        %v1989 = vpop.xlane.xlu0 %1988
        %v1990 = vsel %vm1740, %v1908, 0.0
        %1991 = vadd.xlane.f32.xlu0 %v1990
        %v1992 = vpop.xlane.xlu0 %1991
        %v1993 = vsel %vm1740, %v1910, 0.0
        %1994 = vadd.xlane.f32.xlu0 %v1993
        %v1995 = vpop.xlane.xlu0 %1994
        %v1996 = vsel %vm1740, %v1912, 0.0
        %1997 = vadd.xlane.f32.xlu0 %v1996
        %v1998 = vpop.xlane.xlu0 %1997
        %v1999 = vsel %vm1740, %v1914, 0.0
        %2000 = vadd.xlane.f32.xlu0 %v1999
        %v2001 = vpop.xlane.xlu0 %2000
        %v2002 = vsel %vm1740, %v1916, 0.0
        %2003 = vadd.xlane.f32.xlu0 %v2002
        %v2004 = vpop.xlane.xlu0 %2003
        %v2005 = vsel %vm1740, %v1918, 0.0
        %2006 = vadd.xlane.f32.xlu0 %v2005
        %v2007 = vpop.xlane.xlu0 %2006
        %v2008 = vsel %vm1740, %v1920, 0.0
        %2009 = vadd.xlane.f32.xlu0 %v2008
        %v2010 = vpop.xlane.xlu0 %2009
        %v2011 = vsel %vm1740, %v1922, 0.0
        %2012 = vadd.xlane.f32.xlu0 %v2011
        %v2013 = vpop.xlane.xlu0 %2012
        %v2014 = vsel %vm1740, %v1924, 0.0
        %2015 = vadd.xlane.f32.xlu0 %v2014
        %v2016 = vpop.xlane.xlu0 %2015
        %v2017 = vsel %vm1740, %v1926, 0.0
        %2018 = vadd.xlane.f32.xlu0 %v2017
        %v2019 = vpop.xlane.xlu0 %2018
        %v2020 = vsel %vm1740, %v1928, 0.0
        %2021 = vadd.xlane.f32.xlu0 %v2020
        %v2022 = vpop.xlane.xlu0 %2021
        %v2023 = vsel %vm1740, %v1930, 0.0
        %2024 = vadd.xlane.f32.xlu0 %v2023
        %v2025 = vpop.xlane.xlu0 %2024
        %v2026 = vsel %vm1740, %v1932, 0.0
        %2027 = vadd.xlane.f32.xlu0 %v2026
        %v2028 = vpop.xlane.xlu0 %2027
        %v2029 = vrcp.pop %v1935
        %v2030 = vrcp.pop %v1938
        %v2031 = vrcp.pop %v1941
        %v2032 = vrcp.pop %v1944
        %v2033 = vrcp.pop %v1947
        %v2034 = vrcp.pop %v1950
        %v2035 = vrcp.pop %v1953
        %v2036 = vrcp.pop %v1956
        %v2037 = vrcp.pop %v1959
        %v2038 = vrcp.pop %v1962
        %v2039 = vrcp.pop %v1965
        %v2040 = vrcp.pop %v1968
        %v2041 = vrcp.pop %v1971
        %v2042 = vrcp.pop %v1974
        %v2043 = vrcp.pop %v1977
        %v2044 = vrcp.pop %v1980
        %v2045 = vrcp.pop %v1983
        %v2046 = vrcp.pop %v1986
        %v2047 = vrcp.pop %v1989
        %v2048 = vrcp.pop %v1992
        %v2049 = vrcp.pop %v1995
        %v2050 = vrcp.pop %v1998
        %v2051 = vrcp.pop %v2001
        %v2052 = vrcp.pop %v2004
        %v2053 = vrcp.pop %v2007
        %v2054 = vrcp.pop %v2010
        %v2055 = vrcp.pop %v2013
        %v2056 = vrcp.pop %v2016
        %v2057 = vrcp.pop %v2019
        %v2058 = vrcp.pop %v2022
        %v2059 = vrcp.pop %v2025
        %v2060 = vrcp.pop %v2028
        %v2061 = vmul.f32 %v1935, %v2029
        %v2062 = vmul.f32 %v1938, %v2030
        %v2063 = vmul.f32 %v1941, %v2031
        %v2064 = vmul.f32 %v1944, %v2032
        %v2065 = vmul.f32 %v1947, %v2033
        %v2066 = vmul.f32 %v1950, %v2034
        %v2067 = vmul.f32 %v1953, %v2035
        %v2068 = vmul.f32 %v1956, %v2036
        %v2069 = vmul.f32 %v1959, %v2037
        %v2070 = vmul.f32 %v1962, %v2038
        %v2071 = vmul.f32 %v1965, %v2039
        %v2072 = vmul.f32 %v1968, %v2040
        %v2073 = vmul.f32 %v1971, %v2041
        %v2074 = vmul.f32 %v1974, %v2042
        %v2075 = vmul.f32 %v1977, %v2043
        %v2076 = vmul.f32 %v1980, %v2044
        %v2077 = vmul.f32 %v1983, %v2045
        %v2078 = vmul.f32 %v1986, %v2046
        %v2079 = vmul.f32 %v1989, %v2047
        %v2080 = vmul.f32 %v1992, %v2048
        %v2081 = vmul.f32 %v1995, %v2049
        %v2082 = vmul.f32 %v1998, %v2050
        %v2083 = vmul.f32 %v2001, %v2051
        %v2084 = vmul.f32 %v2004, %v2052
        %v2085 = vmul.f32 %v2007, %v2053
        %v2086 = vmul.f32 %v2010, %v2054
        %v2087 = vmul.f32 %v2013, %v2055
        %v2088 = vmul.f32 %v2016, %v2056
        %v2089 = vmul.f32 %v2019, %v2057
        %v2090 = vmul.f32 %v2022, %v2058
        %v2091 = vmul.f32 %v2025, %v2059
        %v2092 = vmul.f32 %v2028, %v2060
        %v2093 = vsub.f32 2.0, %v2061
        %v2094 = vsub.f32 2.0, %v2062
        %v2095 = vsub.f32 2.0, %v2063
        %v2096 = vsub.f32 2.0, %v2064
        %v2097 = vsub.f32 2.0, %v2065
        %v2098 = vsub.f32 2.0, %v2066
        %v2099 = vsub.f32 2.0, %v2067
        %v2100 = vsub.f32 2.0, %v2068
        %v2101 = vsub.f32 2.0, %v2069
        %v2102 = vsub.f32 2.0, %v2070
        %v2103 = vsub.f32 2.0, %v2071
        %v2104 = vsub.f32 2.0, %v2072
        %v2105 = vsub.f32 2.0, %v2073
        %v2106 = vsub.f32 2.0, %v2074
        %v2107 = vsub.f32 2.0, %v2075
        %v2108 = vsub.f32 2.0, %v2076
        %v2109 = vsub.f32 2.0, %v2077
        %v2110 = vsub.f32 2.0, %v2078
        %v2111 = vsub.f32 2.0, %v2079
        %v2112 = vsub.f32 2.0, %v2080
        %v2113 = vsub.f32 2.0, %v2081
        %v2114 = vsub.f32 2.0, %v2082
        %v2115 = vsub.f32 2.0, %v2083
        %v2116 = vsub.f32 2.0, %v2084
        %v2117 = vsub.f32 2.0, %v2085
        %v2118 = vsub.f32 2.0, %v2086
        %v2119 = vsub.f32 2.0, %v2087
        %v2120 = vsub.f32 2.0, %v2088
        %v2121 = vsub.f32 2.0, %v2089
        %v2122 = vsub.f32 2.0, %v2090
        %v2123 = vsub.f32 2.0, %v2091
        %v2124 = vsub.f32 2.0, %v2092
        %v2125 = vmul.f32 %v2029, %v2093
        %v2126 = vmul.f32 %v2030, %v2094
        %v2127 = vmul.f32 %v2031, %v2095
        %v2128 = vmul.f32 %v2032, %v2096
        %v2129 = vmul.f32 %v2033, %v2097
        %v2130 = vmul.f32 %v2034, %v2098
        %v2131 = vmul.f32 %v2035, %v2099
        %v2132 = vmul.f32 %v2036, %v2100
        %v2133 = vmul.f32 %v2037, %v2101
        %v2134 = vmul.f32 %v2038, %v2102
        %v2135 = vmul.f32 %v2039, %v2103
        %v2136 = vmul.f32 %v2040, %v2104
        %v2137 = vmul.f32 %v2041, %v2105
        %v2138 = vmul.f32 %v2042, %v2106
        %v2139 = vmul.f32 %v2043, %v2107
        %v2140 = vmul.f32 %v2044, %v2108
        %v2141 = vmul.f32 %v2045, %v2109
        %v2142 = vmul.f32 %v2046, %v2110
        %v2143 = vmul.f32 %v2047, %v2111
        %v2144 = vmul.f32 %v2048, %v2112
        %v2145 = vmul.f32 %v2049, %v2113
        %v2146 = vmul.f32 %v2050, %v2114
        %v2147 = vmul.f32 %v2051, %v2115
        %v2148 = vmul.f32 %v2052, %v2116
        %v2149 = vmul.f32 %v2053, %v2117
        %v2150 = vmul.f32 %v2054, %v2118
        %v2151 = vmul.f32 %v2055, %v2119
        %v2152 = vmul.f32 %v2056, %v2120
        %v2153 = vmul.f32 %v2057, %v2121
        %v2154 = vmul.f32 %v2058, %v2122
        %v2155 = vmul.f32 %v2059, %v2123
        %v2156 = vmul.f32 %v2060, %v2124
        %v2157 = vmul.f32 %v1870, %v2125
        %v2158 = vmul.f32 %v1872, %v2126
        %v2159 = vmul.f32 %v1874, %v2127
        %v2160 = vmul.f32 %v1876, %v2128
        %v2161 = vmul.f32 %v1878, %v2129
        %v2162 = vmul.f32 %v1880, %v2130
        %v2163 = vmul.f32 %v1882, %v2131
        %v2164 = vmul.f32 %v1884, %v2132
        %v2165 = vmul.f32 %v1886, %v2133
        %v2166 = vmul.f32 %v1888, %v2134
        %v2167 = vmul.f32 %v1890, %v2135
        %v2168 = vmul.f32 %v1892, %v2136
        %v2169 = vmul.f32 %v1894, %v2137
        %v2170 = vmul.f32 %v1896, %v2138
        %v2171 = vmul.f32 %v1898, %v2139
        %v2172 = vmul.f32 %v1900, %v2140
        %v2173 = vmul.f32 %v1902, %v2141
        %v2174 = vmul.f32 %v1904, %v2142
        %v2175 = vmul.f32 %v1906, %v2143
        %v2176 = vmul.f32 %v1908, %v2144
        %v2177 = vmul.f32 %v1910, %v2145
        %v2178 = vmul.f32 %v1912, %v2146
        %v2179 = vmul.f32 %v1914, %v2147
        %v2180 = vmul.f32 %v1916, %v2148
        %v2181 = vmul.f32 %v1918, %v2149
        %v2182 = vmul.f32 %v1920, %v2150
        %v2183 = vmul.f32 %v1922, %v2151
        %v2184 = vmul.f32 %v1924, %v2152
        %v2185 = vmul.f32 %v1926, %v2153
        %v2186 = vmul.f32 %v1928, %v2154
        %v2187 = vmul.f32 %v1930, %v2155
        %v2188 = vmul.f32 %v1932, %v2156
        %v2190 = vsel %vm1740, %v2157, 0
        %v2193 = vsel %vm1740, %v2158, 0
        %v2196 = vsel %vm1740, %v2159, 0
        %v2199 = vsel %vm1740, %v2160, 0
        %v2202 = vsel %vm1740, %v2161, 0
        %v2205 = vsel %vm1740, %v2162, 0
        %v2208 = vsel %vm1740, %v2163, 0
        %v2211 = vsel %vm1740, %v2164, 0
        %2213 = vmatprep.subr.mxu0 0.0
        %2214 = vmatpush1.msra.mxu0 0.0
        %2215 = vmatprep.subr.mxu0 0.0
        %2216 = vmatpush1.msra.mxu0 0.0
        %2217 = vmatprep.subr.mxu0 0.0
        %2218 = vmatpush1.msra.mxu0 0.0
        %2219 = vmatprep.subr.mxu0 0.0
        %2220 = vmatpush1.msra.mxu0 0.0
        %2221 = vmatprep.subr.mxu0 0.0
        %2222 = vmatpush1.msra.mxu0 0.0
        %2223 = vmatprep.subr.mxu0 0.0
        %2224 = vmatpush1.msra.mxu0 0.0
        %2225 = vmatprep.subr.mxu0 0.0
        %2226 = vmatpush1.msra.mxu0 0.0
        %2227 = vmatprep.subr.mxu0 0.0
        %2228 = vmatpush1.msra.mxu0 0.0
        %2229 = vmatprep.subr.mxu0 0.0
        %2230 = vmatpush1.msra.mxu0 %v892
        %2231 = vmatprep.subr.mxu0 0.0
        %2232 = vmatpush1.msra.mxu0 %v887
        %2233 = vmatprep.subr.mxu0 0.0
        %2234 = vmatpush1.msra.mxu0 %v882
        %2235 = vmatprep.subr.mxu0 0.0
        %2236 = vmatpush1.msra.mxu0 %v877
        %2237 = vmatprep.subr.mxu0 0.0
        %2238 = vmatpush1.msra.mxu0 %v872
        %2239 = vmatprep.subr.mxu0 0.0
        %2240 = vmatpush1.msra.mxu0 %v867
        %2241 = vmatprep.subr.mxu0 0.0
        %2242 = vmatpush1.msra.mxu0 %v862
        %2243 = vmatprep.subr.mxu0 0.0
        %2244 = vmatpush1.msra.mxu0 %v857
        %2245 = vmatprep.subr.mxu0 0.0
        %2246 = vmatpush2.msra.mxu0 0.0
        %2247 = vmatprep.subr.mxu0 0.0
        %2248 = vmatpush2.msra.mxu0 0.0
        %2249 = vmatprep.subr.mxu0 0.0
        %2250 = vmatpush2.msra.mxu0 0.0
        %2251 = vmatprep.subr.mxu0 0.0
        %2252 = vmatpush2.msra.mxu0 0.0
        %2253 = vmatprep.subr.mxu0 0.0
        %2254 = vmatpush2.msra.mxu0 0.0
        %2255 = vmatprep.subr.mxu0 0.0
        %2256 = vmatpush2.msra.mxu0 0.0
        %2257 = vmatprep.subr.mxu0 0.0
        %2258 = vmatpush2.msra.mxu0 0.0
        %2259 = vmatprep.subr.mxu0 0.0
        %2260 = vmatpush2.msra.mxu0 0.0
        %2261 = vmatprep.subr.mxu0 0.0
        %2262 = vmatpush2.msra.mxu0 0.0
        %2263 = vmatprep.subr.mxu0 0.0
        %2264 = vmatpush2.msra.mxu0 0.0
        %2265 = vmatprep.subr.mxu0 0.0
        %2266 = vmatpush2.msra.mxu0 0.0
        %2267 = vmatprep.subr.mxu0 0.0
        %2268 = vmatpush2.msra.mxu0 0.0
        %2269 = vmatprep.subr.mxu0 0.0
        %2270 = vmatpush2.msra.mxu0 0.0
        %2271 = vmatprep.subr.mxu0 0.0
        %2272 = vmatpush2.msra.mxu0 0.0
        %2273 = vmatprep.subr.mxu0 0.0
        %2274 = vmatpush2.msra.mxu0 0.0
        %2275 = vmatprep.subr.mxu0 0.0
        %2276 = vmatpush2.msra.mxu0 0.0
        %2277 = vmatprep.mubr.f32.mxu0 0.0
        %2278 = vmatmul.mubr.f32.gmra.mxu0 %v2190
        %v2279 = vpop.f32.mrf.mxu0
        %v2280 = vadd.f32 0.0, %v2279
        %v2281 = vpop.f32.mrf.mxu0
        %2282 = vmatprep.mubr.f32.mxu0 0.0
        %2283 = vmatmul.mubr.f32.gmra.mxu0 %v2193
        %v2284 = vpop.f32.mrf.mxu0
        %v2285 = vadd.f32 0.0, %v2284
        %v2286 = vpop.f32.mrf.mxu0
        %2287 = vmatprep.mubr.f32.mxu0 0.0
        %2288 = vmatmul.mubr.f32.gmra.mxu0 %v2196
        %v2289 = vpop.f32.mrf.mxu0
        %v2290 = vadd.f32 0.0, %v2289
        %v2291 = vpop.f32.mrf.mxu0
        %2292 = vmatprep.mubr.f32.mxu0 0.0
        %2293 = vmatmul.mubr.f32.gmra.mxu0 %v2199
        %v2294 = vpop.f32.mrf.mxu0
        %v2295 = vadd.f32 0.0, %v2294
        %v2296 = vpop.f32.mrf.mxu0
        %2297 = vmatprep.mubr.f32.mxu0 0.0
        %2298 = vmatmul.mubr.f32.gmra.mxu0 %v2202
        %v2299 = vpop.f32.mrf.mxu0
        %v2300 = vadd.f32 0.0, %v2299
        %v2301 = vpop.f32.mrf.mxu0
        %2302 = vmatprep.mubr.f32.mxu0 0.0
        %2303 = vmatmul.mubr.f32.gmra.mxu0 %v2205
        %v2304 = vpop.f32.mrf.mxu0
        %v2305 = vadd.f32 0.0, %v2304
        %v2306 = vpop.f32.mrf.mxu0
        %2307 = vmatprep.mubr.f32.mxu0 0.0
        %2308 = vmatmul.mubr.f32.gmra.mxu0 %v2208
        %v2309 = vpop.f32.mrf.mxu0
        %v2310 = vadd.f32 0.0, %v2309
        %v2311 = vpop.f32.mrf.mxu0
        %2312 = vmatprep.mubr.f32.mxu0 0.0
        %2313 = vmatmul.mubr.f32.gmra.mxu0 %v2211
        %v2314 = vpop.f32.mrf.mxu0
        %v2315 = vadd.f32 0.0, %v2314
        %v2316 = vpop.f32.mrf.mxu0
        %2317 = vdwg.mxu0
        %v2319 = vsel %vm1740, %v2165, 0
        %v2322 = vsel %vm1740, %v2166, 0
        %v2325 = vsel %vm1740, %v2167, 0
        %v2328 = vsel %vm1740, %v2168, 0
        %v2331 = vsel %vm1740, %v2169, 0
        %v2334 = vsel %vm1740, %v2170, 0
        %v2337 = vsel %vm1740, %v2171, 0
        %v2340 = vsel %vm1740, %v2172, 0
        %2342 = vmatprep.subr.mxu0 0.0
        %2343 = vmatpush1.msra.mxu0 0.0
        %2344 = vmatprep.subr.mxu0 0.0
        %2345 = vmatpush1.msra.mxu0 0.0
        %2346 = vmatprep.subr.mxu0 0.0
        %2347 = vmatpush1.msra.mxu0 0.0
        %2348 = vmatprep.subr.mxu0 0.0
        %2349 = vmatpush1.msra.mxu0 0.0
        %2350 = vmatprep.subr.mxu0 0.0
        %2351 = vmatpush1.msra.mxu0 0.0
        %2352 = vmatprep.subr.mxu0 0.0
        %2353 = vmatpush1.msra.mxu0 0.0
        %2354 = vmatprep.subr.mxu0 0.0
        %2355 = vmatpush1.msra.mxu0 0.0
        %2356 = vmatprep.subr.mxu0 0.0
        %2357 = vmatpush1.msra.mxu0 0.0
        %2358 = vmatprep.subr.mxu0 0.0
        %2359 = vmatpush1.msra.mxu0 %v1030
        %2360 = vmatprep.subr.mxu0 0.0
        %2361 = vmatpush1.msra.mxu0 %v1028
        %2362 = vmatprep.subr.mxu0 0.0
        %2363 = vmatpush1.msra.mxu0 %v1026
        %2364 = vmatprep.subr.mxu0 0.0
        %2365 = vmatpush1.msra.mxu0 %v1024
        %2366 = vmatprep.subr.mxu0 0.0
        %2367 = vmatpush1.msra.mxu0 %v1022
        %2368 = vmatprep.subr.mxu0 0.0
        %2369 = vmatpush1.msra.mxu0 %v1020
        %2370 = vmatprep.subr.mxu0 0.0
        %2371 = vmatpush1.msra.mxu0 %v1018
        %2372 = vmatprep.subr.mxu0 0.0
        %2373 = vmatpush1.msra.mxu0 %v1016
        %2374 = vmatprep.subr.mxu0 0.0
        %2375 = vmatpush2.msra.mxu0 0.0
        %2376 = vmatprep.subr.mxu0 0.0
        %2377 = vmatpush2.msra.mxu0 0.0
        %2378 = vmatprep.subr.mxu0 0.0
        %2379 = vmatpush2.msra.mxu0 0.0
        %2380 = vmatprep.subr.mxu0 0.0
        %2381 = vmatpush2.msra.mxu0 0.0
        %2382 = vmatprep.subr.mxu0 0.0
        %2383 = vmatpush2.msra.mxu0 0.0
        %2384 = vmatprep.subr.mxu0 0.0
        %2385 = vmatpush2.msra.mxu0 0.0
        %2386 = vmatprep.subr.mxu0 0.0
        %2387 = vmatpush2.msra.mxu0 0.0
        %2388 = vmatprep.subr.mxu0 0.0
        %2389 = vmatpush2.msra.mxu0 0.0
        %2390 = vmatprep.subr.mxu0 0.0
        %2391 = vmatpush2.msra.mxu0 0.0
        %2392 = vmatprep.subr.mxu0 0.0
        %2393 = vmatpush2.msra.mxu0 0.0
        %2394 = vmatprep.subr.mxu0 0.0
        %2395 = vmatpush2.msra.mxu0 0.0
        %2396 = vmatprep.subr.mxu0 0.0
        %2397 = vmatpush2.msra.mxu0 0.0
        %2398 = vmatprep.subr.mxu0 0.0
        %2399 = vmatpush2.msra.mxu0 0.0
        %2400 = vmatprep.subr.mxu0 0.0
        %2401 = vmatpush2.msra.mxu0 0.0
        %2402 = vmatprep.subr.mxu0 0.0
        %2403 = vmatpush2.msra.mxu0 0.0
        %2404 = vmatprep.subr.mxu0 0.0
        %2405 = vmatpush2.msra.mxu0 0.0
        %2406 = vmatprep.mubr.f32.mxu0 0.0
        %2407 = vmatmul.mubr.f32.gmra.mxu0 %v2319
        %v2408 = vpop.f32.mrf.mxu0
        %v2409 = vadd.f32 0.0, %v2408
        %v2410 = vpop.f32.mrf.mxu0
        %2411 = vmatprep.mubr.f32.mxu0 0.0
        %2412 = vmatmul.mubr.f32.gmra.mxu0 %v2322
        %v2413 = vpop.f32.mrf.mxu0
        %v2414 = vadd.f32 0.0, %v2413
        %v2415 = vpop.f32.mrf.mxu0
        %2416 = vmatprep.mubr.f32.mxu0 0.0
        %2417 = vmatmul.mubr.f32.gmra.mxu0 %v2325
        %v2418 = vpop.f32.mrf.mxu0
        %v2419 = vadd.f32 0.0, %v2418
        %v2420 = vpop.f32.mrf.mxu0
        %2421 = vmatprep.mubr.f32.mxu0 0.0
        %2422 = vmatmul.mubr.f32.gmra.mxu0 %v2328
        %v2423 = vpop.f32.mrf.mxu0
        %v2424 = vadd.f32 0.0, %v2423
        %v2425 = vpop.f32.mrf.mxu0
        %2426 = vmatprep.mubr.f32.mxu0 0.0
        %2427 = vmatmul.mubr.f32.gmra.mxu0 %v2331
        %v2428 = vpop.f32.mrf.mxu0
        %v2429 = vadd.f32 0.0, %v2428
        %v2430 = vpop.f32.mrf.mxu0
        %2431 = vmatprep.mubr.f32.mxu0 0.0
        %2432 = vmatmul.mubr.f32.gmra.mxu0 %v2334
        %v2433 = vpop.f32.mrf.mxu0
        %v2434 = vadd.f32 0.0, %v2433
        %v2435 = vpop.f32.mrf.mxu0
        %2436 = vmatprep.mubr.f32.mxu0 0.0
        %2437 = vmatmul.mubr.f32.gmra.mxu0 %v2337
        %v2438 = vpop.f32.mrf.mxu0
        %v2439 = vadd.f32 0.0, %v2438
        %v2440 = vpop.f32.mrf.mxu0
        %2441 = vmatprep.mubr.f32.mxu0 0.0
        %2442 = vmatmul.mubr.f32.gmra.mxu0 %v2340
        %v2443 = vpop.f32.mrf.mxu0
        %v2444 = vadd.f32 0.0, %v2443
        %v2445 = vpop.f32.mrf.mxu0
        %2446 = vdwg.mxu0
        %v2448 = vsel %vm1740, %v2173, 0
        %v2451 = vsel %vm1740, %v2174, 0
        %v2454 = vsel %vm1740, %v2175, 0
        %v2457 = vsel %vm1740, %v2176, 0
        %v2460 = vsel %vm1740, %v2177, 0
        %v2463 = vsel %vm1740, %v2178, 0
        %v2466 = vsel %vm1740, %v2179, 0
        %v2469 = vsel %vm1740, %v2180, 0
        %2471 = vmatprep.subr.mxu0 0.0
        %2472 = vmatpush1.msra.mxu0 0.0
        %2473 = vmatprep.subr.mxu0 0.0
        %2474 = vmatpush1.msra.mxu0 0.0
        %2475 = vmatprep.subr.mxu0 0.0
        %2476 = vmatpush1.msra.mxu0 0.0
        %2477 = vmatprep.subr.mxu0 0.0
        %2478 = vmatpush1.msra.mxu0 0.0
        %2479 = vmatprep.subr.mxu0 0.0
        %2480 = vmatpush1.msra.mxu0 0.0
        %2481 = vmatprep.subr.mxu0 0.0
        %2482 = vmatpush1.msra.mxu0 0.0
        %2483 = vmatprep.subr.mxu0 0.0
        %2484 = vmatpush1.msra.mxu0 0.0
        %2485 = vmatprep.subr.mxu0 0.0
        %2486 = vmatpush1.msra.mxu0 0.0
        %2487 = vmatprep.subr.mxu0 0.0
        %2488 = vmatpush1.msra.mxu0 %v1054
        %2489 = vmatprep.subr.mxu0 0.0
        %2490 = vmatpush1.msra.mxu0 %v1052
        %2491 = vmatprep.subr.mxu0 0.0
        %2492 = vmatpush1.msra.mxu0 %v1050
        %2493 = vmatprep.subr.mxu0 0.0
        %2494 = vmatpush1.msra.mxu0 %v1048
        %2495 = vmatprep.subr.mxu0 0.0
        %2496 = vmatpush1.msra.mxu0 %v1046
        %2497 = vmatprep.subr.mxu0 0.0
        %2498 = vmatpush1.msra.mxu0 %v1044
        %2499 = vmatprep.subr.mxu0 0.0
        %2500 = vmatpush1.msra.mxu0 %v1042
        %2501 = vmatprep.subr.mxu0 0.0
        %2502 = vmatpush1.msra.mxu0 %v1040
        %2503 = vmatprep.subr.mxu0 0.0
        %2504 = vmatpush2.msra.mxu0 0.0
        %2505 = vmatprep.subr.mxu0 0.0
        %2506 = vmatpush2.msra.mxu0 0.0
        %2507 = vmatprep.subr.mxu0 0.0
        %2508 = vmatpush2.msra.mxu0 0.0
        %2509 = vmatprep.subr.mxu0 0.0
        %2510 = vmatpush2.msra.mxu0 0.0
        %2511 = vmatprep.subr.mxu0 0.0
        %2512 = vmatpush2.msra.mxu0 0.0
        %2513 = vmatprep.subr.mxu0 0.0
        %2514 = vmatpush2.msra.mxu0 0.0
        %2515 = vmatprep.subr.mxu0 0.0
        %2516 = vmatpush2.msra.mxu0 0.0
        %2517 = vmatprep.subr.mxu0 0.0
        %2518 = vmatpush2.msra.mxu0 0.0
        %2519 = vmatprep.subr.mxu0 0.0
        %2520 = vmatpush2.msra.mxu0 0.0
        %2521 = vmatprep.subr.mxu0 0.0
        %2522 = vmatpush2.msra.mxu0 0.0
        %2523 = vmatprep.subr.mxu0 0.0
        %2524 = vmatpush2.msra.mxu0 0.0
        %2525 = vmatprep.subr.mxu0 0.0
        %2526 = vmatpush2.msra.mxu0 0.0
        %2527 = vmatprep.subr.mxu0 0.0
        %2528 = vmatpush2.msra.mxu0 0.0
        %2529 = vmatprep.subr.mxu0 0.0
        %2530 = vmatpush2.msra.mxu0 0.0
        %2531 = vmatprep.subr.mxu0 0.0
        %2532 = vmatpush2.msra.mxu0 0.0
        %2533 = vmatprep.subr.mxu0 0.0
        %2534 = vmatpush2.msra.mxu0 0.0
        %2535 = vmatprep.mubr.f32.mxu0 0.0
        %2536 = vmatmul.mubr.f32.gmra.mxu0 %v2448
        %v2537 = vpop.f32.mrf.mxu0
        %v2538 = vadd.f32 0.0, %v2537
        %v2539 = vpop.f32.mrf.mxu0
        %2540 = vmatprep.mubr.f32.mxu0 0.0
        %2541 = vmatmul.mubr.f32.gmra.mxu0 %v2451
        %v2542 = vpop.f32.mrf.mxu0
        %v2543 = vadd.f32 0.0, %v2542
        %v2544 = vpop.f32.mrf.mxu0
        %2545 = vmatprep.mubr.f32.mxu0 0.0
        %2546 = vmatmul.mubr.f32.gmra.mxu0 %v2454
        %v2547 = vpop.f32.mrf.mxu0
        %v2548 = vadd.f32 0.0, %v2547
        %v2549 = vpop.f32.mrf.mxu0
        %2550 = vmatprep.mubr.f32.mxu0 0.0
        %2551 = vmatmul.mubr.f32.gmra.mxu0 %v2457
        %v2552 = vpop.f32.mrf.mxu0
        %v2553 = vadd.f32 0.0, %v2552
        %v2554 = vpop.f32.mrf.mxu0
        %2555 = vmatprep.mubr.f32.mxu0 0.0
        %2556 = vmatmul.mubr.f32.gmra.mxu0 %v2460
        %v2557 = vpop.f32.mrf.mxu0
        %v2558 = vadd.f32 0.0, %v2557
        %v2559 = vpop.f32.mrf.mxu0
        %2560 = vmatprep.mubr.f32.mxu0 0.0
        %2561 = vmatmul.mubr.f32.gmra.mxu0 %v2463
        %v2562 = vpop.f32.mrf.mxu0
        %v2563 = vadd.f32 0.0, %v2562
        %v2564 = vpop.f32.mrf.mxu0
        %2565 = vmatprep.mubr.f32.mxu0 0.0
        %2566 = vmatmul.mubr.f32.gmra.mxu0 %v2466
        %v2567 = vpop.f32.mrf.mxu0
        %v2568 = vadd.f32 0.0, %v2567
        %v2569 = vpop.f32.mrf.mxu0
        %2570 = vmatprep.mubr.f32.mxu0 0.0
        %2571 = vmatmul.mubr.f32.gmra.mxu0 %v2469
        %v2572 = vpop.f32.mrf.mxu0
        %v2573 = vadd.f32 0.0, %v2572
        %v2574 = vpop.f32.mrf.mxu0
        %2575 = vdwg.mxu0
        %v2577 = vsel %vm1740, %v2181, 0
        %v2580 = vsel %vm1740, %v2182, 0
        %v2583 = vsel %vm1740, %v2183, 0
        %v2586 = vsel %vm1740, %v2184, 0
        %v2589 = vsel %vm1740, %v2185, 0
        %v2592 = vsel %vm1740, %v2186, 0
        %v2595 = vsel %vm1740, %v2187, 0
        %v2598 = vsel %vm1740, %v2188, 0
        %2600 = vmatprep.subr.mxu0 0.0
        %2601 = vmatpush1.msra.mxu0 0.0
        %2602 = vmatprep.subr.mxu0 0.0
        %2603 = vmatpush1.msra.mxu0 0.0
        %2604 = vmatprep.subr.mxu0 0.0
        %2605 = vmatpush1.msra.mxu0 0.0
        %2606 = vmatprep.subr.mxu0 0.0
        %2607 = vmatpush1.msra.mxu0 0.0
        %2608 = vmatprep.subr.mxu0 0.0
        %2609 = vmatpush1.msra.mxu0 0.0
        %2610 = vmatprep.subr.mxu0 0.0
        %2611 = vmatpush1.msra.mxu0 0.0
        %2612 = vmatprep.subr.mxu0 0.0
        %2613 = vmatpush1.msra.mxu0 0.0
        %2614 = vmatprep.subr.mxu0 0.0
        %2615 = vmatpush1.msra.mxu0 0.0
        %2616 = vmatprep.subr.mxu0 0.0
        %2617 = vmatpush1.msra.mxu0 %v1078
        %2618 = vmatprep.subr.mxu0 0.0
        %2619 = vmatpush1.msra.mxu0 %v1076
        %2620 = vmatprep.subr.mxu0 0.0
        %2621 = vmatpush1.msra.mxu0 %v1074
        %2622 = vmatprep.subr.mxu0 0.0
        %2623 = vmatpush1.msra.mxu0 %v1072
        %2624 = vmatprep.subr.mxu0 0.0
        %2625 = vmatpush1.msra.mxu0 %v1070
        %2626 = vmatprep.subr.mxu0 0.0
        %2627 = vmatpush1.msra.mxu0 %v1068
        %2628 = vmatprep.subr.mxu0 0.0
        %2629 = vmatpush1.msra.mxu0 %v1066
        %2630 = vmatprep.subr.mxu0 0.0
        %2631 = vmatpush1.msra.mxu0 %v1064
        %2632 = vmatprep.subr.mxu0 0.0
        %2633 = vmatpush2.msra.mxu0 0.0
        %2634 = vmatprep.subr.mxu0 0.0
        %2635 = vmatpush2.msra.mxu0 0.0
        %2636 = vmatprep.subr.mxu0 0.0
        %2637 = vmatpush2.msra.mxu0 0.0
        %2638 = vmatprep.subr.mxu0 0.0
        %2639 = vmatpush2.msra.mxu0 0.0
        %2640 = vmatprep.subr.mxu0 0.0
        %2641 = vmatpush2.msra.mxu0 0.0
        %2642 = vmatprep.subr.mxu0 0.0
        %2643 = vmatpush2.msra.mxu0 0.0
        %2644 = vmatprep.subr.mxu0 0.0
        %2645 = vmatpush2.msra.mxu0 0.0
        %2646 = vmatprep.subr.mxu0 0.0
        %2647 = vmatpush2.msra.mxu0 0.0
        %2648 = vmatprep.subr.mxu0 0.0
        %2649 = vmatpush2.msra.mxu0 0.0
        %2650 = vmatprep.subr.mxu0 0.0
        %2651 = vmatpush2.msra.mxu0 0.0
        %2652 = vmatprep.subr.mxu0 0.0
        %2653 = vmatpush2.msra.mxu0 0.0
        %2654 = vmatprep.subr.mxu0 0.0
        %2655 = vmatpush2.msra.mxu0 0.0
        %2656 = vmatprep.subr.mxu0 0.0
        %2657 = vmatpush2.msra.mxu0 0.0
        %2658 = vmatprep.subr.mxu0 0.0
        %2659 = vmatpush2.msra.mxu0 0.0
        %2660 = vmatprep.subr.mxu0 0.0
        %2661 = vmatpush2.msra.mxu0 0.0
        %2662 = vmatprep.subr.mxu0 0.0
        %2663 = vmatpush2.msra.mxu0 0.0
        %2664 = vmatprep.mubr.f32.mxu0 0.0
        %2665 = vmatmul.mubr.f32.gmra.mxu0 %v2577
        %v2666 = vpop.f32.mrf.mxu0
        %v2667 = vadd.f32 0.0, %v2666
        %v2668 = vpop.f32.mrf.mxu0
        %2669 = vmatprep.mubr.f32.mxu0 0.0
        %2670 = vmatmul.mubr.f32.gmra.mxu0 %v2580
        %v2671 = vpop.f32.mrf.mxu0
        %v2672 = vadd.f32 0.0, %v2671
        %v2673 = vpop.f32.mrf.mxu0
        %2674 = vmatprep.mubr.f32.mxu0 0.0
        %2675 = vmatmul.mubr.f32.gmra.mxu0 %v2583
        %v2676 = vpop.f32.mrf.mxu0
        %v2677 = vadd.f32 0.0, %v2676
        %v2678 = vpop.f32.mrf.mxu0
        %2679 = vmatprep.mubr.f32.mxu0 0.0
        %2680 = vmatmul.mubr.f32.gmra.mxu0 %v2586
        %v2681 = vpop.f32.mrf.mxu0
        %v2682 = vadd.f32 0.0, %v2681
        %v2683 = vpop.f32.mrf.mxu0
        %2684 = vmatprep.mubr.f32.mxu0 0.0
        %2685 = vmatmul.mubr.f32.gmra.mxu0 %v2589
        %v2686 = vpop.f32.mrf.mxu0
        %v2687 = vadd.f32 0.0, %v2686
        %v2688 = vpop.f32.mrf.mxu0
        %2689 = vmatprep.mubr.f32.mxu0 0.0
        %2690 = vmatmul.mubr.f32.gmra.mxu0 %v2592
        %v2691 = vpop.f32.mrf.mxu0
        %v2692 = vadd.f32 0.0, %v2691
        %v2693 = vpop.f32.mrf.mxu0
        %2694 = vmatprep.mubr.f32.mxu0 0.0
        %2695 = vmatmul.mubr.f32.gmra.mxu0 %v2595
        %v2696 = vpop.f32.mrf.mxu0
        %v2697 = vadd.f32 0.0, %v2696
        %v2698 = vpop.f32.mrf.mxu0
        %2699 = vmatprep.mubr.f32.mxu0 0.0
        %2700 = vmatmul.mubr.f32.gmra.mxu0 %v2598
        %v2701 = vpop.f32.mrf.mxu0
        %v2702 = vadd.f32 0.0, %v2701
        %v2703 = vpop.f32.mrf.mxu0
        %2704 = vdwg.mxu0
        %2713 = vrot.lane.b32.xlu0 %v2409, 8
        %v2714 = vpop.permute.xlu0 %2713
        %2715 = vrot.lane.b32.xlu0 %v2414, 8
        %v2716 = vpop.permute.xlu0 %2715
        %2717 = vrot.lane.b32.xlu0 %v2419, 8
        %v2718 = vpop.permute.xlu0 %2717
        %2719 = vrot.lane.b32.xlu0 %v2424, 8
        %v2720 = vpop.permute.xlu0 %2719
        %2721 = vrot.lane.b32.xlu0 %v2429, 8
        %v2722 = vpop.permute.xlu0 %2721
        %2723 = vrot.lane.b32.xlu0 %v2434, 8
        %v2724 = vpop.permute.xlu0 %2723
        %2725 = vrot.lane.b32.xlu0 %v2439, 8
        %v2726 = vpop.permute.xlu0 %2725
        %2727 = vrot.lane.b32.xlu0 %v2444, 8
        %v2728 = vpop.permute.xlu0 %2727
        %2745 = vrot.lane.b32.xlu0 %v2538, 16
        %v2746 = vpop.permute.xlu0 %2745
        %2747 = vrot.lane.b32.xlu0 %v2543, 16
        %v2748 = vpop.permute.xlu0 %2747
        %2749 = vrot.lane.b32.xlu0 %v2548, 16
        %v2750 = vpop.permute.xlu0 %2749
        %2751 = vrot.lane.b32.xlu0 %v2553, 16
        %v2752 = vpop.permute.xlu0 %2751
        %2753 = vrot.lane.b32.xlu0 %v2558, 16
        %v2754 = vpop.permute.xlu0 %2753
        %2755 = vrot.lane.b32.xlu0 %v2563, 16
        %v2756 = vpop.permute.xlu0 %2755
        %2757 = vrot.lane.b32.xlu0 %v2568, 16
        %v2758 = vpop.permute.xlu0 %2757
        %2759 = vrot.lane.b32.xlu0 %v2573, 16
        %v2760 = vpop.permute.xlu0 %2759
        %2777 = vrot.lane.b32.xlu0 %v2667, 24
        %v2778 = vpop.permute.xlu0 %2777
        %2779 = vrot.lane.b32.xlu0 %v2672, 24
        %v2780 = vpop.permute.xlu0 %2779
        %2781 = vrot.lane.b32.xlu0 %v2677, 24
        %v2782 = vpop.permute.xlu0 %2781
        %2783 = vrot.lane.b32.xlu0 %v2682, 24
        %v2784 = vpop.permute.xlu0 %2783
        %2785 = vrot.lane.b32.xlu0 %v2687, 24
        %v2786 = vpop.permute.xlu0 %2785
        %2787 = vrot.lane.b32.xlu0 %v2692, 24
        %v2788 = vpop.permute.xlu0 %2787
        %2789 = vrot.lane.b32.xlu0 %v2697, 24
        %v2790 = vpop.permute.xlu0 %2789
        %2791 = vrot.lane.b32.xlu0 %v2702, 24
        %v2792 = vpop.permute.xlu0 %2791
        %v2801 = vsel %vm1087, %v2280, %v2714
        %v2802 = vsel %vm1087, %v2285, %v2716
        %v2803 = vsel %vm1087, %v2290, %v2718
        %v2804 = vsel %vm1087, %v2295, %v2720
        %v2805 = vsel %vm1087, %v2300, %v2722
        %v2806 = vsel %vm1087, %v2305, %v2724
        %v2807 = vsel %vm1087, %v2310, %v2726
        %v2808 = vsel %vm1087, %v2315, %v2728
        %vm2809 = vcmask 130048
        %v2810 = vsel %vm2809, %v2801, %v2746
        %v2811 = vsel %vm2809, %v2802, %v2748
        %v2812 = vsel %vm2809, %v2803, %v2750
        %v2813 = vsel %vm2809, %v2804, %v2752
        %v2814 = vsel %vm2809, %v2805, %v2754
        %v2815 = vsel %vm2809, %v2806, %v2756
        %v2816 = vsel %vm2809, %v2807, %v2758
        %v2817 = vsel %vm2809, %v2808, %v2760
        %vm2818 = vcmask 195584
        %v2819 = vsel %vm2818, %v2810, %v2778
        %v2820 = vsel %vm2818, %v2811, %v2780
        %v2821 = vsel %vm2818, %v2812, %v2782
        %v2822 = vsel %vm2818, %v2813, %v2784
        %v2823 = vsel %vm2818, %v2814, %v2786
        %v2824 = vsel %vm2818, %v2815, %v2788
        %v2825 = vsel %vm2818, %v2816, %v2790
        %v2826 = vsel %vm2818, %v2817, %v2792
        %v2827 = vld [vmem:[#allocation7] sm:$0xff]
        %v2828 = vld [vmem:[#allocation7 + $0x8] sm:$0xff]
        %v2829 = vld [vmem:[#allocation7 + $0x10] sm:$0xff]
        %v2830 = vld [vmem:[#allocation7 + $0x18] sm:$0xff]
        %v2831 = vld [vmem:[%s6] sm:$0x1]
        %v2833 = vlaneseq
        %v2834 = vshrl.u32 %v2833, 7
        %v2835 = vsub.s32 0, %v2834
        %v2836 = vrot.slane %v2831, %v2835
        %vm2838 = vcmask 261120
        %v2840 = vsel %vm2838, %v2819, 0
        %v2843 = vsel %vm2838, %v2820, 0
        %v2846 = vsel %vm2838, %v2821, 0
        %v2849 = vsel %vm2838, %v2822, 0
        %v2852 = vsel %vm2838, %v2823, 0
        %v2855 = vsel %vm2838, %v2824, 0
        %v2858 = vsel %vm2838, %v2825, 0
        %v2861 = vsel %vm2838, %v2826, 0
        %2863 = vmatprep.subr.mxu0 0.0
        %2864 = vmatpush1.msra.mxu0 0.0
        %2865 = vmatprep.subr.mxu0 0.0
        %2866 = vmatpush1.msra.mxu0 0.0
        %2867 = vmatprep.subr.mxu0 0.0
        %2868 = vmatpush1.msra.mxu0 0.0
        %2869 = vmatprep.subr.mxu0 0.0
        %2870 = vmatpush1.msra.mxu0 0.0
        %2871 = vmatprep.subr.mxu0 0.0
        %2872 = vmatpush1.msra.mxu0 0.0
        %2873 = vmatprep.subr.mxu0 0.0
        %2874 = vmatpush1.msra.mxu0 0.0
        %2875 = vmatprep.subr.mxu0 0.0
        %2876 = vmatpush1.msra.mxu0 0.0
        %2877 = vmatprep.subr.mxu0 0.0
        %2878 = vmatpush1.msra.mxu0 0.0
        %2879 = vmatprep.subr.mxu0 0.0
        %2880 = vmatpush1.msra.mxu0 0.0
        %2881 = vmatprep.subr.mxu0 0.0
        %2882 = vmatpush1.msra.mxu0 0.0
        %2883 = vmatprep.subr.mxu0 0.0
        %2884 = vmatpush1.msra.mxu0 0.0
        %2885 = vmatprep.subr.mxu0 0.0
        %2886 = vmatpush1.msra.mxu0 0.0
        %2887 = vmatprep.subr.mxu0 0.0
        %2888 = vmatpush1.msra.mxu0 %v2830
        %2889 = vmatprep.subr.mxu0 0.0
        %2890 = vmatpush1.msra.mxu0 %v2829
        %2891 = vmatprep.subr.mxu0 0.0
        %2892 = vmatpush1.msra.mxu0 %v2828
        %2893 = vmatprep.subr.mxu0 0.0
        %2894 = vmatpush1.msra.mxu0 %v2827
        %2895 = vmatprep.subr.mxu0 0.0
        %2896 = vmatpush2.msra.mxu0 0.0
        %2897 = vmatprep.subr.mxu0 0.0
        %2898 = vmatpush2.msra.mxu0 0.0
        %2899 = vmatprep.subr.mxu0 0.0
        %2900 = vmatpush2.msra.mxu0 0.0
        %2901 = vmatprep.subr.mxu0 0.0
        %2902 = vmatpush2.msra.mxu0 0.0
        %2903 = vmatprep.subr.mxu0 0.0
        %2904 = vmatpush2.msra.mxu0 0.0
        %2905 = vmatprep.subr.mxu0 0.0
        %2906 = vmatpush2.msra.mxu0 0.0
        %2907 = vmatprep.subr.mxu0 0.0
        %2908 = vmatpush2.msra.mxu0 0.0
        %2909 = vmatprep.subr.mxu0 0.0
        %2910 = vmatpush2.msra.mxu0 0.0
        %2911 = vmatprep.subr.mxu0 0.0
        %2912 = vmatpush2.msra.mxu0 0.0
        %2913 = vmatprep.subr.mxu0 0.0
        %2914 = vmatpush2.msra.mxu0 0.0
        %2915 = vmatprep.subr.mxu0 0.0
        %2916 = vmatpush2.msra.mxu0 0.0
        %2917 = vmatprep.subr.mxu0 0.0
        %2918 = vmatpush2.msra.mxu0 0.0
        %2919 = vmatprep.subr.mxu0 0.0
        %2920 = vmatpush2.msra.mxu0 0.0
        %2921 = vmatprep.subr.mxu0 0.0
        %2922 = vmatpush2.msra.mxu0 0.0
        %2923 = vmatprep.subr.mxu0 0.0
        %2924 = vmatpush2.msra.mxu0 0.0
        %2925 = vmatprep.subr.mxu0 0.0
        %2926 = vmatpush2.msra.mxu0 0.0
        %2927 = vmatprep.mubr.f32.mxu0 0.0
        %2928 = vmatmul.mubr.f32.gmra.mxu0 %v2840
        %v2929 = vpop.f32.mrf.mxu0
        %v2930 = vadd.f32 %v2836, %v2929
        %v2931 = vpop.f32.mrf.mxu0
        %2932 = vmatprep.mubr.f32.mxu0 0.0
        %2933 = vmatmul.mubr.f32.gmra.mxu0 %v2843
        %v2934 = vpop.f32.mrf.mxu0
        %v2935 = vadd.f32 %v2836, %v2934
        %v2936 = vpop.f32.mrf.mxu0
        %2937 = vmatprep.mubr.f32.mxu0 0.0
        %2938 = vmatmul.mubr.f32.gmra.mxu0 %v2846
        %v2939 = vpop.f32.mrf.mxu0
        %v2940 = vadd.f32 %v2836, %v2939
        %v2941 = vpop.f32.mrf.mxu0
        %2942 = vmatprep.mubr.f32.mxu0 0.0
        %2943 = vmatmul.mubr.f32.gmra.mxu0 %v2849
        %v2944 = vpop.f32.mrf.mxu0
        %v2945 = vadd.f32 %v2836, %v2944
        %v2946 = vpop.f32.mrf.mxu0
        %2947 = vmatprep.mubr.f32.mxu0 0.0
        %2948 = vmatmul.mubr.f32.gmra.mxu0 %v2852
        %v2949 = vpop.f32.mrf.mxu0
        %v2950 = vadd.f32 %v2836, %v2949
        %v2951 = vpop.f32.mrf.mxu0
        %2952 = vmatprep.mubr.f32.mxu0 0.0
        %2953 = vmatmul.mubr.f32.gmra.mxu0 %v2855
        %v2954 = vpop.f32.mrf.mxu0
        %v2955 = vadd.f32 %v2836, %v2954
        %v2956 = vpop.f32.mrf.mxu0
        %2957 = vmatprep.mubr.f32.mxu0 0.0
        %2958 = vmatmul.mubr.f32.gmra.mxu0 %v2858
        %v2959 = vpop.f32.mrf.mxu0
        %v2960 = vadd.f32 %v2836, %v2959
        %v2961 = vpop.f32.mrf.mxu0
        %2962 = vmatprep.mubr.f32.mxu0 0.0
        %2963 = vmatmul.mubr.f32.gmra.mxu0 %v2861
        %v2964 = vpop.f32.mrf.mxu0
        %v2965 = vadd.f32 %v2836, %v2964
        %v2966 = vpop.f32.mrf.mxu0
        %2967 = vdwg.mxu0
        %2968 = vst [vmem:[%s468] sm:$0xff] %v2930
        %2969 = vst [vmem:[%s468 + $0x8] sm:$0xff] %v2935
        %2970 = vst [vmem:[%s468 + $0x10] sm:$0xff] %v2940
        %2971 = vst [vmem:[%s468 + $0x18] sm:$0xff] %v2945
        %2972 = vst [vmem:[%s468 + $0x20] sm:$0xff] %v2950
        %2973 = vst [vmem:[%s468 + $0x28] sm:$0xff] %v2955
        %2974 = vst [vmem:[%s468 + $0x30] sm:$0xff] %v2960
        %2975 = vst [vmem:[%s468 + $0x38] sm:$0xff] %v2965
        %s2976 = sand.u32 %s266, 1
        %s2977 = scalar_lea.sflag [#allocation4], %s2976
        %s2978 = sand.u32 %s266, 1
        %s2979 = smul.addr %s2978, 64
        %s2980 = scalar_lea.vmem [#allocation11], %s2979
        // Predicated region
        $region77: #{tpu_custom_call.1} parent=55 // pred_check
          %p2981 = pneg %p276
        $region78: #{tpu_custom_call.1} parent=55 // pred_check_branch
          %2983 = sbr.rel (%p2981) target = $region80
        $region79: #{tpu_custom_call.1} parent=55 // pred_region
          %s2984 = smul.u32 8, %s34
          %s2986 = ssub.s32 1024, 1024
          %2987 = vsyncadd %s2977, %s2986
          %s2988 = smul.addr %s2984, 2
          %s2989 = sadd.s32 %s35, %s2988
          %s2990 = smul.addr %s33, 32
          %s2991 = sadd.s32 %s2989, %s2990
          %s2992 = smul.addr %s2991, 128
          %s2993 = scalar_lea.hbm %s9, %s2992
          %s2994 = sshll.u32 %s2980, 4
          %s2995 = int_to_ptr.vmem [resolvable:$true] %s2994
          %3000 = dma.vmem_to_hbm [thread:$0]  %s2995, 1024, %s2993, %s2977, 128, 256, 8
        $region80: #{tpu_custom_call.1} parent=55 // pred_fallthru
          _
      $region56: #{tpu_custom_call.1} parent=5 // pred_fallthru
        _
      %p3001 = scmp.le.s32.totalorder 2, %s23
      // Predicated region
      $region81: #{tpu_custom_call.1} parent=5 // pred_check
        %p3002 = pneg %p3001
      $region82: #{tpu_custom_call.1} parent=5 // pred_check_branch
        %3004 = sbr.rel (%p3002) target = $region84
      $region83: #{tpu_custom_call.1} parent=5 // pred_region
        %s3005 = ssub.s32 %s23, 2
        // Predicated region
        $region85: #{tpu_custom_call.1} parent=83 // pred_check
          %p3006 = pneg %p282
        $region86: #{tpu_custom_call.1} parent=83 // pred_check_branch
          %3008 = sbr.rel (%p3006) target = $region88
        $region87: #{tpu_custom_call.1} parent=83 // pred_region
          %s3009 = sand.u32 %s267, 1
          %s3010 = scalar_lea.sflag [#allocation4], %s3009
          %s3011 = sand.u32 %s267, 1
          %s3012 = smul.addr %s3011, 64
          %s3013 = scalar_lea.vmem [#allocation11], %s3012
          %3014 = dma.done %s3010, 1024
        $region88: #{tpu_custom_call.1} parent=83 // pred_fallthru
          _
      $region84: #{tpu_custom_call.1} parent=5 // pred_fallthru
        _
    $region6: #{tpu_custom_call.1} parent=1 // loop_footer
      %s27 = sadd.s32 1, %s23
    $region7: #{tpu_custom_call.1} parent=1 // loop_footer_branch
      %22 = sbr.rel target = $region3
    $region8: #{tpu_custom_call.1} parent=1 // loop_exit
      _
    %3015 = vsyncpa [#allocation3], 1
    %s3016 = scalar_lea.sflag [#allocation3], 1
    %3017 = vsyncpa %s3016, 1
    %3018 = vsyncpa [#allocation6], 1
    %3019 = vsyncpa [#allocation9], 1
    %3020 = vsyncpa [#allocation4], 1
    %s3021 = scalar_lea.sflag [#allocation4], 1
    %3022 = vsyncpa %s3021, 1

</llo_original>
